<compile_context>
chip_gen: v7x
topology: tpu7x:2x2x1
jax: 0.10.0
libtpu: 0.0.40
codegen_flags: <defaults>
</compile_context>

<pallas_src>
import jax
import jax.numpy as jnp
from jax.experimental import pallas as pl
from jax.experimental.pallas import tpu as pltpu


def _round_up(x: int, m: int) -> int:
    return ((x + m - 1) // m) * m


def _cdiv(a: int, b: int) -> int:
    return -(-a // b)


def edge_mlp_kernel(s_ref, d_ref, e_ref, g_ref,
                    w1s_ref, w1d_ref, w1e_ref, uw1_ref, b1_ref,
                    w2_ref, b2_ref, o_ref):
    # s/d/e: (TE, nf) raw f32 edge-stream tiles; g: (TE, 1) int32 graph ids.
    # W1 pieces: (nf, H) bf16 resident. uw1: (Bp, H) f32 = u @ W1u per graph.
    # b1: (1, H) f32. w2: (H, O) bf16. b2: (1, O) f32.
    f32 = jnp.float32
    cd = w1s_ref.dtype

    # In-kernel bf16 cast of the raw f32 streams (no wrapper HBM pass).
    s = s_ref[...].astype(cd)
    d = d_ref[...].astype(cd)
    e = e_ref[...].astype(cd)

    h = jnp.dot(s, w1s_ref[...], preferred_element_type=f32)
    h = h + jnp.dot(d, w1d_ref[...], preferred_element_type=f32)
    h = h + jnp.dot(e, w1e_ref[...], preferred_element_type=f32)

    # Fused u[batch] gather + W1u projection: exact one-hot(batch) @ (u @ W1u).
    gid = g_ref[...]                                              # (TE, 1) int32
    n_graphs = uw1_ref.shape[0]
    iota = jax.lax.broadcasted_iota(jnp.int32, (gid.shape[0], n_graphs), 1)
    onehot = (gid == iota).astype(f32)                            # exact {0, 1}
    h = h + jnp.dot(onehot, uw1_ref[...], preferred_element_type=f32)

    h = jnp.maximum(h + b1_ref[...], 0.0)                         # bias + ReLU in f32
    out = jnp.dot(h.astype(w2_ref.dtype), w2_ref[...], preferred_element_type=f32)
    o_ref[...] = (out + b2_ref[...]).astype(o_ref.dtype)


def edge_model_forward(src, dst, edge_attr, u, batch, params, *,
                       tile_e=8192,
                       compute_dtype=jnp.bfloat16,
                       out_dtype=jnp.bfloat16,
                       vmem_budget_bytes=40 * 1024 * 1024):
    """Pallas implementation of the EGGNN edge-model MLP (concat + u-gather fused)."""
    w1, b1, w2, b2 = params
    E, node_nf = src.shape
    edge_nf_in = edge_attr.shape[1]
    B, global_nf = u.shape
    H = w1.shape[1]
    O = w2.shape[1]
    IN = 2 * node_nf + edge_nf_in + global_nf
    assert w1.shape[0] == IN and w2.shape[0] == H

    cd = compute_dtype
    f32 = jnp.float32

    # ---- tiny (non-E-sized) parameter prep ---------------------------------------
    w1c = w1.astype(cd)
    w1s = w1c[:node_nf]
    w1d = w1c[node_nf:2 * node_nf]
    w1e = w1c[2 * node_nf:2 * node_nf + edge_nf_in]
    # Per-graph projection of the globals through their W1 rows (B x gnf x H flops).
    u_w1 = jnp.dot(u.astype(cd), w1c[2 * node_nf + edge_nf_in:],
                   preferred_element_type=f32)                    # (B, H) f32
    Bp = _round_up(B, 8)                                          # tidy K for one-hot dot
    if Bp != B:
        u_w1 = jnp.pad(u_w1, ((0, Bp - B), (0, 0)))
    w2c = w2.astype(cd)
    b1f = b1.astype(f32).reshape(1, H)
    b2f = b2.astype(f32).reshape(1, O)
    gids = batch.astype(jnp.int32).reshape(E, 1)

    # ---- tile sizing: big tiles, >= ~8 grid steps when possible, VMEM-bounded ----
    out_itemsize = jnp.dtype(out_dtype).itemsize

    def _lanes(w):
        return _round_up(max(int(w), 1), 128)

    def _working_set(te):  # double-buffered, lane-padded edge streams + output
        per_step = te * (2 * _lanes(node_nf) * src.dtype.itemsize
                         + _lanes(edge_nf_in) * edge_attr.dtype.itemsize
                         + _lanes(1) * 4
                         + _lanes(O) * out_itemsize)
        return 2 * per_step

    MIN_TILE = 512
    tile_e = max(MIN_TILE, _round_up(min(int(tile_e), max(E, 1)), MIN_TILE))
    tile_e = min(tile_e, _round_up(max(_cdiv(E, 8), MIN_TILE), MIN_TILE))
    while tile_e > MIN_TILE and _working_set(tile_e) > vmem_budget_bytes:
        tile_e = max(MIN_TILE, _round_up(tile_e // 2, MIN_TILE))
    grid = (_cdiv(E, tile_e),)

    resident_bytes = sum(int(a.size) * a.dtype.itemsize
                         for a in (w1s, w1d, w1e, u_w1, b1f, w2c, b2f))
    vmem_limit = int(min(_working_set(tile_e) + resident_bytes + (6 << 20), 120 << 20))
    vmem_limit = max(vmem_limit, 32 << 20)

    cost = pl.CostEstimate(
        flops=2 * E * (IN * H + H * O + Bp * H),
        transcendentals=0,
        bytes_accessed=(E * (2 * node_nf + edge_nf_in) * src.dtype.itemsize
                        + E * 4 + E * O * out_itemsize + resident_bytes))

    out = pl.pallas_call(
        edge_mlp_kernel,
        out_shape=jax.ShapeDtypeStruct((E, O), out_dtype),
        grid_spec=pltpu.PrefetchScalarGridSpec(
            num_scalar_prefetch=0,
            grid=grid,
            in_specs=[
                pl.BlockSpec((tile_e, node_nf), lambda i: (i, 0)),     # src (raw f32)
                pl.BlockSpec((tile_e, node_nf), lambda i: (i, 0)),     # dst (raw f32)
                pl.BlockSpec((tile_e, edge_nf_in), lambda i: (i, 0)),  # edge_attr (raw f32)
                pl.BlockSpec((tile_e, 1), lambda i: (i, 0)),           # batch ids (int32)
                pl.BlockSpec((node_nf, H), lambda i: (0, 0)),          # W1 rows for src
                pl.BlockSpec((node_nf, H), lambda i: (0, 0)),          # W1 rows for dst
                pl.BlockSpec((edge_nf_in, H), lambda i: (0, 0)),       # W1 rows for edge
                pl.BlockSpec((Bp, H), lambda i: (0, 0)),               # u @ W1u (per graph)
                pl.BlockSpec((1, H), lambda i: (0, 0)),                # b1
                pl.BlockSpec((H, O), lambda i: (0, 0)),                # W2
                pl.BlockSpec((1, O), lambda i: (0, 0)),                # b2
            ],
            out_specs=pl.BlockSpec((tile_e, O), lambda i: (i, 0)),
        ),
        compiler_params=pltpu.CompilerParams(
            dimension_semantics=("parallel",),
            vmem_limit_bytes=vmem_limit),
        cost_estimate=cost,
    )(src, dst, edge_attr, gids, w1s, w1d, w1e, u_w1, b1f, w2c, b2f)

    return out


def edge_model_reference(src, dst, edge_attr, u, batch, params, *,
                         compute_dtype=jnp.bfloat16):
    """Plain-JAX reference mirroring the kernel's dtype handling (bf16 in, f32 accum)."""
    w1, b1, w2, b2 = params
    node_nf = src.shape[1]
    edge_nf_in = edge_attr.shape[1]
    cd = compute_dtype
    s = src.astype(cd)
    d = dst.astype(cd)
    e = edge_attr.astype(cd)
    up = u.astype(cd)[batch]
    w1c = w1.astype(cd)
    w2c = w2.astype(cd)
    f32 = jnp.float32
    h = (jnp.dot(s, w1c[:node_nf], preferred_element_type=f32)
         + jnp.dot(d, w1c[node_nf:2 * node_nf], preferred_element_type=f32)
         + jnp.dot(e, w1c[2 * node_nf:2 * node_nf + edge_nf_in], preferred_element_type=f32)
         + jnp.dot(up, w1c[2 * node_nf + edge_nf_in:], preferred_element_type=f32))
    h = jnp.maximum(h + b1.astype(f32).reshape(1, -1), 0.0)
    out = jnp.dot(h.astype(cd), w2c, preferred_element_type=f32) + b2.astype(f32).reshape(1, -1)
    return out


if __name__ == "__main__":
    # Small shapes consistent with the module's forward.
    node_nf, edge_nf, global_nf, hidden_nf = 8, 8, 8, 32
    E, B = 1000, 2                                 # E not a tile multiple -> partial block
    in_nf = node_nf * 2 + edge_nf + global_nf      # 32

    key = jax.random.PRNGKey(0)
    ks = jax.random.split(key, 8)
    src = jax.random.normal(ks[0], (E, node_nf), jnp.float32)
    dst = jax.random.normal(ks[1], (E, node_nf), jnp.float32)
    edge_attr = jax.random.normal(ks[2], (E, edge_nf), jnp.float32)
    u = jax.random.normal(ks[3], (B, global_nf), jnp.float32)
    batch = jax.random.randint(ks[4], (E,), 0, B)

    # Deterministic synthetic parameters (stored as (in, out); equivalent to
    # nn.Linear weight.T). Biases row-shaped (1, out).
    w1 = jax.random.normal(ks[5], (in_nf, hidden_nf), jnp.float32) * 0.1
    b1 = jax.random.normal(ks[6], (1, hidden_nf), jnp.float32) * 0.1
    w2 = jax.random.normal(ks[7], (hidden_nf, edge_nf), jnp.float32) * 0.1
    b2 = jnp.zeros((1, edge_nf), jnp.float32)
    params = (w1, b1, w2, b2)

    # Default tile_e auto-sizes down (>= 2 grid steps here, partial last block).
    out = edge_model_forward(src, dst, edge_attr, u, batch, params)
    out = jax.block_until_ready(out)

    ref = edge_model_reference(src, dst, edge_attr, u, batch, params)
    assert out.shape == (E, edge_nf)
    assert out.dtype == jnp.bfloat16
    assert jnp.allclose(out.astype(jnp.float32), ref, atol=2e-2, rtol=2e-2), \
        "mismatch vs reference"

    print("KERNEL_OK")
</pallas_src>

<mosaic_0001>
module attributes {stable_mosaic.version = 11 : i64} {
  func.func @edge_mlp_kernel(%arg0: i32, %arg1: memref<512x8xf32, #tpu.memory_space<vmem>>, %arg2: memref<512x8xf32, #tpu.memory_space<vmem>>, %arg3: memref<512x8xf32, #tpu.memory_space<vmem>>, %arg4: memref<512x1xi32, #tpu.memory_space<vmem>>, %arg5: memref<8x32xbf16, #tpu.memory_space<vmem>>, %arg6: memref<8x32xbf16, #tpu.memory_space<vmem>>, %arg7: memref<8x32xbf16, #tpu.memory_space<vmem>>, %arg8: memref<8x32xf32, #tpu.memory_space<vmem>>, %arg9: memref<1x32xf32, #tpu.memory_space<vmem>>, %arg10: memref<32x8xbf16, #tpu.memory_space<vmem>>, %arg11: memref<1x8xf32, #tpu.memory_space<vmem>>, %arg12: memref<512x8xbf16, #tpu.memory_space<vmem>>) attributes {dimension_semantics = [#tpu.dimension_semantics<parallel>], iteration_bounds = array<i64: 2>, scalar_prefetch = 0 : i64, scratch_operands = 0 : i64, tpu.core_type = #tpu.core_type<tc>, window_params = [{transform_indices = @transform_0, window_bounds = array<i64: 512, 8>}, {transform_indices = @transform_1, window_bounds = array<i64: 512, 8>}, {transform_indices = @transform_2, window_bounds = array<i64: 512, 8>}, {transform_indices = @transform_3, window_bounds = array<i64: 512, 1>}, {pipeline_mode = #tpu.pipeline_mode<synchronous>, transform_indices = @transform_4, window_bounds = array<i64: 8, 32>}, {pipeline_mode = #tpu.pipeline_mode<synchronous>, transform_indices = @transform_5, window_bounds = array<i64: 8, 32>}, {pipeline_mode = #tpu.pipeline_mode<synchronous>, transform_indices = @transform_6, window_bounds = array<i64: 8, 32>}, {pipeline_mode = #tpu.pipeline_mode<synchronous>, transform_indices = @transform_7, window_bounds = array<i64: 8, 32>}, {pipeline_mode = #tpu.pipeline_mode<synchronous>, transform_indices = @transform_8, window_bounds = array<i64: 1, 32>}, {pipeline_mode = #tpu.pipeline_mode<synchronous>, transform_indices = @transform_9, window_bounds = array<i64: 32, 8>}, {pipeline_mode = #tpu.pipeline_mode<synchronous>, transform_indices = @transform_10, window_bounds = array<i64: 1, 8>}, {transform_indices = @transform_11, window_bounds = array<i64: 512, 8>}]} {
    %c0 = arith.constant 0 : index
    %c0_0 = arith.constant 0 : index
    %0 = vector.load %arg1[%c0, %c0_0] : memref<512x8xf32, #tpu.memory_space<vmem>>, vector<512x8xf32>
    %1 = arith.truncf %0 : vector<512x8xf32> to vector<512x8xbf16>
    %c0_1 = arith.constant 0 : index
    %c0_2 = arith.constant 0 : index
    %2 = vector.load %arg2[%c0_1, %c0_2] : memref<512x8xf32, #tpu.memory_space<vmem>>, vector<512x8xf32>
    %3 = arith.truncf %2 : vector<512x8xf32> to vector<512x8xbf16>
    %c0_3 = arith.constant 0 : index
    %c0_4 = arith.constant 0 : index
    %4 = vector.load %arg3[%c0_3, %c0_4] : memref<512x8xf32, #tpu.memory_space<vmem>>, vector<512x8xf32>
    %5 = arith.truncf %4 : vector<512x8xf32> to vector<512x8xbf16>
    %c0_5 = arith.constant 0 : index
    %c0_6 = arith.constant 0 : index
    %6 = vector.load %arg5[%c0_5, %c0_6] : memref<8x32xbf16, #tpu.memory_space<vmem>>, vector<8x32xbf16>
    %cst = arith.constant dense<0.000000e+00> : vector<512x32xf32>
    %7 = tpu.matmul %1, %6, %cst {dimension_numbers = #tpu.dot_dimension_numbers<[1], [0], [0], [1], [0, 0, 1, 1], [], []>} : vector<512x8xbf16>, vector<8x32xbf16>, vector<512x32xf32> -> vector<512x32xf32>
    %c0_7 = arith.constant 0 : index
    %c0_8 = arith.constant 0 : index
    %8 = vector.load %arg6[%c0_7, %c0_8] : memref<8x32xbf16, #tpu.memory_space<vmem>>, vector<8x32xbf16>
    %cst_9 = arith.constant dense<0.000000e+00> : vector<512x32xf32>
    %9 = tpu.matmul %3, %8, %cst_9 {dimension_numbers = #tpu.dot_dimension_numbers<[1], [0], [0], [1], [0, 0, 1, 1], [], []>} : vector<512x8xbf16>, vector<8x32xbf16>, vector<512x32xf32> -> vector<512x32xf32>
    %10 = arith.addf %7, %9 : vector<512x32xf32>
    %c0_10 = arith.constant 0 : index
    %c0_11 = arith.constant 0 : index
    %11 = vector.load %arg7[%c0_10, %c0_11] : memref<8x32xbf16, #tpu.memory_space<vmem>>, vector<8x32xbf16>
    %cst_12 = arith.constant dense<0.000000e+00> : vector<512x32xf32>
    %12 = tpu.matmul %5, %11, %cst_12 {dimension_numbers = #tpu.dot_dimension_numbers<[1], [0], [0], [1], [0, 0, 1, 1], [], []>} : vector<512x8xbf16>, vector<8x32xbf16>, vector<512x32xf32> -> vector<512x32xf32>
    %13 = arith.addf %10, %12 : vector<512x32xf32>
    %c0_13 = arith.constant 0 : index
    %c0_14 = arith.constant 0 : index
    %14 = vector.load %arg4[%c0_13, %c0_14] : memref<512x1xi32, #tpu.memory_space<vmem>>, vector<512x1xi32>
    %15 = tpu.iota {dimensions = array<i32: 1>} : vector<512x8xi32>
    %16 = vector.broadcast %14 : vector<512x1xi32> to vector<512x8xi32>
    %17 = arith.cmpi eq, %16, %15 : vector<512x8xi32>
    %18 = arith.extui %17 : vector<512x8xi1> to vector<512x8xi32>
    %19 = arith.sitofp %18 : vector<512x8xi32> to vector<512x8xf32>
    %c0_15 = arith.constant 0 : index
    %c0_16 = arith.constant 0 : index
    %20 = vector.load %arg8[%c0_15, %c0_16] : memref<8x32xf32, #tpu.memory_space<vmem>>, vector<8x32xf32>
    %cst_17 = arith.constant dense<0.000000e+00> : vector<512x32xf32>
    %21 = tpu.matmul %19, %20, %cst_17 {dimension_numbers = #tpu.dot_dimension_numbers<[1], [0], [0], [1], [0, 0, 1, 1], [], []>} : vector<512x8xf32>, vector<8x32xf32>, vector<512x32xf32> -> vector<512x32xf32>
    %22 = arith.addf %13, %21 : vector<512x32xf32>
    %c0_18 = arith.constant 0 : index
    %c0_19 = arith.constant 0 : index
    %23 = vector.load %arg9[%c0_18, %c0_19] : memref<1x32xf32, #tpu.memory_space<vmem>>, vector<1x32xf32>
    %24 = vector.broadcast %23 : vector<1x32xf32> to vector<512x32xf32>
    %25 = arith.addf %22, %24 : vector<512x32xf32>
    %cst_20 = arith.constant 0.000000e+00 : f32
    %26 = vector.broadcast %cst_20 : f32 to vector<512x32xf32>
    %27 = arith.maximumf %25, %26 : vector<512x32xf32>
    %28 = arith.truncf %27 : vector<512x32xf32> to vector<512x32xbf16>
    %c0_21 = arith.constant 0 : index
    %c0_22 = arith.constant 0 : index
    %29 = vector.load %arg10[%c0_21, %c0_22] : memref<32x8xbf16, #tpu.memory_space<vmem>>, vector<32x8xbf16>
    %cst_23 = arith.constant dense<0.000000e+00> : vector<512x8xf32>
    %30 = tpu.matmul %28, %29, %cst_23 {dimension_numbers = #tpu.dot_dimension_numbers<[1], [0], [0], [1], [0, 0, 1, 1], [], []>} : vector<512x32xbf16>, vector<32x8xbf16>, vector<512x8xf32> -> vector<512x8xf32>
    %c0_24 = arith.constant 0 : index
    %c0_25 = arith.constant 0 : index
    %31 = vector.load %arg11[%c0_24, %c0_25] : memref<1x8xf32, #tpu.memory_space<vmem>>, vector<1x8xf32>
    %32 = vector.broadcast %31 : vector<1x8xf32> to vector<512x8xf32>
    %33 = arith.addf %30, %32 : vector<512x8xf32>
    %34 = arith.truncf %33 : vector<512x8xf32> to vector<512x8xbf16>
    %c0_26 = arith.constant 0 : index
    %c0_27 = arith.constant 0 : index
    %35 = vector.load %arg12[%c0_26, %c0_27] : memref<512x8xbf16, #tpu.memory_space<vmem>>, vector<512x8xbf16>
    tpu.vector_store %arg12[%c0_26, %c0_27], %34 {strides = array<i32>} : memref<512x8xbf16, #tpu.memory_space<vmem>>, vector<512x8xbf16>,
    return
  }
  func.func @transform_0(%arg0: i32) -> (i32, i32) {
    %c0_i32 = arith.constant 0 : i32
    %c0_i32_0 = arith.constant 0 : i32
    return %arg0, %c0_i32 : i32, i32
  }
  func.func @transform_1(%arg0: i32) -> (i32, i32) {
    %c0_i32 = arith.constant 0 : i32
    %c0_i32_0 = arith.constant 0 : i32
    return %arg0, %c0_i32 : i32, i32
  }
  func.func @transform_2(%arg0: i32) -> (i32, i32) {
    %c0_i32 = arith.constant 0 : i32
    %c0_i32_0 = arith.constant 0 : i32
    return %arg0, %c0_i32 : i32, i32
  }
  func.func @transform_3(%arg0: i32) -> (i32, i32) {
    %c0_i32 = arith.constant 0 : i32
    %c0_i32_0 = arith.constant 0 : i32
    return %arg0, %c0_i32 : i32, i32
  }
  func.func @transform_4(%arg0: i32) -> (i32, i32) {
    %c0_i32 = arith.constant 0 : i32
    %c0_i32_0 = arith.constant 0 : i32
    %c0_i32_1 = arith.constant 0 : i32
    return %c0_i32, %c0_i32_0 : i32, i32
  }
  func.func @transform_5(%arg0: i32) -> (i32, i32) {
    %c0_i32 = arith.constant 0 : i32
    %c0_i32_0 = arith.constant 0 : i32
    %c0_i32_1 = arith.constant 0 : i32
    return %c0_i32, %c0_i32_0 : i32, i32
  }
  func.func @transform_6(%arg0: i32) -> (i32, i32) {
    %c0_i32 = arith.constant 0 : i32
    %c0_i32_0 = arith.constant 0 : i32
    %c0_i32_1 = arith.constant 0 : i32
    return %c0_i32, %c0_i32_0 : i32, i32
  }
  func.func @transform_7(%arg0: i32) -> (i32, i32) {
    %c0_i32 = arith.constant 0 : i32
    %c0_i32_0 = arith.constant 0 : i32
    %c0_i32_1 = arith.constant 0 : i32
    return %c0_i32, %c0_i32_0 : i32, i32
  }
  func.func @transform_8(%arg0: i32) -> (i32, i32) {
    %c0_i32 = arith.constant 0 : i32
    %c0_i32_0 = arith.constant 0 : i32
    %c0_i32_1 = arith.constant 0 : i32
    return %c0_i32, %c0_i32_0 : i32, i32
  }
  func.func @transform_9(%arg0: i32) -> (i32, i32) {
    %c0_i32 = arith.constant 0 : i32
    %c0_i32_0 = arith.constant 0 : i32
    %c0_i32_1 = arith.constant 0 : i32
    return %c0_i32, %c0_i32_0 : i32, i32
  }
  func.func @transform_10(%arg0: i32) -> (i32, i32) {
    %c0_i32 = arith.constant 0 : i32
    %c0_i32_0 = arith.constant 0 : i32
    %c0_i32_1 = arith.constant 0 : i32
    return %c0_i32, %c0_i32_0 : i32, i32
  }
  func.func @transform_11(%arg0: i32) -> (i32, i32) {
    %c0_i32 = arith.constant 0 : i32
    %c0_i32_0 = arith.constant 0 : i32
    return %arg0, %c0_i32 : i32, i32
  }
}

</mosaic_0001>

<llo_original>
// kernel: tpu_custom_call.1
$region0: #{tpu_custom_call.1}
  #allocation0 [shape = 'u32[]', space=smem, size = 0x4, offset = 0x4, fixed_abs, tag = 'smem constant byte address 0x4 - core index']
  #allocation1 [shape = 'u32[144,128]{1,0:T(1,128)}', space=vmem, size = 0x12000, scoped, tag = 'internal scratch']
  %s0 = inlined_call_operand.vmem [shape: f32[1000,8], index: 0, kind: input, shape index: {}]
  %s1 = inlined_call_operand.vmem [shape: f32[1000,8], index: 1, kind: input, shape index: {}]
  %s2 = inlined_call_operand.vmem [shape: f32[1000,8], index: 2, kind: input, shape index: {}]
  %s3 = inlined_call_operand.vmem [shape: s32[1000,1], index: 3, kind: input, shape index: {}]
  %s4 = inlined_call_operand.vmem [shape: bf16[8,32], index: 4, kind: input, shape index: {}]
  %s5 = inlined_call_operand.vmem [shape: bf16[8,32], index: 5, kind: input, shape index: {}]
  %s6 = inlined_call_operand.vmem [shape: bf16[8,32], index: 6, kind: input, shape index: {}]
  %s7 = inlined_call_operand.vmem [shape: f32[8,32], index: 7, kind: input, shape index: {}]
  %s8 = inlined_call_operand.vmem [shape: f32[1,32], index: 8, kind: input, shape index: {}]
  %s9 = inlined_call_operand.vmem [shape: bf16[32,8], index: 9, kind: input, shape index: {}]
  %s10 = inlined_call_operand.vmem [shape: f32[1,8], index: 10, kind: input, shape index: {}]
  %s11 = inlined_call_operand.vmem [shape: bf16[1000,8], index: 11, kind: output, shape index: {}]
  %s12 = sld [smem:[#allocation0]]
  $region121: #{tpu_custom_call.1} parent=0
    _
  %s14 = ssub.s32 1, %s12
  %s15 = scalar_select 0, %s14, %s12
  $region1: #{tpu_custom_call.1} parent=0
    #allocation2 [shape = 'u8[262144]{0}', space=vmem, size = 0x40000, scoped, tag = 'output window, operand 0']
    loop: start=0, step=1, limit=4
    $region2: #{tpu_custom_call.1} parent=1 // loop_pre_header
      _
    $region3: #{tpu_custom_call.1} parent=1 // loop_header
      %s17 = sphi 0, %s21
      %p18 = scmp.ge.s32.totalorder %s17, 4
      %s27 = sphi 0, %s29
      %s30 = sphi 0, %s27
      %s31 = sphi 0, %s30
      %s47 = sphi 0, %s31
      %s53 = sphi 0, %s55
      %s56 = sphi 0, %s53
      %s57 = sphi 0, %s56
      %s73 = sphi 0, %s57
      %s79 = sphi 0, %s81
      %s82 = sphi 0, %s79
      %s83 = sphi 0, %s82
      %s99 = sphi 0, %s83
      %s105 = sphi 0, %s107
      %s108 = sphi 0, %s105
      %s109 = sphi 0, %s108
      %s125 = sphi 0, %s109
      %s129 = sphi 0, %s129
      %s131 = sphi 0, %s129
      %s132 = sphi 0, %s131
      %s146 = sphi 0, %s132
      %s150 = sphi 0, %s150
      %s152 = sphi 0, %s150
      %s153 = sphi 0, %s152
      %s167 = sphi 0, %s153
      %s171 = sphi 0, %s171
      %s173 = sphi 0, %s171
      %s174 = sphi 0, %s173
      %s188 = sphi 0, %s174
      %s192 = sphi 0, %s192
      %s194 = sphi 0, %s192
      %s195 = sphi 0, %s194
      %s209 = sphi 0, %s195
      %s213 = sphi 0, %s213
      %s215 = sphi 0, %s213
      %s216 = sphi 0, %s215
      %s230 = sphi 0, %s216
      %s234 = sphi 0, %s234
      %s236 = sphi 0, %s234
      %s237 = sphi 0, %s236
      %s251 = sphi 0, %s237
      %s255 = sphi 0, %s255
      %s257 = sphi 0, %s255
      %s258 = sphi 0, %s257
      %s272 = sphi 0, %s258
      %s278 = sphi 0, %s280
      %s281 = sphi 0, %s278
      %s282 = sphi 0, %s281
      %s298 = sphi 0, %s282
    $region4: #{tpu_custom_call.1} parent=1 // loop_header_branch
      %20 = sbr.rel (%p18) target = $region8
    $region5: #{tpu_custom_call.1} parent=1 // loop_body
      %s22 = ssub.s32 %s17, 1
      %s23 = ssub.s32 %s17, 2
      %s24 = sadd.s32 %s17, 1
      %s25 = ssub.s32 %s17, %s24
      %p26 = scmp.eq.s32.totalorder %s25, 0
      %s28 = sadd.s32 %s27, 1
      %s29 = scalar_select %p26, %s27, %s28
      %p32 = pneg %p26
      %p33 = scmp.eq.s32.totalorder %s17, 1
      %p34 = por %p32, %p33
      %p35 = scmp.ne.s32.totalorder %s27, %s30
      %p36 = scmp.eq.s32.totalorder %s17, 0
      %p37 = por %p35, %p36
      %p38 = scmp.ne.s32.totalorder %s27, %s30
      %p39 = scmp.eq.s32.totalorder %s22, 1
      %p40 = por %p38, %p39
      %p41 = scmp.ne.s32.totalorder %s30, %s31
      %p42 = scmp.eq.s32.totalorder %s22, 0
      %p43 = por %p41, %p42
      %p44 = scmp.ne.s32.totalorder %s30, %s31
      %p45 = scmp.eq.s32.totalorder %s23, 1
      %p46 = por %p44, %p45
      %p48 = scmp.ne.s32.totalorder %s31, %s47
      %p49 = scmp.eq.s32.totalorder %s23, 0
      %p50 = por %p48, %p49
      %s51 = ssub.s32 %s17, %s24
      %p52 = scmp.eq.s32.totalorder %s51, 0
      %s54 = sadd.s32 %s53, 1
      %s55 = scalar_select %p52, %s53, %s54
      %p58 = pneg %p52
      %p59 = scmp.eq.s32.totalorder %s17, 1
      %p60 = por %p58, %p59
      %p61 = scmp.ne.s32.totalorder %s53, %s56
      %p62 = scmp.eq.s32.totalorder %s17, 0
      %p63 = por %p61, %p62
      %p64 = scmp.ne.s32.totalorder %s53, %s56
      %p65 = scmp.eq.s32.totalorder %s22, 1
      %p66 = por %p64, %p65
      %p67 = scmp.ne.s32.totalorder %s56, %s57
      %p68 = scmp.eq.s32.totalorder %s22, 0
      %p69 = por %p67, %p68
      %p70 = scmp.ne.s32.totalorder %s56, %s57
      %p71 = scmp.eq.s32.totalorder %s23, 1
      %p72 = por %p70, %p71
      %p74 = scmp.ne.s32.totalorder %s57, %s73
      %p75 = scmp.eq.s32.totalorder %s23, 0
      %p76 = por %p74, %p75
      %s77 = ssub.s32 %s17, %s24
      %p78 = scmp.eq.s32.totalorder %s77, 0
      %s80 = sadd.s32 %s79, 1
      %s81 = scalar_select %p78, %s79, %s80
      %p84 = pneg %p78
      %p85 = scmp.eq.s32.totalorder %s17, 1
      %p86 = por %p84, %p85
      %p87 = scmp.ne.s32.totalorder %s79, %s82
      %p88 = scmp.eq.s32.totalorder %s17, 0
      %p89 = por %p87, %p88
      %p90 = scmp.ne.s32.totalorder %s79, %s82
      %p91 = scmp.eq.s32.totalorder %s22, 1
      %p92 = por %p90, %p91
      %p93 = scmp.ne.s32.totalorder %s82, %s83
      %p94 = scmp.eq.s32.totalorder %s22, 0
      %p95 = por %p93, %p94
      %p96 = scmp.ne.s32.totalorder %s82, %s83
      %p97 = scmp.eq.s32.totalorder %s23, 1
      %p98 = por %p96, %p97
      %p100 = scmp.ne.s32.totalorder %s83, %s99
      %p101 = scmp.eq.s32.totalorder %s23, 0
      %p102 = por %p100, %p101
      %s103 = ssub.s32 %s17, %s24
      %p104 = scmp.eq.s32.totalorder %s103, 0
      %s106 = sadd.s32 %s105, 1
      %s107 = scalar_select %p104, %s105, %s106
      %p110 = pneg %p104
      %p111 = scmp.eq.s32.totalorder %s17, 1
      %p112 = por %p110, %p111
      %p113 = scmp.ne.s32.totalorder %s105, %s108
      %p114 = scmp.eq.s32.totalorder %s17, 0
      %p115 = por %p113, %p114
      %p116 = scmp.ne.s32.totalorder %s105, %s108
      %p117 = scmp.eq.s32.totalorder %s22, 1
      %p118 = por %p116, %p117
      %p119 = scmp.ne.s32.totalorder %s108, %s109
      %p120 = scmp.eq.s32.totalorder %s22, 0
      %p121 = por %p119, %p120
      %p122 = scmp.ne.s32.totalorder %s108, %s109
      %p123 = scmp.eq.s32.totalorder %s23, 1
      %p124 = por %p122, %p123
      %p126 = scmp.ne.s32.totalorder %s109, %s125
      %p127 = scmp.eq.s32.totalorder %s23, 0
      %p128 = por %p126, %p127
      %s130 = sadd.s32 %s129, 1
      %p133 = scmp.eq.s32.totalorder %s17, 1
      %p134 = scmp.ne.s32.totalorder %s129, %s131
      %p135 = scmp.eq.s32.totalorder %s17, 0
      %p136 = por %p134, %p135
      %p137 = scmp.ne.s32.totalorder %s129, %s131
      %p138 = scmp.eq.s32.totalorder %s22, 1
      %p139 = por %p137, %p138
      %p140 = scmp.ne.s32.totalorder %s131, %s132
      %p141 = scmp.eq.s32.totalorder %s22, 0
      %p142 = por %p140, %p141
      %p143 = scmp.ne.s32.totalorder %s131, %s132
      %p144 = scmp.eq.s32.totalorder %s23, 1
      %p145 = por %p143, %p144
      %p147 = scmp.ne.s32.totalorder %s132, %s146
      %p148 = scmp.eq.s32.totalorder %s23, 0
      %p149 = por %p147, %p148
      %s151 = sadd.s32 %s150, 1
      %p154 = scmp.eq.s32.totalorder %s17, 1
      %p155 = scmp.ne.s32.totalorder %s150, %s152
      %p156 = scmp.eq.s32.totalorder %s17, 0
      %p157 = por %p155, %p156
      %p158 = scmp.ne.s32.totalorder %s150, %s152
      %p159 = scmp.eq.s32.totalorder %s22, 1
      %p160 = por %p158, %p159
      %p161 = scmp.ne.s32.totalorder %s152, %s153
      %p162 = scmp.eq.s32.totalorder %s22, 0
      %p163 = por %p161, %p162
      %p164 = scmp.ne.s32.totalorder %s152, %s153
      %p165 = scmp.eq.s32.totalorder %s23, 1
      %p166 = por %p164, %p165
      %p168 = scmp.ne.s32.totalorder %s153, %s167
      %p169 = scmp.eq.s32.totalorder %s23, 0
      %p170 = por %p168, %p169
      %s172 = sadd.s32 %s171, 1
      %p175 = scmp.eq.s32.totalorder %s17, 1
      %p176 = scmp.ne.s32.totalorder %s171, %s173
      %p177 = scmp.eq.s32.totalorder %s17, 0
      %p178 = por %p176, %p177
      %p179 = scmp.ne.s32.totalorder %s171, %s173
      %p180 = scmp.eq.s32.totalorder %s22, 1
      %p181 = por %p179, %p180
      %p182 = scmp.ne.s32.totalorder %s173, %s174
      %p183 = scmp.eq.s32.totalorder %s22, 0
      %p184 = por %p182, %p183
      %p185 = scmp.ne.s32.totalorder %s173, %s174
      %p186 = scmp.eq.s32.totalorder %s23, 1
      %p187 = por %p185, %p186
      %p189 = scmp.ne.s32.totalorder %s174, %s188
      %p190 = scmp.eq.s32.totalorder %s23, 0
      %p191 = por %p189, %p190
      %s193 = sadd.s32 %s192, 1
      %p196 = scmp.eq.s32.totalorder %s17, 1
      %p197 = scmp.ne.s32.totalorder %s192, %s194
      %p198 = scmp.eq.s32.totalorder %s17, 0
      %p199 = por %p197, %p198
      %p200 = scmp.ne.s32.totalorder %s192, %s194
      %p201 = scmp.eq.s32.totalorder %s22, 1
      %p202 = por %p200, %p201
      %p203 = scmp.ne.s32.totalorder %s194, %s195
      %p204 = scmp.eq.s32.totalorder %s22, 0
      %p205 = por %p203, %p204
      %p206 = scmp.ne.s32.totalorder %s194, %s195
      %p207 = scmp.eq.s32.totalorder %s23, 1
      %p208 = por %p206, %p207
      %p210 = scmp.ne.s32.totalorder %s195, %s209
      %p211 = scmp.eq.s32.totalorder %s23, 0
      %p212 = por %p210, %p211
      %s214 = sadd.s32 %s213, 1
      %p217 = scmp.eq.s32.totalorder %s17, 1
      %p218 = scmp.ne.s32.totalorder %s213, %s215
      %p219 = scmp.eq.s32.totalorder %s17, 0
      %p220 = por %p218, %p219
      %p221 = scmp.ne.s32.totalorder %s213, %s215
      %p222 = scmp.eq.s32.totalorder %s22, 1
      %p223 = por %p221, %p222
      %p224 = scmp.ne.s32.totalorder %s215, %s216
      %p225 = scmp.eq.s32.totalorder %s22, 0
      %p226 = por %p224, %p225
      %p227 = scmp.ne.s32.totalorder %s215, %s216
      %p228 = scmp.eq.s32.totalorder %s23, 1
      %p229 = por %p227, %p228
      %p231 = scmp.ne.s32.totalorder %s216, %s230
      %p232 = scmp.eq.s32.totalorder %s23, 0
      %p233 = por %p231, %p232
      %s235 = sadd.s32 %s234, 1
      %p238 = scmp.eq.s32.totalorder %s17, 1
      %p239 = scmp.ne.s32.totalorder %s234, %s236
      %p240 = scmp.eq.s32.totalorder %s17, 0
      %p241 = por %p239, %p240
      %p242 = scmp.ne.s32.totalorder %s234, %s236
      %p243 = scmp.eq.s32.totalorder %s22, 1
      %p244 = por %p242, %p243
      %p245 = scmp.ne.s32.totalorder %s236, %s237
      %p246 = scmp.eq.s32.totalorder %s22, 0
      %p247 = por %p245, %p246
      %p248 = scmp.ne.s32.totalorder %s236, %s237
      %p249 = scmp.eq.s32.totalorder %s23, 1
      %p250 = por %p248, %p249
      %p252 = scmp.ne.s32.totalorder %s237, %s251
      %p253 = scmp.eq.s32.totalorder %s23, 0
      %p254 = por %p252, %p253
      %s256 = sadd.s32 %s255, 1
      %p259 = scmp.eq.s32.totalorder %s17, 1
      %p260 = scmp.ne.s32.totalorder %s255, %s257
      %p261 = scmp.eq.s32.totalorder %s17, 0
      %p262 = por %p260, %p261
      %p263 = scmp.ne.s32.totalorder %s255, %s257
      %p264 = scmp.eq.s32.totalorder %s22, 1
      %p265 = por %p263, %p264
      %p266 = scmp.ne.s32.totalorder %s257, %s258
      %p267 = scmp.eq.s32.totalorder %s22, 0
      %p268 = por %p266, %p267
      %p269 = scmp.ne.s32.totalorder %s257, %s258
      %p270 = scmp.eq.s32.totalorder %s23, 1
      %p271 = por %p269, %p270
      %p273 = scmp.ne.s32.totalorder %s258, %s272
      %p274 = scmp.eq.s32.totalorder %s23, 0
      %p275 = por %p273, %p274
      %s276 = ssub.s32 %s17, %s24
      %p277 = scmp.eq.s32.totalorder %s276, 0
      %s279 = sadd.s32 %s278, 1
      %s280 = scalar_select %p277, %s278, %s279
      %p283 = pneg %p277
      %p284 = scmp.eq.s32.totalorder %s17, 1
      %p285 = por %p283, %p284
      %p286 = scmp.ne.s32.totalorder %s278, %s281
      %p287 = scmp.eq.s32.totalorder %s17, 0
      %p288 = por %p286, %p287
      %p289 = scmp.ne.s32.totalorder %s278, %s281
      %p290 = scmp.eq.s32.totalorder %s22, 1
      %p291 = por %p289, %p290
      %p292 = scmp.ne.s32.totalorder %s281, %s282
      %p293 = scmp.eq.s32.totalorder %s22, 0
      %p294 = por %p292, %p293
      %p295 = scmp.ne.s32.totalorder %s281, %s282
      %p296 = scmp.eq.s32.totalorder %s23, 1
      %p297 = por %p295, %p296
      %p299 = scmp.ne.s32.totalorder %s282, %s298
      %p300 = scmp.eq.s32.totalorder %s23, 0
      %p301 = por %p299, %p300
      %p302 = scmp.le.s32.totalorder 1, %s17
      %p303 = scmp.lt.s32.totalorder %s17, 3
      %p304 = pnand %p302, %p303
      %p305 = pneg %p304
      // Predicated region
      $region9: #{tpu_custom_call.1} parent=5 // pred_check
        _
      $region10: #{tpu_custom_call.1} parent=5 // pred_check_branch
        %307 = sbr.rel (%p304) target = $region12
      $region11: #{tpu_custom_call.1} parent=5 // pred_region
        %s308 = ssub.s32 %s17, 1
        // Predicated region
        $region13: #{tpu_custom_call.1} parent=11 // pred_check
          %p309 = pneg %p142
        $region14: #{tpu_custom_call.1} parent=11 // pred_check_branch
          %311 = sbr.rel (%p309) target = $region16
        $region15: #{tpu_custom_call.1} parent=11 // pred_region
          _
        $region16: #{tpu_custom_call.1} parent=11 // pred_fallthru
          _
        // Predicated region
        $region17: #{tpu_custom_call.1} parent=11 // pred_check
          %p312 = pneg %p163
        $region18: #{tpu_custom_call.1} parent=11 // pred_check_branch
          %314 = sbr.rel (%p312) target = $region20
        $region19: #{tpu_custom_call.1} parent=11 // pred_region
          _
        $region20: #{tpu_custom_call.1} parent=11 // pred_fallthru
          _
        // Predicated region
        $region21: #{tpu_custom_call.1} parent=11 // pred_check
          %p315 = pneg %p184
        $region22: #{tpu_custom_call.1} parent=11 // pred_check_branch
          %317 = sbr.rel (%p315) target = $region24
        $region23: #{tpu_custom_call.1} parent=11 // pred_region
          _
        $region24: #{tpu_custom_call.1} parent=11 // pred_fallthru
          _
        // Predicated region
        $region25: #{tpu_custom_call.1} parent=11 // pred_check
          %p318 = pneg %p205
        $region26: #{tpu_custom_call.1} parent=11 // pred_check_branch
          %320 = sbr.rel (%p318) target = $region28
        $region27: #{tpu_custom_call.1} parent=11 // pred_region
          _
        $region28: #{tpu_custom_call.1} parent=11 // pred_fallthru
          _
        // Predicated region
        $region29: #{tpu_custom_call.1} parent=11 // pred_check
          %p321 = pneg %p226
        $region30: #{tpu_custom_call.1} parent=11 // pred_check_branch
          %323 = sbr.rel (%p321) target = $region32
        $region31: #{tpu_custom_call.1} parent=11 // pred_region
          _
        $region32: #{tpu_custom_call.1} parent=11 // pred_fallthru
          _
        // Predicated region
        $region33: #{tpu_custom_call.1} parent=11 // pred_check
          %p324 = pneg %p247
        $region34: #{tpu_custom_call.1} parent=11 // pred_check_branch
          %326 = sbr.rel (%p324) target = $region36
        $region35: #{tpu_custom_call.1} parent=11 // pred_region
          _
        $region36: #{tpu_custom_call.1} parent=11 // pred_fallthru
          _
        // Predicated region
        $region37: #{tpu_custom_call.1} parent=11 // pred_check
          %p327 = pneg %p268
        $region38: #{tpu_custom_call.1} parent=11 // pred_check_branch
          %329 = sbr.rel (%p327) target = $region40
        $region39: #{tpu_custom_call.1} parent=11 // pred_region
          _
        $region40: #{tpu_custom_call.1} parent=11 // pred_fallthru
          _
      $region12: #{tpu_custom_call.1} parent=5 // pred_fallthru
        _
      %p330 = scmp.lt.s32.totalorder %s17, 2
      // Predicated region
      $region41: #{tpu_custom_call.1} parent=5 // pred_check
        %p331 = pneg %p330
      $region42: #{tpu_custom_call.1} parent=5 // pred_check_branch
        %333 = sbr.rel (%p331) target = $region44
      $region43: #{tpu_custom_call.1} parent=5 // pred_region
        // Predicated region
        $region45: #{tpu_custom_call.1} parent=43 // pred_check
          %p334 = pneg %p37
        $region46: #{tpu_custom_call.1} parent=43 // pred_check_branch
          %336 = sbr.rel (%p334) target = $region48
        $region47: #{tpu_custom_call.1} parent=43 // pred_region
          %s337 = smul.u32 64, %s17
          %s338 = ssub.s32 125, %s337
          %p339 = scmp.lt.s32.totalorder %s338, 64
          %s340 = scalar_select %p339, %s338, 64
          %s341 = smul.u32 128, %s340
          %p342 = scmp.lt.s32.totalorder %s337, 124
          %s343 = scalar_select %p342, %s337, 124
          %s344 = smul.addr %s343, 8
          %s345 = scalar_lea.vmem %s0, %s344
          %s346 = smul.u32 64, %s17
          %s347 = ssub.s32 125, %s346
          %p348 = scmp.lt.s32.totalorder %s347, 64
          %s349 = scalar_select %p348, %s347, 64
          %s350 = smul.u32 128, %s349
        $region48: #{tpu_custom_call.1} parent=43 // pred_fallthru
          _
        // Predicated region
        $region49: #{tpu_custom_call.1} parent=43 // pred_check
          %p351 = pneg %p63
        $region50: #{tpu_custom_call.1} parent=43 // pred_check_branch
          %353 = sbr.rel (%p351) target = $region52
        $region51: #{tpu_custom_call.1} parent=43 // pred_region
          %s354 = smul.u32 64, %s17
          %s355 = ssub.s32 125, %s354
          %p356 = scmp.lt.s32.totalorder %s355, 64
          %s357 = scalar_select %p356, %s355, 64
          %s358 = smul.u32 128, %s357
          %p359 = scmp.lt.s32.totalorder %s354, 124
          %s360 = scalar_select %p359, %s354, 124
          %s361 = smul.addr %s360, 8
          %s362 = scalar_lea.vmem %s1, %s361
          %s363 = smul.u32 64, %s17
          %s364 = ssub.s32 125, %s363
          %p365 = scmp.lt.s32.totalorder %s364, 64
          %s366 = scalar_select %p365, %s364, 64
          %s367 = smul.u32 128, %s366
        $region52: #{tpu_custom_call.1} parent=43 // pred_fallthru
          _
        // Predicated region
        $region53: #{tpu_custom_call.1} parent=43 // pred_check
          %p368 = pneg %p89
        $region54: #{tpu_custom_call.1} parent=43 // pred_check_branch
          %370 = sbr.rel (%p368) target = $region56
        $region55: #{tpu_custom_call.1} parent=43 // pred_region
          %s371 = smul.u32 64, %s17
          %s372 = ssub.s32 125, %s371
          %p373 = scmp.lt.s32.totalorder %s372, 64
          %s374 = scalar_select %p373, %s372, 64
          %s375 = smul.u32 128, %s374
          %p376 = scmp.lt.s32.totalorder %s371, 124
          %s377 = scalar_select %p376, %s371, 124
          %s378 = smul.addr %s377, 8
          %s379 = scalar_lea.vmem %s2, %s378
          %s380 = smul.u32 64, %s17
          %s381 = ssub.s32 125, %s380
          %p382 = scmp.lt.s32.totalorder %s381, 64
          %s383 = scalar_select %p382, %s381, 64
          %s384 = smul.u32 128, %s383
        $region56: #{tpu_custom_call.1} parent=43 // pred_fallthru
          _
        // Predicated region
        $region57: #{tpu_custom_call.1} parent=43 // pred_check
          %p385 = pneg %p115
        $region58: #{tpu_custom_call.1} parent=43 // pred_check_branch
          %387 = sbr.rel (%p385) target = $region60
        $region59: #{tpu_custom_call.1} parent=43 // pred_region
          %s388 = smul.u32 64, %s17
          %s389 = ssub.s32 125, %s388
          %p390 = scmp.lt.s32.totalorder %s389, 64
          %s391 = scalar_select %p390, %s389, 64
          %s392 = smul.u32 128, %s391
          %p393 = scmp.lt.s32.totalorder %s388, 124
          %s394 = scalar_select %p393, %s388, 124
          %s395 = smul.addr %s394, 8
          %s396 = scalar_lea.vmem %s3, %s395
          %s397 = smul.u32 64, %s17
          %s398 = ssub.s32 125, %s397
          %p399 = scmp.lt.s32.totalorder %s398, 64
          %s400 = scalar_select %p399, %s398, 64
          %s401 = smul.u32 128, %s400
        $region60: #{tpu_custom_call.1} parent=43 // pred_fallthru
          _
      $region44: #{tpu_custom_call.1} parent=5 // pred_fallthru
        _
      %p402 = scmp.le.s32.totalorder 1, %s17
      %p403 = scmp.lt.s32.totalorder %s17, 3
      %p404 = pnand %p402, %p403
      %p405 = pneg %p404
      // Predicated region
      $region61: #{tpu_custom_call.1} parent=5 // pred_check
        _
      $region62: #{tpu_custom_call.1} parent=5 // pred_check_branch
        %407 = sbr.rel (%p404) target = $region64
      $region63: #{tpu_custom_call.1} parent=5 // pred_region
        %s408 = ssub.s32 %s17, 1
        %s409 = smul.u32 64, %s22
        %s410 = ssub.s32 125, %s409
        %p411 = scmp.lt.s32.totalorder %s410, 64
        %s412 = scalar_select %p411, %s410, 64
        %s413 = smul.u32 128, %s412
        %p414 = scmp.lt.s32.totalorder %s409, 124
        %s415 = scalar_select %p414, %s409, 124
        %s416 = smul.addr %s415, 8
        %s417 = scalar_lea.vmem %s0, %s416
        %p418 = pneg %p43
        %p419 = pneg %p40
        %s420 = smul.u32 64, %s22
        %s421 = ssub.s32 125, %s420
        %p422 = scmp.lt.s32.totalorder %s421, 64
        %s423 = scalar_select %p422, %s421, 64
        %s424 = smul.u32 128, %s423
        %p425 = scmp.lt.s32.totalorder %s420, 124
        %s426 = scalar_select %p425, %s420, 124
        %s427 = smul.addr %s426, 8
        %s428 = scalar_lea.vmem %s1, %s427
        %p429 = pneg %p69
        %p430 = pneg %p66
        %s431 = smul.u32 64, %s22
        %s432 = ssub.s32 125, %s431
        %p433 = scmp.lt.s32.totalorder %s432, 64
        %s434 = scalar_select %p433, %s432, 64
        %s435 = smul.u32 128, %s434
        %p436 = scmp.lt.s32.totalorder %s431, 124
        %s437 = scalar_select %p436, %s431, 124
        %s438 = smul.addr %s437, 8
        %s439 = scalar_lea.vmem %s2, %s438
        %p440 = pneg %p95
        %p441 = pneg %p92
        %s442 = smul.u32 64, %s22
        %s443 = ssub.s32 125, %s442
        %p444 = scmp.lt.s32.totalorder %s443, 64
        %s445 = scalar_select %p444, %s443, 64
        %s446 = smul.u32 128, %s445
        %p447 = scmp.lt.s32.totalorder %s442, 124
        %s448 = scalar_select %p447, %s442, 124
        %s449 = smul.addr %s448, 8
        %s450 = scalar_lea.vmem %s3, %s449
        %p451 = pneg %p121
        %p452 = pneg %p118
        %p453 = pneg %p142
        %p454 = pneg %p139
        %p455 = pneg %p163
        %p456 = pneg %p160
        %p457 = pneg %p184
        %p458 = pneg %p181
        %p459 = pneg %p205
        %p460 = pneg %p202
        %p461 = pneg %p226
        %p462 = pneg %p223
        %p463 = pneg %p247
        %p464 = pneg %p244
        %p465 = pneg %p268
        %p466 = pneg %p265
        %p467 = pneg %p294
        %p468 = pneg %p291
        %s469 = sand.u32 %s281, 1
        %s470 = sand.u32 %s281, 1
        %s471 = smul.addr %s470, 256
        %s472 = scalar_lea.vmem [#allocation2], %s471
        %s473 = smul.u32 64, %s22
        %s474 = ssub.s32 125, %s473
        %p475 = scmp.lt.s32.totalorder %s474, 64
        %s476 = scalar_select %p475, %s474, 64
        %s477 = smul.u32 128, %s476
        %p478 = scmp.lt.s32.totalorder %s473, 124
        %s479 = scalar_select %p478, %s473, 124
        %s480 = smul.addr %s479, 8
        %s481 = scalar_lea.vmem %s0, %s480
        %s482 = smul.u32 64, %s22
        %s483 = ssub.s32 125, %s482
        %p484 = scmp.lt.s32.totalorder %s483, 64
        %s485 = scalar_select %p484, %s483, 64
        %s486 = smul.u32 128, %s485
        %s487 = smul.u32 64, %s22
        %s488 = ssub.s32 125, %s487
        %p489 = scmp.lt.s32.totalorder %s488, 64
        %s490 = scalar_select %p489, %s488, 64
        %s491 = smul.u32 128, %s490
        %p492 = scmp.lt.s32.totalorder %s487, 124
        %s493 = scalar_select %p492, %s487, 124
        %s494 = smul.addr %s493, 8
        %s495 = scalar_lea.vmem %s1, %s494
        %s496 = smul.u32 64, %s22
        %s497 = ssub.s32 125, %s496
        %p498 = scmp.lt.s32.totalorder %s497, 64
        %s499 = scalar_select %p498, %s497, 64
        %s500 = smul.u32 128, %s499
        %s501 = smul.u32 64, %s22
        %s502 = ssub.s32 125, %s501
        %p503 = scmp.lt.s32.totalorder %s502, 64
        %s504 = scalar_select %p503, %s502, 64
        %s505 = smul.u32 128, %s504
        %p506 = scmp.lt.s32.totalorder %s501, 124
        %s507 = scalar_select %p506, %s501, 124
        %s508 = smul.addr %s507, 8
        %s509 = scalar_lea.vmem %s2, %s508
        %s510 = smul.u32 64, %s22
        %s511 = ssub.s32 125, %s510
        %p512 = scmp.lt.s32.totalorder %s511, 64
        %s513 = scalar_select %p512, %s511, 64
        %s514 = smul.u32 128, %s513
        %s515 = smul.u32 64, %s22
        %s516 = ssub.s32 125, %s515
        %p517 = scmp.lt.s32.totalorder %s516, 64
        %s518 = scalar_select %p517, %s516, 64
        %s519 = smul.u32 128, %s518
        %p520 = scmp.lt.s32.totalorder %s515, 124
        %s521 = scalar_select %p520, %s515, 124
        %s522 = smul.addr %s521, 8
        %s523 = scalar_lea.vmem %s3, %s522
        %s524 = smul.u32 64, %s22
        %s525 = ssub.s32 125, %s524
        %p526 = scmp.lt.s32.totalorder %s525, 64
        %s527 = scalar_select %p526, %s525, 64
        %s528 = smul.u32 128, %s527
        %s529 = smul.u32 64, %s22
        %s530 = ssub.s32 125, %s529
        %p531 = scmp.lt.s32.totalorder %s530, 64
        %s532 = scalar_select %p531, %s530, 64
        %s533 = smul.u32 64, %s532
        %v535 = vld [vmem:[%s481] sm:$0xff]
        %v536 = vld [vmem:[%s481 + $0x8] sm:$0xff]
        %v537 = vld [vmem:[%s481 + $0x10] sm:$0xff]
        %v538 = vld [vmem:[%s481 + $0x18] sm:$0xff]
        %v539 = vld [vmem:[%s481 + $0x20] sm:$0xff]
        %v540 = vld [vmem:[%s481 + $0x28] sm:$0xff]
        %v541 = vld [vmem:[%s481 + $0x30] sm:$0xff]
        %v542 = vld [vmem:[%s481 + $0x38] sm:$0xff]
        %v543 = vld [vmem:[%s481 + $0x40] sm:$0xff]
        %v544 = vld [vmem:[%s481 + $0x48] sm:$0xff]
        %v545 = vld [vmem:[%s481 + $0x50] sm:$0xff]
        %v546 = vld [vmem:[%s481 + $0x58] sm:$0xff]
        %v547 = vld [vmem:[%s481 + $0x60] sm:$0xff]
        %v548 = vld [vmem:[%s481 + $0x68] sm:$0xff]
        %v549 = vld [vmem:[%s481 + $0x70] sm:$0xff]
        %v550 = vld [vmem:[%s481 + $0x78] sm:$0xff]
        %v551 = vld [vmem:[%s481 + $0x80] sm:$0xff]
        %v552 = vld [vmem:[%s481 + $0x88] sm:$0xff]
        %v553 = vld [vmem:[%s481 + $0x90] sm:$0xff]
        %v554 = vld [vmem:[%s481 + $0x98] sm:$0xff]
        %v555 = vld [vmem:[%s481 + $0xa0] sm:$0xff]
        %v556 = vld [vmem:[%s481 + $0xa8] sm:$0xff]
        %v557 = vld [vmem:[%s481 + $0xb0] sm:$0xff]
        %v558 = vld [vmem:[%s481 + $0xb8] sm:$0xff]
        %v559 = vld [vmem:[%s481 + $0xc0] sm:$0xff]
        %v560 = vld [vmem:[%s481 + $0xc8] sm:$0xff]
        %v561 = vld [vmem:[%s481 + $0xd0] sm:$0xff]
        %v562 = vld [vmem:[%s481 + $0xd8] sm:$0xff]
        %v563 = vld [vmem:[%s481 + $0xe0] sm:$0xff]
        %v564 = vld [vmem:[%s481 + $0xe8] sm:$0xff]
        %v565 = vld [vmem:[%s481 + $0xf0] sm:$0xff]
        %v566 = vld [vmem:[%s481 + $0xf8] sm:$0xff]
        %v567 = vld [vmem:[%s481 + $0x100] sm:$0xff]
        %v568 = vld [vmem:[%s481 + $0x108] sm:$0xff]
        %v569 = vld [vmem:[%s481 + $0x110] sm:$0xff]
        %v570 = vld [vmem:[%s481 + $0x118] sm:$0xff]
        %v571 = vld [vmem:[%s481 + $0x120] sm:$0xff]
        %v572 = vld [vmem:[%s481 + $0x128] sm:$0xff]
        %v573 = vld [vmem:[%s481 + $0x130] sm:$0xff]
        %v574 = vld [vmem:[%s481 + $0x138] sm:$0xff]
        %v575 = vld [vmem:[%s481 + $0x140] sm:$0xff]
        %v576 = vld [vmem:[%s481 + $0x148] sm:$0xff]
        %v577 = vld [vmem:[%s481 + $0x150] sm:$0xff]
        %v578 = vld [vmem:[%s481 + $0x158] sm:$0xff]
        %v579 = vld [vmem:[%s481 + $0x160] sm:$0xff]
        %v580 = vld [vmem:[%s481 + $0x168] sm:$0xff]
        %v581 = vld [vmem:[%s481 + $0x170] sm:$0xff]
        %v582 = vld [vmem:[%s481 + $0x178] sm:$0xff]
        %v583 = vld [vmem:[%s481 + $0x180] sm:$0xff]
        %v584 = vld [vmem:[%s481 + $0x188] sm:$0xff]
        %v585 = vld [vmem:[%s481 + $0x190] sm:$0xff]
        %v586 = vld [vmem:[%s481 + $0x198] sm:$0xff]
        %v587 = vld [vmem:[%s481 + $0x1a0] sm:$0xff]
        %v588 = vld [vmem:[%s481 + $0x1a8] sm:$0xff]
        %v589 = vld [vmem:[%s481 + $0x1b0] sm:$0xff]
        %v590 = vld [vmem:[%s481 + $0x1b8] sm:$0xff]
        %v591 = vld [vmem:[%s481 + $0x1c0] sm:$0xff]
        %v592 = vld [vmem:[%s481 + $0x1c8] sm:$0xff]
        %v593 = vld [vmem:[%s481 + $0x1d0] sm:$0xff]
        %v594 = vld [vmem:[%s481 + $0x1d8] sm:$0xff]
        %v595 = vld [vmem:[%s481 + $0x1e0] sm:$0xff]
        %v596 = vld [vmem:[%s481 + $0x1e8] sm:$0xff]
        %v597 = vld [vmem:[%s481 + $0x1f0] sm:$0xff]
        %v598 = vld [vmem:[%s481 + $0x1f8] sm:$0xff]
        %v599 = vpack.c.bf16 %v536, %v535
        %v600 = vpack.c.bf16 %v538, %v537
        %v601 = vpack.c.bf16 %v540, %v539
        %v602 = vpack.c.bf16 %v542, %v541
        %v603 = vpack.c.bf16 %v544, %v543
        %v604 = vpack.c.bf16 %v546, %v545
        %v605 = vpack.c.bf16 %v548, %v547
        %v606 = vpack.c.bf16 %v550, %v549
        %v607 = vpack.c.bf16 %v552, %v551
        %v608 = vpack.c.bf16 %v554, %v553
        %v609 = vpack.c.bf16 %v556, %v555
        %v610 = vpack.c.bf16 %v558, %v557
        %v611 = vpack.c.bf16 %v560, %v559
        %v612 = vpack.c.bf16 %v562, %v561
        %v613 = vpack.c.bf16 %v564, %v563
        %v614 = vpack.c.bf16 %v566, %v565
        %v615 = vpack.c.bf16 %v568, %v567
        %v616 = vpack.c.bf16 %v570, %v569
        %v617 = vpack.c.bf16 %v572, %v571
        %v618 = vpack.c.bf16 %v574, %v573
        %v619 = vpack.c.bf16 %v576, %v575
        %v620 = vpack.c.bf16 %v578, %v577
        %v621 = vpack.c.bf16 %v580, %v579
        %v622 = vpack.c.bf16 %v582, %v581
        %v623 = vpack.c.bf16 %v584, %v583
        %v624 = vpack.c.bf16 %v586, %v585
        %v625 = vpack.c.bf16 %v588, %v587
        %v626 = vpack.c.bf16 %v590, %v589
        %v627 = vpack.c.bf16 %v592, %v591
        %v628 = vpack.c.bf16 %v594, %v593
        %v629 = vpack.c.bf16 %v596, %v595
        %v630 = vpack.c.bf16 %v598, %v597
        %v631 = vld [vmem:[%s495] sm:$0xff]
        %v632 = vld [vmem:[%s495 + $0x8] sm:$0xff]
        %v633 = vld [vmem:[%s495 + $0x10] sm:$0xff]
        %v634 = vld [vmem:[%s495 + $0x18] sm:$0xff]
        %v635 = vld [vmem:[%s495 + $0x20] sm:$0xff]
        %v636 = vld [vmem:[%s495 + $0x28] sm:$0xff]
        %v637 = vld [vmem:[%s495 + $0x30] sm:$0xff]
        %v638 = vld [vmem:[%s495 + $0x38] sm:$0xff]
        %v639 = vld [vmem:[%s495 + $0x40] sm:$0xff]
        %v640 = vld [vmem:[%s495 + $0x48] sm:$0xff]
        %v641 = vld [vmem:[%s495 + $0x50] sm:$0xff]
        %v642 = vld [vmem:[%s495 + $0x58] sm:$0xff]
        %v643 = vld [vmem:[%s495 + $0x60] sm:$0xff]
        %v644 = vld [vmem:[%s495 + $0x68] sm:$0xff]
        %v645 = vld [vmem:[%s495 + $0x70] sm:$0xff]
        %v646 = vld [vmem:[%s495 + $0x78] sm:$0xff]
        %v647 = vld [vmem:[%s495 + $0x80] sm:$0xff]
        %v648 = vld [vmem:[%s495 + $0x88] sm:$0xff]
        %v649 = vld [vmem:[%s495 + $0x90] sm:$0xff]
        %v650 = vld [vmem:[%s495 + $0x98] sm:$0xff]
        %v651 = vld [vmem:[%s495 + $0xa0] sm:$0xff]
        %v652 = vld [vmem:[%s495 + $0xa8] sm:$0xff]
        %v653 = vld [vmem:[%s495 + $0xb0] sm:$0xff]
        %v654 = vld [vmem:[%s495 + $0xb8] sm:$0xff]
        %v655 = vld [vmem:[%s495 + $0xc0] sm:$0xff]
        %v656 = vld [vmem:[%s495 + $0xc8] sm:$0xff]
        %v657 = vld [vmem:[%s495 + $0xd0] sm:$0xff]
        %v658 = vld [vmem:[%s495 + $0xd8] sm:$0xff]
        %v659 = vld [vmem:[%s495 + $0xe0] sm:$0xff]
        %v660 = vld [vmem:[%s495 + $0xe8] sm:$0xff]
        %v661 = vld [vmem:[%s495 + $0xf0] sm:$0xff]
        %v662 = vld [vmem:[%s495 + $0xf8] sm:$0xff]
        %v663 = vld [vmem:[%s495 + $0x100] sm:$0xff]
        %v664 = vld [vmem:[%s495 + $0x108] sm:$0xff]
        %v665 = vld [vmem:[%s495 + $0x110] sm:$0xff]
        %v666 = vld [vmem:[%s495 + $0x118] sm:$0xff]
        %v667 = vld [vmem:[%s495 + $0x120] sm:$0xff]
        %v668 = vld [vmem:[%s495 + $0x128] sm:$0xff]
        %v669 = vld [vmem:[%s495 + $0x130] sm:$0xff]
        %v670 = vld [vmem:[%s495 + $0x138] sm:$0xff]
        %v671 = vld [vmem:[%s495 + $0x140] sm:$0xff]
        %v672 = vld [vmem:[%s495 + $0x148] sm:$0xff]
        %v673 = vld [vmem:[%s495 + $0x150] sm:$0xff]
        %v674 = vld [vmem:[%s495 + $0x158] sm:$0xff]
        %v675 = vld [vmem:[%s495 + $0x160] sm:$0xff]
        %v676 = vld [vmem:[%s495 + $0x168] sm:$0xff]
        %v677 = vld [vmem:[%s495 + $0x170] sm:$0xff]
        %v678 = vld [vmem:[%s495 + $0x178] sm:$0xff]
        %v679 = vld [vmem:[%s495 + $0x180] sm:$0xff]
        %v680 = vld [vmem:[%s495 + $0x188] sm:$0xff]
        %v681 = vld [vmem:[%s495 + $0x190] sm:$0xff]
        %v682 = vld [vmem:[%s495 + $0x198] sm:$0xff]
        %v683 = vld [vmem:[%s495 + $0x1a0] sm:$0xff]
        %v684 = vld [vmem:[%s495 + $0x1a8] sm:$0xff]
        %v685 = vld [vmem:[%s495 + $0x1b0] sm:$0xff]
        %v686 = vld [vmem:[%s495 + $0x1b8] sm:$0xff]
        %v687 = vld [vmem:[%s495 + $0x1c0] sm:$0xff]
        %v688 = vld [vmem:[%s495 + $0x1c8] sm:$0xff]
        %v689 = vld [vmem:[%s495 + $0x1d0] sm:$0xff]
        %v690 = vld [vmem:[%s495 + $0x1d8] sm:$0xff]
        %v691 = vld [vmem:[%s495 + $0x1e0] sm:$0xff]
        %v692 = vld [vmem:[%s495 + $0x1e8] sm:$0xff]
        %v693 = vld [vmem:[%s495 + $0x1f0] sm:$0xff]
        %v694 = vld [vmem:[%s495 + $0x1f8] sm:$0xff]
        %v695 = vpack.c.bf16 %v632, %v631
        %v696 = vpack.c.bf16 %v634, %v633
        %v697 = vpack.c.bf16 %v636, %v635
        %v698 = vpack.c.bf16 %v638, %v637
        %v699 = vpack.c.bf16 %v640, %v639
        %v700 = vpack.c.bf16 %v642, %v641
        %v701 = vpack.c.bf16 %v644, %v643
        %v702 = vpack.c.bf16 %v646, %v645
        %v703 = vpack.c.bf16 %v648, %v647
        %v704 = vpack.c.bf16 %v650, %v649
        %v705 = vpack.c.bf16 %v652, %v651
        %v706 = vpack.c.bf16 %v654, %v653
        %v707 = vpack.c.bf16 %v656, %v655
        %v708 = vpack.c.bf16 %v658, %v657
        %v709 = vpack.c.bf16 %v660, %v659
        %v710 = vpack.c.bf16 %v662, %v661
        %v711 = vpack.c.bf16 %v664, %v663
        %v712 = vpack.c.bf16 %v666, %v665
        %v713 = vpack.c.bf16 %v668, %v667
        %v714 = vpack.c.bf16 %v670, %v669
        %v715 = vpack.c.bf16 %v672, %v671
        %v716 = vpack.c.bf16 %v674, %v673
        %v717 = vpack.c.bf16 %v676, %v675
        %v718 = vpack.c.bf16 %v678, %v677
        %v719 = vpack.c.bf16 %v680, %v679
        %v720 = vpack.c.bf16 %v682, %v681
        %v721 = vpack.c.bf16 %v684, %v683
        %v722 = vpack.c.bf16 %v686, %v685
        %v723 = vpack.c.bf16 %v688, %v687
        %v724 = vpack.c.bf16 %v690, %v689
        %v725 = vpack.c.bf16 %v692, %v691
        %v726 = vpack.c.bf16 %v694, %v693
        %v727 = vld [vmem:[%s509] sm:$0xff]
        %v728 = vld [vmem:[%s509 + $0x8] sm:$0xff]
        %v729 = vld [vmem:[%s509 + $0x10] sm:$0xff]
        %v730 = vld [vmem:[%s509 + $0x18] sm:$0xff]
        %v731 = vld [vmem:[%s509 + $0x20] sm:$0xff]
        %v732 = vld [vmem:[%s509 + $0x28] sm:$0xff]
        %v733 = vld [vmem:[%s509 + $0x30] sm:$0xff]
        %v734 = vld [vmem:[%s509 + $0x38] sm:$0xff]
        %v735 = vld [vmem:[%s509 + $0x40] sm:$0xff]
        %v736 = vld [vmem:[%s509 + $0x48] sm:$0xff]
        %v737 = vld [vmem:[%s509 + $0x50] sm:$0xff]
        %v738 = vld [vmem:[%s509 + $0x58] sm:$0xff]
        %v739 = vld [vmem:[%s509 + $0x60] sm:$0xff]
        %v740 = vld [vmem:[%s509 + $0x68] sm:$0xff]
        %v741 = vld [vmem:[%s509 + $0x70] sm:$0xff]
        %v742 = vld [vmem:[%s509 + $0x78] sm:$0xff]
        %v743 = vld [vmem:[%s509 + $0x80] sm:$0xff]
        %v744 = vld [vmem:[%s509 + $0x88] sm:$0xff]
        %v745 = vld [vmem:[%s509 + $0x90] sm:$0xff]
        %v746 = vld [vmem:[%s509 + $0x98] sm:$0xff]
        %v747 = vld [vmem:[%s509 + $0xa0] sm:$0xff]
        %v748 = vld [vmem:[%s509 + $0xa8] sm:$0xff]
        %v749 = vld [vmem:[%s509 + $0xb0] sm:$0xff]
        %v750 = vld [vmem:[%s509 + $0xb8] sm:$0xff]
        %v751 = vld [vmem:[%s509 + $0xc0] sm:$0xff]
        %v752 = vld [vmem:[%s509 + $0xc8] sm:$0xff]
        %v753 = vld [vmem:[%s509 + $0xd0] sm:$0xff]
        %v754 = vld [vmem:[%s509 + $0xd8] sm:$0xff]
        %v755 = vld [vmem:[%s509 + $0xe0] sm:$0xff]
        %v756 = vld [vmem:[%s509 + $0xe8] sm:$0xff]
        %v757 = vld [vmem:[%s509 + $0xf0] sm:$0xff]
        %v758 = vld [vmem:[%s509 + $0xf8] sm:$0xff]
        %v759 = vld [vmem:[%s509 + $0x100] sm:$0xff]
        %v760 = vld [vmem:[%s509 + $0x108] sm:$0xff]
        %v761 = vld [vmem:[%s509 + $0x110] sm:$0xff]
        %v762 = vld [vmem:[%s509 + $0x118] sm:$0xff]
        %v763 = vld [vmem:[%s509 + $0x120] sm:$0xff]
        %v764 = vld [vmem:[%s509 + $0x128] sm:$0xff]
        %v765 = vld [vmem:[%s509 + $0x130] sm:$0xff]
        %v766 = vld [vmem:[%s509 + $0x138] sm:$0xff]
        %v767 = vld [vmem:[%s509 + $0x140] sm:$0xff]
        %v768 = vld [vmem:[%s509 + $0x148] sm:$0xff]
        %v769 = vld [vmem:[%s509 + $0x150] sm:$0xff]
        %v770 = vld [vmem:[%s509 + $0x158] sm:$0xff]
        %v771 = vld [vmem:[%s509 + $0x160] sm:$0xff]
        %v772 = vld [vmem:[%s509 + $0x168] sm:$0xff]
        %v773 = vld [vmem:[%s509 + $0x170] sm:$0xff]
        %v774 = vld [vmem:[%s509 + $0x178] sm:$0xff]
        %v775 = vld [vmem:[%s509 + $0x180] sm:$0xff]
        %v776 = vld [vmem:[%s509 + $0x188] sm:$0xff]
        %v777 = vld [vmem:[%s509 + $0x190] sm:$0xff]
        %v778 = vld [vmem:[%s509 + $0x198] sm:$0xff]
        %v779 = vld [vmem:[%s509 + $0x1a0] sm:$0xff]
        %v780 = vld [vmem:[%s509 + $0x1a8] sm:$0xff]
        %v781 = vld [vmem:[%s509 + $0x1b0] sm:$0xff]
        %v782 = vld [vmem:[%s509 + $0x1b8] sm:$0xff]
        %v783 = vld [vmem:[%s509 + $0x1c0] sm:$0xff]
        %v784 = vld [vmem:[%s509 + $0x1c8] sm:$0xff]
        %v785 = vld [vmem:[%s509 + $0x1d0] sm:$0xff]
        %v786 = vld [vmem:[%s509 + $0x1d8] sm:$0xff]
        %v787 = vld [vmem:[%s509 + $0x1e0] sm:$0xff]
        %v788 = vld [vmem:[%s509 + $0x1e8] sm:$0xff]
        %v789 = vld [vmem:[%s509 + $0x1f0] sm:$0xff]
        %v790 = vld [vmem:[%s509 + $0x1f8] sm:$0xff]
        %v791 = vpack.c.bf16 %v728, %v727
        %v792 = vpack.c.bf16 %v730, %v729
        %v793 = vpack.c.bf16 %v732, %v731
        %v794 = vpack.c.bf16 %v734, %v733
        %v795 = vpack.c.bf16 %v736, %v735
        %v796 = vpack.c.bf16 %v738, %v737
        %v797 = vpack.c.bf16 %v740, %v739
        %v798 = vpack.c.bf16 %v742, %v741
        %v799 = vpack.c.bf16 %v744, %v743
        %v800 = vpack.c.bf16 %v746, %v745
        %v801 = vpack.c.bf16 %v748, %v747
        %v802 = vpack.c.bf16 %v750, %v749
        %v803 = vpack.c.bf16 %v752, %v751
        %v804 = vpack.c.bf16 %v754, %v753
        %v805 = vpack.c.bf16 %v756, %v755
        %v806 = vpack.c.bf16 %v758, %v757
        %v807 = vpack.c.bf16 %v760, %v759
        %v808 = vpack.c.bf16 %v762, %v761
        %v809 = vpack.c.bf16 %v764, %v763
        %v810 = vpack.c.bf16 %v766, %v765
        %v811 = vpack.c.bf16 %v768, %v767
        %v812 = vpack.c.bf16 %v770, %v769
        %v813 = vpack.c.bf16 %v772, %v771
        %v814 = vpack.c.bf16 %v774, %v773
        %v815 = vpack.c.bf16 %v776, %v775
        %v816 = vpack.c.bf16 %v778, %v777
        %v817 = vpack.c.bf16 %v780, %v779
        %v818 = vpack.c.bf16 %v782, %v781
        %v819 = vpack.c.bf16 %v784, %v783
        %v820 = vpack.c.bf16 %v786, %v785
        %v821 = vpack.c.bf16 %v788, %v787
        %v822 = vpack.c.bf16 %v790, %v789
        %v823 = vld [vmem:[%s4] sm:$0xf]
        %v824 = vld [vmem:[%s5] sm:$0xf]
        %vm825 = vcmask 64512
        %v827 = vsel %vm825, %v695, 0
        %v830 = vsel %vm825, %v696, 0
        %v833 = vsel %vm825, %v697, 0
        %v836 = vsel %vm825, %v698, 0
        %v839 = vsel %vm825, %v699, 0
        %v842 = vsel %vm825, %v700, 0
        %v845 = vsel %vm825, %v701, 0
        %v848 = vsel %vm825, %v702, 0
        %v851 = vsel %vm825, %v703, 0
        %v854 = vsel %vm825, %v704, 0
        %v857 = vsel %vm825, %v705, 0
        %v860 = vsel %vm825, %v706, 0
        %v863 = vsel %vm825, %v707, 0
        %v866 = vsel %vm825, %v708, 0
        %v869 = vsel %vm825, %v709, 0
        %v872 = vsel %vm825, %v710, 0
        %v875 = vsel %vm825, %v711, 0
        %v878 = vsel %vm825, %v712, 0
        %v881 = vsel %vm825, %v713, 0
        %v884 = vsel %vm825, %v714, 0
        %v887 = vsel %vm825, %v715, 0
        %v890 = vsel %vm825, %v716, 0
        %v893 = vsel %vm825, %v717, 0
        %v896 = vsel %vm825, %v718, 0
        %v899 = vsel %vm825, %v719, 0
        %v902 = vsel %vm825, %v720, 0
        %v905 = vsel %vm825, %v721, 0
        %v908 = vsel %vm825, %v722, 0
        %v911 = vsel %vm825, %v723, 0
        %v914 = vsel %vm825, %v724, 0
        %v917 = vsel %vm825, %v725, 0
        %v920 = vsel %vm825, %v726, 0
        %vm922 = vcmask 1043456
        %v924 = vsel %vm922, %v824, 0
        %926 = vmatprep.subr.bf16.mxu0 0
        %927 = vmatpush1.bf16.msra.mxu0 %v924
        %928 = vmatprep.subr.bf16.mxu0 0
        %929 = vmatpush1.bf16.msra.mxu0 0
        %930 = vmatprep.subr.bf16.mxu0 0
        %931 = vmatpush1.bf16.msra.mxu0 0
        %932 = vmatprep.subr.bf16.mxu0 0
        %933 = vmatpush1.bf16.msra.mxu0 0
        %934 = vmatprep.subr.bf16.mxu0 0
        %935 = vmatpush1.bf16.msra.mxu0 0
        %936 = vmatprep.subr.bf16.mxu0 0
        %937 = vmatpush1.bf16.msra.mxu0 0
        %938 = vmatprep.subr.bf16.mxu0 0
        %939 = vmatpush1.bf16.msra.mxu0 0
        %940 = vmatprep.subr.bf16.mxu0 0
        %941 = vmatpush1.bf16.msra.mxu0 0
        %942 = vmatprep.subr.bf16.mxu0 0
        %943 = vmatpush1.bf16.msra.mxu0 0
        %944 = vmatprep.subr.bf16.mxu0 0
        %945 = vmatpush1.bf16.msra.mxu0 0
        %946 = vmatprep.subr.bf16.mxu0 0
        %947 = vmatpush1.bf16.msra.mxu0 0
        %948 = vmatprep.subr.bf16.mxu0 0
        %949 = vmatpush1.bf16.msra.mxu0 0
        %950 = vmatprep.subr.bf16.mxu0 0
        %951 = vmatpush1.bf16.msra.mxu0 0
        %952 = vmatprep.subr.bf16.mxu0 0
        %953 = vmatpush1.bf16.msra.mxu0 0
        %954 = vmatprep.subr.bf16.mxu0 0
        %955 = vmatpush1.bf16.msra.mxu0 0
        %956 = vmatprep.subr.bf16.mxu0 0
        %957 = vmatpush1.bf16.msra.mxu0 0
        %958 = vmatprep.mubr.bf16.mxu0 0
        %959 = vmatmul.mubr.bf16.gmra.mrb[0].mxu0 %v827
        %v960 = vpop.f32.mrb[0].mxu0
        %v961 = vadd.f32 0.0, %v960
        %v962 = vpop.f32.mrb[0].mxu0
        %v963 = vpop.f32.mrb[0].mxu0
        %v964 = vadd.f32 0.0, %v963
        %v965 = vpop.f32.mrb[0].mxu0
        %966 = vmatprep.mubr.bf16.mxu0 0
        %967 = vmatmul.mubr.bf16.gmra.mrb[0].mxu0 %v830
        %v968 = vpop.f32.mrb[0].mxu0
        %v969 = vadd.f32 0.0, %v968
        %v970 = vpop.f32.mrb[0].mxu0
        %v971 = vpop.f32.mrb[0].mxu0
        %v972 = vadd.f32 0.0, %v971
        %v973 = vpop.f32.mrb[0].mxu0
        %974 = vmatprep.mubr.bf16.mxu0 0
        %975 = vmatmul.mubr.bf16.gmra.mrb[0].mxu0 %v833
        %v976 = vpop.f32.mrb[0].mxu0
        %v977 = vadd.f32 0.0, %v976
        %v978 = vpop.f32.mrb[0].mxu0
        %v979 = vpop.f32.mrb[0].mxu0
        %v980 = vadd.f32 0.0, %v979
        %v981 = vpop.f32.mrb[0].mxu0
        %982 = vmatprep.mubr.bf16.mxu0 0
        %983 = vmatmul.mubr.bf16.gmra.mrb[0].mxu0 %v836
        %v984 = vpop.f32.mrb[0].mxu0
        %v985 = vadd.f32 0.0, %v984
        %v986 = vpop.f32.mrb[0].mxu0
        %v987 = vpop.f32.mrb[0].mxu0
        %v988 = vadd.f32 0.0, %v987
        %v989 = vpop.f32.mrb[0].mxu0
        %990 = vmatprep.mubr.bf16.mxu0 0
        %991 = vmatmul.mubr.bf16.gmra.mrb[0].mxu0 %v839
        %v992 = vpop.f32.mrb[0].mxu0
        %v993 = vadd.f32 0.0, %v992
        %v994 = vpop.f32.mrb[0].mxu0
        %v995 = vpop.f32.mrb[0].mxu0
        %v996 = vadd.f32 0.0, %v995
        %v997 = vpop.f32.mrb[0].mxu0
        %998 = vmatprep.mubr.bf16.mxu0 0
        %999 = vmatmul.mubr.bf16.gmra.mrb[0].mxu0 %v842
        %v1000 = vpop.f32.mrb[0].mxu0
        %v1001 = vadd.f32 0.0, %v1000
        %v1002 = vpop.f32.mrb[0].mxu0
        %v1003 = vpop.f32.mrb[0].mxu0
        %v1004 = vadd.f32 0.0, %v1003
        %v1005 = vpop.f32.mrb[0].mxu0
        %1006 = vmatprep.mubr.bf16.mxu0 0
        %1007 = vmatmul.mubr.bf16.gmra.mrb[0].mxu0 %v845
        %v1008 = vpop.f32.mrb[0].mxu0
        %v1009 = vadd.f32 0.0, %v1008
        %v1010 = vpop.f32.mrb[0].mxu0
        %v1011 = vpop.f32.mrb[0].mxu0
        %v1012 = vadd.f32 0.0, %v1011
        %v1013 = vpop.f32.mrb[0].mxu0
        %1014 = vmatprep.mubr.bf16.mxu0 0
        %1015 = vmatmul.mubr.bf16.gmra.mrb[0].mxu0 %v848
        %v1016 = vpop.f32.mrb[0].mxu0
        %v1017 = vadd.f32 0.0, %v1016
        %v1018 = vpop.f32.mrb[0].mxu0
        %v1019 = vpop.f32.mrb[0].mxu0
        %v1020 = vadd.f32 0.0, %v1019
        %v1021 = vpop.f32.mrb[0].mxu0
        %1022 = vmatprep.mubr.bf16.mxu0 0
        %1023 = vmatmul.mubr.bf16.gmra.mrb[0].mxu0 %v851
        %v1024 = vpop.f32.mrb[0].mxu0
        %v1025 = vadd.f32 0.0, %v1024
        %v1026 = vpop.f32.mrb[0].mxu0
        %v1027 = vpop.f32.mrb[0].mxu0
        %v1028 = vadd.f32 0.0, %v1027
        %v1029 = vpop.f32.mrb[0].mxu0
        %1030 = vmatprep.mubr.bf16.mxu0 0
        %1031 = vmatmul.mubr.bf16.gmra.mrb[0].mxu0 %v854
        %v1032 = vpop.f32.mrb[0].mxu0
        %v1033 = vadd.f32 0.0, %v1032
        %v1034 = vpop.f32.mrb[0].mxu0
        %v1035 = vpop.f32.mrb[0].mxu0
        %v1036 = vadd.f32 0.0, %v1035
        %v1037 = vpop.f32.mrb[0].mxu0
        %1038 = vmatprep.mubr.bf16.mxu0 0
        %1039 = vmatmul.mubr.bf16.gmra.mrb[0].mxu0 %v857
        %v1040 = vpop.f32.mrb[0].mxu0
        %v1041 = vadd.f32 0.0, %v1040
        %v1042 = vpop.f32.mrb[0].mxu0
        %v1043 = vpop.f32.mrb[0].mxu0
        %v1044 = vadd.f32 0.0, %v1043
        %v1045 = vpop.f32.mrb[0].mxu0
        %1046 = vmatprep.mubr.bf16.mxu0 0
        %1047 = vmatmul.mubr.bf16.gmra.mrb[0].mxu0 %v860
        %v1048 = vpop.f32.mrb[0].mxu0
        %v1049 = vadd.f32 0.0, %v1048
        %v1050 = vpop.f32.mrb[0].mxu0
        %v1051 = vpop.f32.mrb[0].mxu0
        %v1052 = vadd.f32 0.0, %v1051
        %v1053 = vpop.f32.mrb[0].mxu0
        %1054 = vmatprep.mubr.bf16.mxu0 0
        %1055 = vmatmul.mubr.bf16.gmra.mrb[0].mxu0 %v863
        %v1056 = vpop.f32.mrb[0].mxu0
        %v1057 = vadd.f32 0.0, %v1056
        %v1058 = vpop.f32.mrb[0].mxu0
        %v1059 = vpop.f32.mrb[0].mxu0
        %v1060 = vadd.f32 0.0, %v1059
        %v1061 = vpop.f32.mrb[0].mxu0
        %1062 = vmatprep.mubr.bf16.mxu0 0
        %1063 = vmatmul.mubr.bf16.gmra.mrb[0].mxu0 %v866
        %v1064 = vpop.f32.mrb[0].mxu0
        %v1065 = vadd.f32 0.0, %v1064
        %v1066 = vpop.f32.mrb[0].mxu0
        %v1067 = vpop.f32.mrb[0].mxu0
        %v1068 = vadd.f32 0.0, %v1067
        %v1069 = vpop.f32.mrb[0].mxu0
        %1070 = vmatprep.mubr.bf16.mxu0 0
        %1071 = vmatmul.mubr.bf16.gmra.mrb[0].mxu0 %v869
        %v1072 = vpop.f32.mrb[0].mxu0
        %v1073 = vadd.f32 0.0, %v1072
        %v1074 = vpop.f32.mrb[0].mxu0
        %v1075 = vpop.f32.mrb[0].mxu0
        %v1076 = vadd.f32 0.0, %v1075
        %v1077 = vpop.f32.mrb[0].mxu0
        %1078 = vmatprep.mubr.bf16.mxu0 0
        %1079 = vmatmul.mubr.bf16.gmra.mrb[0].mxu0 %v872
        %v1080 = vpop.f32.mrb[0].mxu0
        %v1081 = vadd.f32 0.0, %v1080
        %v1082 = vpop.f32.mrb[0].mxu0
        %v1083 = vpop.f32.mrb[0].mxu0
        %v1084 = vadd.f32 0.0, %v1083
        %v1085 = vpop.f32.mrb[0].mxu0
        %1086 = vmatprep.mubr.bf16.mxu0 0
        %1087 = vmatmul.mubr.bf16.gmra.mrb[0].mxu0 %v875
        %v1088 = vpop.f32.mrb[0].mxu0
        %v1089 = vadd.f32 0.0, %v1088
        %v1090 = vpop.f32.mrb[0].mxu0
        %v1091 = vpop.f32.mrb[0].mxu0
        %v1092 = vadd.f32 0.0, %v1091
        %v1093 = vpop.f32.mrb[0].mxu0
        %1094 = vmatprep.mubr.bf16.mxu0 0
        %1095 = vmatmul.mubr.bf16.gmra.mrb[0].mxu0 %v878
        %v1096 = vpop.f32.mrb[0].mxu0
        %v1097 = vadd.f32 0.0, %v1096
        %v1098 = vpop.f32.mrb[0].mxu0
        %v1099 = vpop.f32.mrb[0].mxu0
        %v1100 = vadd.f32 0.0, %v1099
        %v1101 = vpop.f32.mrb[0].mxu0
        %1102 = vmatprep.mubr.bf16.mxu0 0
        %1103 = vmatmul.mubr.bf16.gmra.mrb[0].mxu0 %v881
        %v1104 = vpop.f32.mrb[0].mxu0
        %v1105 = vadd.f32 0.0, %v1104
        %v1106 = vpop.f32.mrb[0].mxu0
        %v1107 = vpop.f32.mrb[0].mxu0
        %v1108 = vadd.f32 0.0, %v1107
        %v1109 = vpop.f32.mrb[0].mxu0
        %1110 = vmatprep.mubr.bf16.mxu0 0
        %1111 = vmatmul.mubr.bf16.gmra.mrb[0].mxu0 %v884
        %v1112 = vpop.f32.mrb[0].mxu0
        %v1113 = vadd.f32 0.0, %v1112
        %v1114 = vpop.f32.mrb[0].mxu0
        %v1115 = vpop.f32.mrb[0].mxu0
        %v1116 = vadd.f32 0.0, %v1115
        %v1117 = vpop.f32.mrb[0].mxu0
        %1118 = vmatprep.mubr.bf16.mxu0 0
        %1119 = vmatmul.mubr.bf16.gmra.mrb[0].mxu0 %v887
        %v1120 = vpop.f32.mrb[0].mxu0
        %v1121 = vadd.f32 0.0, %v1120
        %v1122 = vpop.f32.mrb[0].mxu0
        %v1123 = vpop.f32.mrb[0].mxu0
        %v1124 = vadd.f32 0.0, %v1123
        %v1125 = vpop.f32.mrb[0].mxu0
        %1126 = vmatprep.mubr.bf16.mxu0 0
        %1127 = vmatmul.mubr.bf16.gmra.mrb[0].mxu0 %v890
        %v1128 = vpop.f32.mrb[0].mxu0
        %v1129 = vadd.f32 0.0, %v1128
        %v1130 = vpop.f32.mrb[0].mxu0
        %v1131 = vpop.f32.mrb[0].mxu0
        %v1132 = vadd.f32 0.0, %v1131
        %v1133 = vpop.f32.mrb[0].mxu0
        %1134 = vmatprep.mubr.bf16.mxu0 0
        %1135 = vmatmul.mubr.bf16.gmra.mrb[0].mxu0 %v893
        %v1136 = vpop.f32.mrb[0].mxu0
        %v1137 = vadd.f32 0.0, %v1136
        %v1138 = vpop.f32.mrb[0].mxu0
        %v1139 = vpop.f32.mrb[0].mxu0
        %v1140 = vadd.f32 0.0, %v1139
        %v1141 = vpop.f32.mrb[0].mxu0
        %1142 = vmatprep.mubr.bf16.mxu0 0
        %1143 = vmatmul.mubr.bf16.gmra.mrb[0].mxu0 %v896
        %v1144 = vpop.f32.mrb[0].mxu0
        %v1145 = vadd.f32 0.0, %v1144
        %v1146 = vpop.f32.mrb[0].mxu0
        %v1147 = vpop.f32.mrb[0].mxu0
        %v1148 = vadd.f32 0.0, %v1147
        %v1149 = vpop.f32.mrb[0].mxu0
        %1150 = vmatprep.mubr.bf16.mxu0 0
        %1151 = vmatmul.mubr.bf16.gmra.mrb[0].mxu0 %v899
        %v1152 = vpop.f32.mrb[0].mxu0
        %v1153 = vadd.f32 0.0, %v1152
        %v1154 = vpop.f32.mrb[0].mxu0
        %v1155 = vpop.f32.mrb[0].mxu0
        %v1156 = vadd.f32 0.0, %v1155
        %v1157 = vpop.f32.mrb[0].mxu0
        %1158 = vmatprep.mubr.bf16.mxu0 0
        %1159 = vmatmul.mubr.bf16.gmra.mrb[0].mxu0 %v902
        %v1160 = vpop.f32.mrb[0].mxu0
        %v1161 = vadd.f32 0.0, %v1160
        %v1162 = vpop.f32.mrb[0].mxu0
        %v1163 = vpop.f32.mrb[0].mxu0
        %v1164 = vadd.f32 0.0, %v1163
        %v1165 = vpop.f32.mrb[0].mxu0
        %1166 = vmatprep.mubr.bf16.mxu0 0
        %1167 = vmatmul.mubr.bf16.gmra.mrb[0].mxu0 %v905
        %v1168 = vpop.f32.mrb[0].mxu0
        %v1169 = vadd.f32 0.0, %v1168
        %v1170 = vpop.f32.mrb[0].mxu0
        %v1171 = vpop.f32.mrb[0].mxu0
        %v1172 = vadd.f32 0.0, %v1171
        %v1173 = vpop.f32.mrb[0].mxu0
        %1174 = vmatprep.mubr.bf16.mxu0 0
        %1175 = vmatmul.mubr.bf16.gmra.mrb[0].mxu0 %v908
        %v1176 = vpop.f32.mrb[0].mxu0
        %v1177 = vadd.f32 0.0, %v1176
        %v1178 = vpop.f32.mrb[0].mxu0
        %v1179 = vpop.f32.mrb[0].mxu0
        %v1180 = vadd.f32 0.0, %v1179
        %v1181 = vpop.f32.mrb[0].mxu0
        %1182 = vmatprep.mubr.bf16.mxu0 0
        %1183 = vmatmul.mubr.bf16.gmra.mrb[0].mxu0 %v911
        %v1184 = vpop.f32.mrb[0].mxu0
        %v1185 = vadd.f32 0.0, %v1184
        %v1186 = vpop.f32.mrb[0].mxu0
        %v1187 = vpop.f32.mrb[0].mxu0
        %v1188 = vadd.f32 0.0, %v1187
        %v1189 = vpop.f32.mrb[0].mxu0
        %1190 = vmatprep.mubr.bf16.mxu0 0
        %1191 = vmatmul.mubr.bf16.gmra.mrb[0].mxu0 %v914
        %v1192 = vpop.f32.mrb[0].mxu0
        %v1193 = vadd.f32 0.0, %v1192
        %v1194 = vpop.f32.mrb[0].mxu0
        %v1195 = vpop.f32.mrb[0].mxu0
        %v1196 = vadd.f32 0.0, %v1195
        %v1197 = vpop.f32.mrb[0].mxu0
        %1198 = vmatprep.mubr.bf16.mxu0 0
        %1199 = vmatmul.mubr.bf16.gmra.mrb[0].mxu0 %v917
        %v1200 = vpop.f32.mrb[0].mxu0
        %v1201 = vadd.f32 0.0, %v1200
        %v1202 = vpop.f32.mrb[0].mxu0
        %v1203 = vpop.f32.mrb[0].mxu0
        %v1204 = vadd.f32 0.0, %v1203
        %v1205 = vpop.f32.mrb[0].mxu0
        %1206 = vmatprep.mubr.bf16.mxu0 0
        %1207 = vmatmul.mubr.bf16.gmra.mrb[0].mxu0 %v920
        %v1208 = vpop.f32.mrb[0].mxu0
        %v1209 = vadd.f32 0.0, %v1208
        %v1210 = vpop.f32.mrb[0].mxu0
        %v1211 = vpop.f32.mrb[0].mxu0
        %v1212 = vadd.f32 0.0, %v1211
        %v1213 = vpop.f32.mrb[0].mxu0
        %1214 = vdwg.mxu0
        %v1216 = vsel %vm825, %v599, 0
        %v1219 = vsel %vm825, %v600, 0
        %v1222 = vsel %vm825, %v601, 0
        %v1225 = vsel %vm825, %v602, 0
        %v1228 = vsel %vm825, %v603, 0
        %v1231 = vsel %vm825, %v604, 0
        %v1234 = vsel %vm825, %v605, 0
        %v1237 = vsel %vm825, %v606, 0
        %v1240 = vsel %vm825, %v607, 0
        %v1243 = vsel %vm825, %v608, 0
        %v1246 = vsel %vm825, %v609, 0
        %v1249 = vsel %vm825, %v610, 0
        %v1252 = vsel %vm825, %v611, 0
        %v1255 = vsel %vm825, %v612, 0
        %v1258 = vsel %vm825, %v613, 0
        %v1261 = vsel %vm825, %v614, 0
        %v1264 = vsel %vm825, %v615, 0
        %v1267 = vsel %vm825, %v616, 0
        %v1270 = vsel %vm825, %v617, 0
        %v1273 = vsel %vm825, %v618, 0
        %v1276 = vsel %vm825, %v619, 0
        %v1279 = vsel %vm825, %v620, 0
        %v1282 = vsel %vm825, %v621, 0
        %v1285 = vsel %vm825, %v622, 0
        %v1288 = vsel %vm825, %v623, 0
        %v1291 = vsel %vm825, %v624, 0
        %v1294 = vsel %vm825, %v625, 0
        %v1297 = vsel %vm825, %v626, 0
        %v1300 = vsel %vm825, %v627, 0
        %v1303 = vsel %vm825, %v628, 0
        %v1306 = vsel %vm825, %v629, 0
        %v1309 = vsel %vm825, %v630, 0
        %v1312 = vsel %vm922, %v823, 0
        %1314 = vmatprep.subr.bf16.mxu0 0
        %1315 = vmatpush1.bf16.msra.mxu0 %v1312
        %1316 = vmatprep.subr.bf16.mxu0 0
        %1317 = vmatpush1.bf16.msra.mxu0 0
        %1318 = vmatprep.subr.bf16.mxu0 0
        %1319 = vmatpush1.bf16.msra.mxu0 0
        %1320 = vmatprep.subr.bf16.mxu0 0
        %1321 = vmatpush1.bf16.msra.mxu0 0
        %1322 = vmatprep.subr.bf16.mxu0 0
        %1323 = vmatpush1.bf16.msra.mxu0 0
        %1324 = vmatprep.subr.bf16.mxu0 0
        %1325 = vmatpush1.bf16.msra.mxu0 0
        %1326 = vmatprep.subr.bf16.mxu0 0
        %1327 = vmatpush1.bf16.msra.mxu0 0
        %1328 = vmatprep.subr.bf16.mxu0 0
        %1329 = vmatpush1.bf16.msra.mxu0 0
        %1330 = vmatprep.subr.bf16.mxu0 0
        %1331 = vmatpush1.bf16.msra.mxu0 0
        %1332 = vmatprep.subr.bf16.mxu0 0
        %1333 = vmatpush1.bf16.msra.mxu0 0
        %1334 = vmatprep.subr.bf16.mxu0 0
        %1335 = vmatpush1.bf16.msra.mxu0 0
        %1336 = vmatprep.subr.bf16.mxu0 0
        %1337 = vmatpush1.bf16.msra.mxu0 0
        %1338 = vmatprep.subr.bf16.mxu0 0
        %1339 = vmatpush1.bf16.msra.mxu0 0
        %1340 = vmatprep.subr.bf16.mxu0 0
        %1341 = vmatpush1.bf16.msra.mxu0 0
        %1342 = vmatprep.subr.bf16.mxu0 0
        %1343 = vmatpush1.bf16.msra.mxu0 0
        %1344 = vmatprep.subr.bf16.mxu0 0
        %1345 = vmatpush1.bf16.msra.mxu0 0
        %1346 = vmatprep.mubr.bf16.mxu0 0
        %1347 = vmatmul.mubr.bf16.gmra.mrb[0].mxu0 %v1216
        %v1348 = vpop.f32.mrb[0].mxu0
        %v1349 = vadd.f32 %v961, %v1348
        %v1350 = vpop.f32.mrb[0].mxu0
        %v1351 = vpop.f32.mrb[0].mxu0
        %v1352 = vadd.f32 %v964, %v1351
        %v1353 = vpop.f32.mrb[0].mxu0
        %1354 = vmatprep.mubr.bf16.mxu0 0
        %1355 = vmatmul.mubr.bf16.gmra.mrb[0].mxu0 %v1219
        %v1356 = vpop.f32.mrb[0].mxu0
        %v1357 = vadd.f32 %v969, %v1356
        %v1358 = vpop.f32.mrb[0].mxu0
        %v1359 = vpop.f32.mrb[0].mxu0
        %v1360 = vadd.f32 %v972, %v1359
        %v1361 = vpop.f32.mrb[0].mxu0
        %1362 = vmatprep.mubr.bf16.mxu0 0
        %1363 = vmatmul.mubr.bf16.gmra.mrb[0].mxu0 %v1222
        %v1364 = vpop.f32.mrb[0].mxu0
        %v1365 = vadd.f32 %v977, %v1364
        %v1366 = vpop.f32.mrb[0].mxu0
        %v1367 = vpop.f32.mrb[0].mxu0
        %v1368 = vadd.f32 %v980, %v1367
        %v1369 = vpop.f32.mrb[0].mxu0
        %1370 = vmatprep.mubr.bf16.mxu0 0
        %1371 = vmatmul.mubr.bf16.gmra.mrb[0].mxu0 %v1225
        %v1372 = vpop.f32.mrb[0].mxu0
        %v1373 = vadd.f32 %v985, %v1372
        %v1374 = vpop.f32.mrb[0].mxu0
        %v1375 = vpop.f32.mrb[0].mxu0
        %v1376 = vadd.f32 %v988, %v1375
        %v1377 = vpop.f32.mrb[0].mxu0
        %1378 = vmatprep.mubr.bf16.mxu0 0
        %1379 = vmatmul.mubr.bf16.gmra.mrb[0].mxu0 %v1228
        %v1380 = vpop.f32.mrb[0].mxu0
        %v1381 = vadd.f32 %v993, %v1380
        %v1382 = vpop.f32.mrb[0].mxu0
        %v1383 = vpop.f32.mrb[0].mxu0
        %v1384 = vadd.f32 %v996, %v1383
        %v1385 = vpop.f32.mrb[0].mxu0
        %1386 = vmatprep.mubr.bf16.mxu0 0
        %1387 = vmatmul.mubr.bf16.gmra.mrb[0].mxu0 %v1231
        %v1388 = vpop.f32.mrb[0].mxu0
        %v1389 = vadd.f32 %v1001, %v1388
        %v1390 = vpop.f32.mrb[0].mxu0
        %v1391 = vpop.f32.mrb[0].mxu0
        %v1392 = vadd.f32 %v1004, %v1391
        %v1393 = vpop.f32.mrb[0].mxu0
        %1394 = vmatprep.mubr.bf16.mxu0 0
        %1395 = vmatmul.mubr.bf16.gmra.mrb[0].mxu0 %v1234
        %v1396 = vpop.f32.mrb[0].mxu0
        %v1397 = vadd.f32 %v1009, %v1396
        %v1398 = vpop.f32.mrb[0].mxu0
        %v1399 = vpop.f32.mrb[0].mxu0
        %v1400 = vadd.f32 %v1012, %v1399
        %v1401 = vpop.f32.mrb[0].mxu0
        %1402 = vmatprep.mubr.bf16.mxu0 0
        %1403 = vmatmul.mubr.bf16.gmra.mrb[0].mxu0 %v1237
        %v1404 = vpop.f32.mrb[0].mxu0
        %v1405 = vadd.f32 %v1017, %v1404
        %v1406 = vpop.f32.mrb[0].mxu0
        %v1407 = vpop.f32.mrb[0].mxu0
        %v1408 = vadd.f32 %v1020, %v1407
        %v1409 = vpop.f32.mrb[0].mxu0
        %1410 = vmatprep.mubr.bf16.mxu0 0
        %1411 = vmatmul.mubr.bf16.gmra.mrb[0].mxu0 %v1240
        %v1412 = vpop.f32.mrb[0].mxu0
        %v1413 = vadd.f32 %v1025, %v1412
        %v1414 = vpop.f32.mrb[0].mxu0
        %v1415 = vpop.f32.mrb[0].mxu0
        %v1416 = vadd.f32 %v1028, %v1415
        %v1417 = vpop.f32.mrb[0].mxu0
        %1418 = vmatprep.mubr.bf16.mxu0 0
        %1419 = vmatmul.mubr.bf16.gmra.mrb[0].mxu0 %v1243
        %v1420 = vpop.f32.mrb[0].mxu0
        %v1421 = vadd.f32 %v1033, %v1420
        %v1422 = vpop.f32.mrb[0].mxu0
        %v1423 = vpop.f32.mrb[0].mxu0
        %v1424 = vadd.f32 %v1036, %v1423
        %v1425 = vpop.f32.mrb[0].mxu0
        %1426 = vmatprep.mubr.bf16.mxu0 0
        %1427 = vmatmul.mubr.bf16.gmra.mrb[0].mxu0 %v1246
        %v1428 = vpop.f32.mrb[0].mxu0
        %v1429 = vadd.f32 %v1041, %v1428
        %v1430 = vpop.f32.mrb[0].mxu0
        %v1431 = vpop.f32.mrb[0].mxu0
        %v1432 = vadd.f32 %v1044, %v1431
        %v1433 = vpop.f32.mrb[0].mxu0
        %1434 = vmatprep.mubr.bf16.mxu0 0
        %1435 = vmatmul.mubr.bf16.gmra.mrb[0].mxu0 %v1249
        %v1436 = vpop.f32.mrb[0].mxu0
        %v1437 = vadd.f32 %v1049, %v1436
        %v1438 = vpop.f32.mrb[0].mxu0
        %v1439 = vpop.f32.mrb[0].mxu0
        %v1440 = vadd.f32 %v1052, %v1439
        %v1441 = vpop.f32.mrb[0].mxu0
        %1442 = vmatprep.mubr.bf16.mxu0 0
        %1443 = vmatmul.mubr.bf16.gmra.mrb[0].mxu0 %v1252
        %v1444 = vpop.f32.mrb[0].mxu0
        %v1445 = vadd.f32 %v1057, %v1444
        %v1446 = vpop.f32.mrb[0].mxu0
        %v1447 = vpop.f32.mrb[0].mxu0
        %v1448 = vadd.f32 %v1060, %v1447
        %v1449 = vpop.f32.mrb[0].mxu0
        %1450 = vmatprep.mubr.bf16.mxu0 0
        %1451 = vmatmul.mubr.bf16.gmra.mrb[0].mxu0 %v1255
        %v1452 = vpop.f32.mrb[0].mxu0
        %v1453 = vadd.f32 %v1065, %v1452
        %v1454 = vpop.f32.mrb[0].mxu0
        %v1455 = vpop.f32.mrb[0].mxu0
        %v1456 = vadd.f32 %v1068, %v1455
        %v1457 = vpop.f32.mrb[0].mxu0
        %1458 = vmatprep.mubr.bf16.mxu0 0
        %1459 = vmatmul.mubr.bf16.gmra.mrb[0].mxu0 %v1258
        %v1460 = vpop.f32.mrb[0].mxu0
        %v1461 = vadd.f32 %v1073, %v1460
        %v1462 = vpop.f32.mrb[0].mxu0
        %v1463 = vpop.f32.mrb[0].mxu0
        %v1464 = vadd.f32 %v1076, %v1463
        %v1465 = vpop.f32.mrb[0].mxu0
        %1466 = vmatprep.mubr.bf16.mxu0 0
        %1467 = vmatmul.mubr.bf16.gmra.mrb[0].mxu0 %v1261
        %v1468 = vpop.f32.mrb[0].mxu0
        %v1469 = vadd.f32 %v1081, %v1468
        %v1470 = vpop.f32.mrb[0].mxu0
        %v1471 = vpop.f32.mrb[0].mxu0
        %v1472 = vadd.f32 %v1084, %v1471
        %v1473 = vpop.f32.mrb[0].mxu0
        %1474 = vmatprep.mubr.bf16.mxu0 0
        %1475 = vmatmul.mubr.bf16.gmra.mrb[0].mxu0 %v1264
        %v1476 = vpop.f32.mrb[0].mxu0
        %v1477 = vadd.f32 %v1089, %v1476
        %v1478 = vpop.f32.mrb[0].mxu0
        %v1479 = vpop.f32.mrb[0].mxu0
        %v1480 = vadd.f32 %v1092, %v1479
        %v1481 = vpop.f32.mrb[0].mxu0
        %1482 = vmatprep.mubr.bf16.mxu0 0
        %1483 = vmatmul.mubr.bf16.gmra.mrb[0].mxu0 %v1267
        %v1484 = vpop.f32.mrb[0].mxu0
        %v1485 = vadd.f32 %v1097, %v1484
        %v1486 = vpop.f32.mrb[0].mxu0
        %v1487 = vpop.f32.mrb[0].mxu0
        %v1488 = vadd.f32 %v1100, %v1487
        %v1489 = vpop.f32.mrb[0].mxu0
        %1490 = vmatprep.mubr.bf16.mxu0 0
        %1491 = vmatmul.mubr.bf16.gmra.mrb[0].mxu0 %v1270
        %v1492 = vpop.f32.mrb[0].mxu0
        %v1493 = vadd.f32 %v1105, %v1492
        %v1494 = vpop.f32.mrb[0].mxu0
        %v1495 = vpop.f32.mrb[0].mxu0
        %v1496 = vadd.f32 %v1108, %v1495
        %v1497 = vpop.f32.mrb[0].mxu0
        %1498 = vmatprep.mubr.bf16.mxu0 0
        %1499 = vmatmul.mubr.bf16.gmra.mrb[0].mxu0 %v1273
        %v1500 = vpop.f32.mrb[0].mxu0
        %v1501 = vadd.f32 %v1113, %v1500
        %v1502 = vpop.f32.mrb[0].mxu0
        %v1503 = vpop.f32.mrb[0].mxu0
        %v1504 = vadd.f32 %v1116, %v1503
        %v1505 = vpop.f32.mrb[0].mxu0
        %1506 = vmatprep.mubr.bf16.mxu0 0
        %1507 = vmatmul.mubr.bf16.gmra.mrb[0].mxu0 %v1276
        %v1508 = vpop.f32.mrb[0].mxu0
        %v1509 = vadd.f32 %v1121, %v1508
        %v1510 = vpop.f32.mrb[0].mxu0
        %v1511 = vpop.f32.mrb[0].mxu0
        %v1512 = vadd.f32 %v1124, %v1511
        %v1513 = vpop.f32.mrb[0].mxu0
        %1514 = vmatprep.mubr.bf16.mxu0 0
        %1515 = vmatmul.mubr.bf16.gmra.mrb[0].mxu0 %v1279
        %v1516 = vpop.f32.mrb[0].mxu0
        %v1517 = vadd.f32 %v1129, %v1516
        %v1518 = vpop.f32.mrb[0].mxu0
        %v1519 = vpop.f32.mrb[0].mxu0
        %v1520 = vadd.f32 %v1132, %v1519
        %v1521 = vpop.f32.mrb[0].mxu0
        %1522 = vmatprep.mubr.bf16.mxu0 0
        %1523 = vmatmul.mubr.bf16.gmra.mrb[0].mxu0 %v1282
        %v1524 = vpop.f32.mrb[0].mxu0
        %v1525 = vadd.f32 %v1137, %v1524
        %v1526 = vpop.f32.mrb[0].mxu0
        %v1527 = vpop.f32.mrb[0].mxu0
        %v1528 = vadd.f32 %v1140, %v1527
        %v1529 = vpop.f32.mrb[0].mxu0
        %1530 = vmatprep.mubr.bf16.mxu0 0
        %1531 = vmatmul.mubr.bf16.gmra.mrb[0].mxu0 %v1285
        %v1532 = vpop.f32.mrb[0].mxu0
        %v1533 = vadd.f32 %v1145, %v1532
        %v1534 = vpop.f32.mrb[0].mxu0
        %v1535 = vpop.f32.mrb[0].mxu0
        %v1536 = vadd.f32 %v1148, %v1535
        %v1537 = vpop.f32.mrb[0].mxu0
        %1538 = vmatprep.mubr.bf16.mxu0 0
        %1539 = vmatmul.mubr.bf16.gmra.mrb[0].mxu0 %v1288
        %v1540 = vpop.f32.mrb[0].mxu0
        %v1541 = vadd.f32 %v1153, %v1540
        %v1542 = vpop.f32.mrb[0].mxu0
        %v1543 = vpop.f32.mrb[0].mxu0
        %v1544 = vadd.f32 %v1156, %v1543
        %v1545 = vpop.f32.mrb[0].mxu0
        %1546 = vmatprep.mubr.bf16.mxu0 0
        %1547 = vmatmul.mubr.bf16.gmra.mrb[0].mxu0 %v1291
        %v1548 = vpop.f32.mrb[0].mxu0
        %v1549 = vadd.f32 %v1161, %v1548
        %v1550 = vpop.f32.mrb[0].mxu0
        %v1551 = vpop.f32.mrb[0].mxu0
        %v1552 = vadd.f32 %v1164, %v1551
        %v1553 = vpop.f32.mrb[0].mxu0
        %1554 = vmatprep.mubr.bf16.mxu0 0
        %1555 = vmatmul.mubr.bf16.gmra.mrb[0].mxu0 %v1294
        %v1556 = vpop.f32.mrb[0].mxu0
        %v1557 = vadd.f32 %v1169, %v1556
        %v1558 = vpop.f32.mrb[0].mxu0
        %v1559 = vpop.f32.mrb[0].mxu0
        %v1560 = vadd.f32 %v1172, %v1559
        %v1561 = vpop.f32.mrb[0].mxu0
        %1562 = vmatprep.mubr.bf16.mxu0 0
        %1563 = vmatmul.mubr.bf16.gmra.mrb[0].mxu0 %v1297
        %v1564 = vpop.f32.mrb[0].mxu0
        %v1565 = vadd.f32 %v1177, %v1564
        %v1566 = vpop.f32.mrb[0].mxu0
        %v1567 = vpop.f32.mrb[0].mxu0
        %v1568 = vadd.f32 %v1180, %v1567
        %v1569 = vpop.f32.mrb[0].mxu0
        %1570 = vmatprep.mubr.bf16.mxu0 0
        %1571 = vmatmul.mubr.bf16.gmra.mrb[0].mxu0 %v1300
        %v1572 = vpop.f32.mrb[0].mxu0
        %v1573 = vadd.f32 %v1185, %v1572
        %v1574 = vpop.f32.mrb[0].mxu0
        %v1575 = vpop.f32.mrb[0].mxu0
        %v1576 = vadd.f32 %v1188, %v1575
        %v1577 = vpop.f32.mrb[0].mxu0
        %1578 = vmatprep.mubr.bf16.mxu0 0
        %1579 = vmatmul.mubr.bf16.gmra.mrb[0].mxu0 %v1303
        %v1580 = vpop.f32.mrb[0].mxu0
        %v1581 = vadd.f32 %v1193, %v1580
        %v1582 = vpop.f32.mrb[0].mxu0
        %v1583 = vpop.f32.mrb[0].mxu0
        %v1584 = vadd.f32 %v1196, %v1583
        %v1585 = vpop.f32.mrb[0].mxu0
        %1586 = vmatprep.mubr.bf16.mxu0 0
        %1587 = vmatmul.mubr.bf16.gmra.mrb[0].mxu0 %v1306
        %v1588 = vpop.f32.mrb[0].mxu0
        %v1589 = vadd.f32 %v1201, %v1588
        %v1590 = vpop.f32.mrb[0].mxu0
        %v1591 = vpop.f32.mrb[0].mxu0
        %v1592 = vadd.f32 %v1204, %v1591
        %v1593 = vpop.f32.mrb[0].mxu0
        %1594 = vmatprep.mubr.bf16.mxu0 0
        %1595 = vmatmul.mubr.bf16.gmra.mrb[0].mxu0 %v1309
        %v1596 = vpop.f32.mrb[0].mxu0
        %v1597 = vadd.f32 %v1209, %v1596
        %v1598 = vpop.f32.mrb[0].mxu0
        %v1599 = vpop.f32.mrb[0].mxu0
        %v1600 = vadd.f32 %v1212, %v1599
        %v1601 = vpop.f32.mrb[0].mxu0
        %1602 = vdwg.mxu0
        %v1603 = vld [vmem:[%s6] sm:$0xf]
        %v1605 = vsel %vm825, %v791, 0
        %v1608 = vsel %vm825, %v792, 0
        %v1611 = vsel %vm825, %v793, 0
        %v1614 = vsel %vm825, %v794, 0
        %v1617 = vsel %vm825, %v795, 0
        %v1620 = vsel %vm825, %v796, 0
        %v1623 = vsel %vm825, %v797, 0
        %v1626 = vsel %vm825, %v798, 0
        %v1629 = vsel %vm825, %v799, 0
        %v1632 = vsel %vm825, %v800, 0
        %v1635 = vsel %vm825, %v801, 0
        %v1638 = vsel %vm825, %v802, 0
        %v1641 = vsel %vm825, %v803, 0
        %v1644 = vsel %vm825, %v804, 0
        %v1647 = vsel %vm825, %v805, 0
        %v1650 = vsel %vm825, %v806, 0
        %v1653 = vsel %vm825, %v807, 0
        %v1656 = vsel %vm825, %v808, 0
        %v1659 = vsel %vm825, %v809, 0
        %v1662 = vsel %vm825, %v810, 0
        %v1665 = vsel %vm825, %v811, 0
        %v1668 = vsel %vm825, %v812, 0
        %v1671 = vsel %vm825, %v813, 0
        %v1674 = vsel %vm825, %v814, 0
        %v1677 = vsel %vm825, %v815, 0
        %v1680 = vsel %vm825, %v816, 0
        %v1683 = vsel %vm825, %v817, 0
        %v1686 = vsel %vm825, %v818, 0
        %v1689 = vsel %vm825, %v819, 0
        %v1692 = vsel %vm825, %v820, 0
        %v1695 = vsel %vm825, %v821, 0
        %v1698 = vsel %vm825, %v822, 0
        %v1701 = vsel %vm922, %v1603, 0
        %1703 = vmatprep.subr.bf16.mxu0 0
        %1704 = vmatpush1.bf16.msra.mxu0 %v1701
        %1705 = vmatprep.subr.bf16.mxu0 0
        %1706 = vmatpush1.bf16.msra.mxu0 0
        %1707 = vmatprep.subr.bf16.mxu0 0
        %1708 = vmatpush1.bf16.msra.mxu0 0
        %1709 = vmatprep.subr.bf16.mxu0 0
        %1710 = vmatpush1.bf16.msra.mxu0 0
        %1711 = vmatprep.subr.bf16.mxu0 0
        %1712 = vmatpush1.bf16.msra.mxu0 0
        %1713 = vmatprep.subr.bf16.mxu0 0
        %1714 = vmatpush1.bf16.msra.mxu0 0
        %1715 = vmatprep.subr.bf16.mxu0 0
        %1716 = vmatpush1.bf16.msra.mxu0 0
        %1717 = vmatprep.subr.bf16.mxu0 0
        %1718 = vmatpush1.bf16.msra.mxu0 0
        %1719 = vmatprep.subr.bf16.mxu0 0
        %1720 = vmatpush1.bf16.msra.mxu0 0
        %1721 = vmatprep.subr.bf16.mxu0 0
        %1722 = vmatpush1.bf16.msra.mxu0 0
        %1723 = vmatprep.subr.bf16.mxu0 0
        %1724 = vmatpush1.bf16.msra.mxu0 0
        %1725 = vmatprep.subr.bf16.mxu0 0
        %1726 = vmatpush1.bf16.msra.mxu0 0
        %1727 = vmatprep.subr.bf16.mxu0 0
        %1728 = vmatpush1.bf16.msra.mxu0 0
        %1729 = vmatprep.subr.bf16.mxu0 0
        %1730 = vmatpush1.bf16.msra.mxu0 0
        %1731 = vmatprep.subr.bf16.mxu0 0
        %1732 = vmatpush1.bf16.msra.mxu0 0
        %1733 = vmatprep.subr.bf16.mxu0 0
        %1734 = vmatpush1.bf16.msra.mxu0 0
        %1735 = vmatprep.mubr.bf16.mxu0 0
        %1736 = vmatmul.mubr.bf16.gmra.mrb[0].mxu0 %v1605
        %v1737 = vpop.f32.mrb[0].mxu0
        %v1738 = vadd.f32 0.0, %v1737
        %v1739 = vpop.f32.mrb[0].mxu0
        %v1740 = vpop.f32.mrb[0].mxu0
        %v1741 = vadd.f32 0.0, %v1740
        %v1742 = vpop.f32.mrb[0].mxu0
        %1743 = vmatprep.mubr.bf16.mxu0 0
        %1744 = vmatmul.mubr.bf16.gmra.mrb[0].mxu0 %v1608
        %v1745 = vpop.f32.mrb[0].mxu0
        %v1746 = vadd.f32 0.0, %v1745
        %v1747 = vpop.f32.mrb[0].mxu0
        %v1748 = vpop.f32.mrb[0].mxu0
        %v1749 = vadd.f32 0.0, %v1748
        %v1750 = vpop.f32.mrb[0].mxu0
        %1751 = vmatprep.mubr.bf16.mxu0 0
        %1752 = vmatmul.mubr.bf16.gmra.mrb[0].mxu0 %v1611
        %v1753 = vpop.f32.mrb[0].mxu0
        %v1754 = vadd.f32 0.0, %v1753
        %v1755 = vpop.f32.mrb[0].mxu0
        %v1756 = vpop.f32.mrb[0].mxu0
        %v1757 = vadd.f32 0.0, %v1756
        %v1758 = vpop.f32.mrb[0].mxu0
        %1759 = vmatprep.mubr.bf16.mxu0 0
        %1760 = vmatmul.mubr.bf16.gmra.mrb[0].mxu0 %v1614
        %v1761 = vpop.f32.mrb[0].mxu0
        %v1762 = vadd.f32 0.0, %v1761
        %v1763 = vpop.f32.mrb[0].mxu0
        %v1764 = vpop.f32.mrb[0].mxu0
        %v1765 = vadd.f32 0.0, %v1764
        %v1766 = vpop.f32.mrb[0].mxu0
        %1767 = vmatprep.mubr.bf16.mxu0 0
        %1768 = vmatmul.mubr.bf16.gmra.mrb[0].mxu0 %v1617
        %v1769 = vpop.f32.mrb[0].mxu0
        %v1770 = vadd.f32 0.0, %v1769
        %v1771 = vpop.f32.mrb[0].mxu0
        %v1772 = vpop.f32.mrb[0].mxu0
        %v1773 = vadd.f32 0.0, %v1772
        %v1774 = vpop.f32.mrb[0].mxu0
        %1775 = vmatprep.mubr.bf16.mxu0 0
        %1776 = vmatmul.mubr.bf16.gmra.mrb[0].mxu0 %v1620
        %v1777 = vpop.f32.mrb[0].mxu0
        %v1778 = vadd.f32 0.0, %v1777
        %v1779 = vpop.f32.mrb[0].mxu0
        %v1780 = vpop.f32.mrb[0].mxu0
        %v1781 = vadd.f32 0.0, %v1780
        %v1782 = vpop.f32.mrb[0].mxu0
        %1783 = vmatprep.mubr.bf16.mxu0 0
        %1784 = vmatmul.mubr.bf16.gmra.mrb[0].mxu0 %v1623
        %v1785 = vpop.f32.mrb[0].mxu0
        %v1786 = vadd.f32 0.0, %v1785
        %v1787 = vpop.f32.mrb[0].mxu0
        %v1788 = vpop.f32.mrb[0].mxu0
        %v1789 = vadd.f32 0.0, %v1788
        %v1790 = vpop.f32.mrb[0].mxu0
        %1791 = vmatprep.mubr.bf16.mxu0 0
        %1792 = vmatmul.mubr.bf16.gmra.mrb[0].mxu0 %v1626
        %v1793 = vpop.f32.mrb[0].mxu0
        %v1794 = vadd.f32 0.0, %v1793
        %v1795 = vpop.f32.mrb[0].mxu0
        %v1796 = vpop.f32.mrb[0].mxu0
        %v1797 = vadd.f32 0.0, %v1796
        %v1798 = vpop.f32.mrb[0].mxu0
        %1799 = vmatprep.mubr.bf16.mxu0 0
        %1800 = vmatmul.mubr.bf16.gmra.mrb[0].mxu0 %v1629
        %v1801 = vpop.f32.mrb[0].mxu0
        %v1802 = vadd.f32 0.0, %v1801
        %v1803 = vpop.f32.mrb[0].mxu0
        %v1804 = vpop.f32.mrb[0].mxu0
        %v1805 = vadd.f32 0.0, %v1804
        %v1806 = vpop.f32.mrb[0].mxu0
        %1807 = vmatprep.mubr.bf16.mxu0 0
        %1808 = vmatmul.mubr.bf16.gmra.mrb[0].mxu0 %v1632
        %v1809 = vpop.f32.mrb[0].mxu0
        %v1810 = vadd.f32 0.0, %v1809
        %v1811 = vpop.f32.mrb[0].mxu0
        %v1812 = vpop.f32.mrb[0].mxu0
        %v1813 = vadd.f32 0.0, %v1812
        %v1814 = vpop.f32.mrb[0].mxu0
        %1815 = vmatprep.mubr.bf16.mxu0 0
        %1816 = vmatmul.mubr.bf16.gmra.mrb[0].mxu0 %v1635
        %v1817 = vpop.f32.mrb[0].mxu0
        %v1818 = vadd.f32 0.0, %v1817
        %v1819 = vpop.f32.mrb[0].mxu0
        %v1820 = vpop.f32.mrb[0].mxu0
        %v1821 = vadd.f32 0.0, %v1820
        %v1822 = vpop.f32.mrb[0].mxu0
        %1823 = vmatprep.mubr.bf16.mxu0 0
        %1824 = vmatmul.mubr.bf16.gmra.mrb[0].mxu0 %v1638
        %v1825 = vpop.f32.mrb[0].mxu0
        %v1826 = vadd.f32 0.0, %v1825
        %v1827 = vpop.f32.mrb[0].mxu0
        %v1828 = vpop.f32.mrb[0].mxu0
        %v1829 = vadd.f32 0.0, %v1828
        %v1830 = vpop.f32.mrb[0].mxu0
        %1831 = vmatprep.mubr.bf16.mxu0 0
        %1832 = vmatmul.mubr.bf16.gmra.mrb[0].mxu0 %v1641
        %v1833 = vpop.f32.mrb[0].mxu0
        %v1834 = vadd.f32 0.0, %v1833
        %v1835 = vpop.f32.mrb[0].mxu0
        %v1836 = vpop.f32.mrb[0].mxu0
        %v1837 = vadd.f32 0.0, %v1836
        %v1838 = vpop.f32.mrb[0].mxu0
        %1839 = vmatprep.mubr.bf16.mxu0 0
        %1840 = vmatmul.mubr.bf16.gmra.mrb[0].mxu0 %v1644
        %v1841 = vpop.f32.mrb[0].mxu0
        %v1842 = vadd.f32 0.0, %v1841
        %v1843 = vpop.f32.mrb[0].mxu0
        %v1844 = vpop.f32.mrb[0].mxu0
        %v1845 = vadd.f32 0.0, %v1844
        %v1846 = vpop.f32.mrb[0].mxu0
        %1847 = vmatprep.mubr.bf16.mxu0 0
        %1848 = vmatmul.mubr.bf16.gmra.mrb[0].mxu0 %v1647
        %v1849 = vpop.f32.mrb[0].mxu0
        %v1850 = vadd.f32 0.0, %v1849
        %v1851 = vpop.f32.mrb[0].mxu0
        %v1852 = vpop.f32.mrb[0].mxu0
        %v1853 = vadd.f32 0.0, %v1852
        %v1854 = vpop.f32.mrb[0].mxu0
        %1855 = vmatprep.mubr.bf16.mxu0 0
        %1856 = vmatmul.mubr.bf16.gmra.mrb[0].mxu0 %v1650
        %v1857 = vpop.f32.mrb[0].mxu0
        %v1858 = vadd.f32 0.0, %v1857
        %v1859 = vpop.f32.mrb[0].mxu0
        %v1860 = vpop.f32.mrb[0].mxu0
        %v1861 = vadd.f32 0.0, %v1860
        %v1862 = vpop.f32.mrb[0].mxu0
        %1863 = vmatprep.mubr.bf16.mxu0 0
        %1864 = vmatmul.mubr.bf16.gmra.mrb[0].mxu0 %v1653
        %v1865 = vpop.f32.mrb[0].mxu0
        %v1866 = vadd.f32 0.0, %v1865
        %v1867 = vpop.f32.mrb[0].mxu0
        %v1868 = vpop.f32.mrb[0].mxu0
        %v1869 = vadd.f32 0.0, %v1868
        %v1870 = vpop.f32.mrb[0].mxu0
        %1871 = vmatprep.mubr.bf16.mxu0 0
        %1872 = vmatmul.mubr.bf16.gmra.mrb[0].mxu0 %v1656
        %v1873 = vpop.f32.mrb[0].mxu0
        %v1874 = vadd.f32 0.0, %v1873
        %v1875 = vpop.f32.mrb[0].mxu0
        %v1876 = vpop.f32.mrb[0].mxu0
        %v1877 = vadd.f32 0.0, %v1876
        %v1878 = vpop.f32.mrb[0].mxu0
        %1879 = vmatprep.mubr.bf16.mxu0 0
        %1880 = vmatmul.mubr.bf16.gmra.mrb[0].mxu0 %v1659
        %v1881 = vpop.f32.mrb[0].mxu0
        %v1882 = vadd.f32 0.0, %v1881
        %v1883 = vpop.f32.mrb[0].mxu0
        %v1884 = vpop.f32.mrb[0].mxu0
        %v1885 = vadd.f32 0.0, %v1884
        %v1886 = vpop.f32.mrb[0].mxu0
        %1887 = vmatprep.mubr.bf16.mxu0 0
        %1888 = vmatmul.mubr.bf16.gmra.mrb[0].mxu0 %v1662
        %v1889 = vpop.f32.mrb[0].mxu0
        %v1890 = vadd.f32 0.0, %v1889
        %v1891 = vpop.f32.mrb[0].mxu0
        %v1892 = vpop.f32.mrb[0].mxu0
        %v1893 = vadd.f32 0.0, %v1892
        %v1894 = vpop.f32.mrb[0].mxu0
        %1895 = vmatprep.mubr.bf16.mxu0 0
        %1896 = vmatmul.mubr.bf16.gmra.mrb[0].mxu0 %v1665
        %v1897 = vpop.f32.mrb[0].mxu0
        %v1898 = vadd.f32 0.0, %v1897
        %v1899 = vpop.f32.mrb[0].mxu0
        %v1900 = vpop.f32.mrb[0].mxu0
        %v1901 = vadd.f32 0.0, %v1900
        %v1902 = vpop.f32.mrb[0].mxu0
        %1903 = vmatprep.mubr.bf16.mxu0 0
        %1904 = vmatmul.mubr.bf16.gmra.mrb[0].mxu0 %v1668
        %v1905 = vpop.f32.mrb[0].mxu0
        %v1906 = vadd.f32 0.0, %v1905
        %v1907 = vpop.f32.mrb[0].mxu0
        %v1908 = vpop.f32.mrb[0].mxu0
        %v1909 = vadd.f32 0.0, %v1908
        %v1910 = vpop.f32.mrb[0].mxu0
        %1911 = vmatprep.mubr.bf16.mxu0 0
        %1912 = vmatmul.mubr.bf16.gmra.mrb[0].mxu0 %v1671
        %v1913 = vpop.f32.mrb[0].mxu0
        %v1914 = vadd.f32 0.0, %v1913
        %v1915 = vpop.f32.mrb[0].mxu0
        %v1916 = vpop.f32.mrb[0].mxu0
        %v1917 = vadd.f32 0.0, %v1916
        %v1918 = vpop.f32.mrb[0].mxu0
        %1919 = vmatprep.mubr.bf16.mxu0 0
        %1920 = vmatmul.mubr.bf16.gmra.mrb[0].mxu0 %v1674
        %v1921 = vpop.f32.mrb[0].mxu0
        %v1922 = vadd.f32 0.0, %v1921
        %v1923 = vpop.f32.mrb[0].mxu0
        %v1924 = vpop.f32.mrb[0].mxu0
        %v1925 = vadd.f32 0.0, %v1924
        %v1926 = vpop.f32.mrb[0].mxu0
        %1927 = vmatprep.mubr.bf16.mxu0 0
        %1928 = vmatmul.mubr.bf16.gmra.mrb[0].mxu0 %v1677
        %v1929 = vpop.f32.mrb[0].mxu0
        %v1930 = vadd.f32 0.0, %v1929
        %v1931 = vpop.f32.mrb[0].mxu0
        %v1932 = vpop.f32.mrb[0].mxu0
        %v1933 = vadd.f32 0.0, %v1932
        %v1934 = vpop.f32.mrb[0].mxu0
        %1935 = vmatprep.mubr.bf16.mxu0 0
        %1936 = vmatmul.mubr.bf16.gmra.mrb[0].mxu0 %v1680
        %v1937 = vpop.f32.mrb[0].mxu0
        %v1938 = vadd.f32 0.0, %v1937
        %v1939 = vpop.f32.mrb[0].mxu0
        %v1940 = vpop.f32.mrb[0].mxu0
        %v1941 = vadd.f32 0.0, %v1940
        %v1942 = vpop.f32.mrb[0].mxu0
        %1943 = vmatprep.mubr.bf16.mxu0 0
        %1944 = vmatmul.mubr.bf16.gmra.mrb[0].mxu0 %v1683
        %v1945 = vpop.f32.mrb[0].mxu0
        %v1946 = vadd.f32 0.0, %v1945
        %v1947 = vpop.f32.mrb[0].mxu0
        %v1948 = vpop.f32.mrb[0].mxu0
        %v1949 = vadd.f32 0.0, %v1948
        %v1950 = vpop.f32.mrb[0].mxu0
        %1951 = vmatprep.mubr.bf16.mxu0 0
        %1952 = vmatmul.mubr.bf16.gmra.mrb[0].mxu0 %v1686
        %v1953 = vpop.f32.mrb[0].mxu0
        %v1954 = vadd.f32 0.0, %v1953
        %v1955 = vpop.f32.mrb[0].mxu0
        %v1956 = vpop.f32.mrb[0].mxu0
        %v1957 = vadd.f32 0.0, %v1956
        %v1958 = vpop.f32.mrb[0].mxu0
        %1959 = vmatprep.mubr.bf16.mxu0 0
        %1960 = vmatmul.mubr.bf16.gmra.mrb[0].mxu0 %v1689
        %v1961 = vpop.f32.mrb[0].mxu0
        %v1962 = vadd.f32 0.0, %v1961
        %v1963 = vpop.f32.mrb[0].mxu0
        %v1964 = vpop.f32.mrb[0].mxu0
        %v1965 = vadd.f32 0.0, %v1964
        %v1966 = vpop.f32.mrb[0].mxu0
        %1967 = vmatprep.mubr.bf16.mxu0 0
        %1968 = vmatmul.mubr.bf16.gmra.mrb[0].mxu0 %v1692
        %v1969 = vpop.f32.mrb[0].mxu0
        %v1970 = vadd.f32 0.0, %v1969
        %v1971 = vpop.f32.mrb[0].mxu0
        %v1972 = vpop.f32.mrb[0].mxu0
        %v1973 = vadd.f32 0.0, %v1972
        %v1974 = vpop.f32.mrb[0].mxu0
        %1975 = vmatprep.mubr.bf16.mxu0 0
        %1976 = vmatmul.mubr.bf16.gmra.mrb[0].mxu0 %v1695
        %v1977 = vpop.f32.mrb[0].mxu0
        %v1978 = vadd.f32 0.0, %v1977
        %v1979 = vpop.f32.mrb[0].mxu0
        %v1980 = vpop.f32.mrb[0].mxu0
        %v1981 = vadd.f32 0.0, %v1980
        %v1982 = vpop.f32.mrb[0].mxu0
        %1983 = vmatprep.mubr.bf16.mxu0 0
        %1984 = vmatmul.mubr.bf16.gmra.mrb[0].mxu0 %v1698
        %v1985 = vpop.f32.mrb[0].mxu0
        %v1986 = vadd.f32 0.0, %v1985
        %v1987 = vpop.f32.mrb[0].mxu0
        %v1988 = vpop.f32.mrb[0].mxu0
        %v1989 = vadd.f32 0.0, %v1988
        %v1990 = vpop.f32.mrb[0].mxu0
        %1991 = vdwg.mxu0
        %v1992 = vadd.f32 %v1349, %v1738
        %v1993 = vadd.f32 %v1352, %v1741
        %v1994 = vadd.f32 %v1357, %v1746
        %v1995 = vadd.f32 %v1360, %v1749
        %v1996 = vadd.f32 %v1365, %v1754
        %v1997 = vadd.f32 %v1368, %v1757
        %v1998 = vadd.f32 %v1373, %v1762
        %v1999 = vadd.f32 %v1376, %v1765
        %v2000 = vadd.f32 %v1381, %v1770
        %v2001 = vadd.f32 %v1384, %v1773
        %v2002 = vadd.f32 %v1389, %v1778
        %v2003 = vadd.f32 %v1392, %v1781
        %v2004 = vadd.f32 %v1397, %v1786
        %v2005 = vadd.f32 %v1400, %v1789
        %v2006 = vadd.f32 %v1405, %v1794
        %v2007 = vadd.f32 %v1408, %v1797
        %v2008 = vadd.f32 %v1413, %v1802
        %v2009 = vadd.f32 %v1416, %v1805
        %v2010 = vadd.f32 %v1421, %v1810
        %v2011 = vadd.f32 %v1424, %v1813
        %v2012 = vadd.f32 %v1429, %v1818
        %v2013 = vadd.f32 %v1432, %v1821
        %v2014 = vadd.f32 %v1437, %v1826
        %v2015 = vadd.f32 %v1440, %v1829
        %v2016 = vadd.f32 %v1445, %v1834
        %v2017 = vadd.f32 %v1448, %v1837
        %v2018 = vadd.f32 %v1453, %v1842
        %v2019 = vadd.f32 %v1456, %v1845
        %v2020 = vadd.f32 %v1461, %v1850
        %v2021 = vadd.f32 %v1464, %v1853
        %v2022 = vadd.f32 %v1469, %v1858
        %v2023 = vadd.f32 %v1472, %v1861
        %v2024 = vadd.f32 %v1477, %v1866
        %v2025 = vadd.f32 %v1480, %v1869
        %v2026 = vadd.f32 %v1485, %v1874
        %v2027 = vadd.f32 %v1488, %v1877
        %v2028 = vadd.f32 %v1493, %v1882
        %v2029 = vadd.f32 %v1496, %v1885
        %v2030 = vadd.f32 %v1501, %v1890
        %v2031 = vadd.f32 %v1504, %v1893
        %v2032 = vadd.f32 %v1509, %v1898
        %v2033 = vadd.f32 %v1512, %v1901
        %v2034 = vadd.f32 %v1517, %v1906
        %v2035 = vadd.f32 %v1520, %v1909
        %v2036 = vadd.f32 %v1525, %v1914
        %v2037 = vadd.f32 %v1528, %v1917
        %v2038 = vadd.f32 %v1533, %v1922
        %v2039 = vadd.f32 %v1536, %v1925
        %v2040 = vadd.f32 %v1541, %v1930
        %v2041 = vadd.f32 %v1544, %v1933
        %v2042 = vadd.f32 %v1549, %v1938
        %v2043 = vadd.f32 %v1552, %v1941
        %v2044 = vadd.f32 %v1557, %v1946
        %v2045 = vadd.f32 %v1560, %v1949
        %v2046 = vadd.f32 %v1565, %v1954
        %v2047 = vadd.f32 %v1568, %v1957
        %v2048 = vadd.f32 %v1573, %v1962
        %v2049 = vadd.f32 %v1576, %v1965
        %v2050 = vadd.f32 %v1581, %v1970
        %v2051 = vadd.f32 %v1584, %v1973
        %v2052 = vadd.f32 %v1589, %v1978
        %v2053 = vadd.f32 %v1592, %v1981
        %v2054 = vadd.f32 %v1597, %v1986
        %v2055 = vadd.f32 %v1600, %v1989
        %v2056 = vld [vmem:[%s523] sm:$0xff]
        %v2057 = vld [vmem:[%s523 + $0x8] sm:$0xff]
        %v2058 = vld [vmem:[%s523 + $0x10] sm:$0xff]
        %v2059 = vld [vmem:[%s523 + $0x18] sm:$0xff]
        %v2060 = vld [vmem:[%s523 + $0x20] sm:$0xff]
        %v2061 = vld [vmem:[%s523 + $0x28] sm:$0xff]
        %v2062 = vld [vmem:[%s523 + $0x30] sm:$0xff]
        %v2063 = vld [vmem:[%s523 + $0x38] sm:$0xff]
        %v2064 = vld [vmem:[%s523 + $0x40] sm:$0xff]
        %v2065 = vld [vmem:[%s523 + $0x48] sm:$0xff]
        %v2066 = vld [vmem:[%s523 + $0x50] sm:$0xff]
        %v2067 = vld [vmem:[%s523 + $0x58] sm:$0xff]
        %v2068 = vld [vmem:[%s523 + $0x60] sm:$0xff]
        %v2069 = vld [vmem:[%s523 + $0x68] sm:$0xff]
        %v2070 = vld [vmem:[%s523 + $0x70] sm:$0xff]
        %v2071 = vld [vmem:[%s523 + $0x78] sm:$0xff]
        %v2072 = vld [vmem:[%s523 + $0x80] sm:$0xff]
        %v2073 = vld [vmem:[%s523 + $0x88] sm:$0xff]
        %v2074 = vld [vmem:[%s523 + $0x90] sm:$0xff]
        %v2075 = vld [vmem:[%s523 + $0x98] sm:$0xff]
        %v2076 = vld [vmem:[%s523 + $0xa0] sm:$0xff]
        %v2077 = vld [vmem:[%s523 + $0xa8] sm:$0xff]
        %v2078 = vld [vmem:[%s523 + $0xb0] sm:$0xff]
        %v2079 = vld [vmem:[%s523 + $0xb8] sm:$0xff]
        %v2080 = vld [vmem:[%s523 + $0xc0] sm:$0xff]
        %v2081 = vld [vmem:[%s523 + $0xc8] sm:$0xff]
        %v2082 = vld [vmem:[%s523 + $0xd0] sm:$0xff]
        %v2083 = vld [vmem:[%s523 + $0xd8] sm:$0xff]
        %v2084 = vld [vmem:[%s523 + $0xe0] sm:$0xff]
        %v2085 = vld [vmem:[%s523 + $0xe8] sm:$0xff]
        %v2086 = vld [vmem:[%s523 + $0xf0] sm:$0xff]
        %v2087 = vld [vmem:[%s523 + $0xf8] sm:$0xff]
        %v2088 = vld [vmem:[%s523 + $0x100] sm:$0xff]
        %v2089 = vld [vmem:[%s523 + $0x108] sm:$0xff]
        %v2090 = vld [vmem:[%s523 + $0x110] sm:$0xff]
        %v2091 = vld [vmem:[%s523 + $0x118] sm:$0xff]
        %v2092 = vld [vmem:[%s523 + $0x120] sm:$0xff]
        %v2093 = vld [vmem:[%s523 + $0x128] sm:$0xff]
        %v2094 = vld [vmem:[%s523 + $0x130] sm:$0xff]
        %v2095 = vld [vmem:[%s523 + $0x138] sm:$0xff]
        %v2096 = vld [vmem:[%s523 + $0x140] sm:$0xff]
        %v2097 = vld [vmem:[%s523 + $0x148] sm:$0xff]
        %v2098 = vld [vmem:[%s523 + $0x150] sm:$0xff]
        %v2099 = vld [vmem:[%s523 + $0x158] sm:$0xff]
        %v2100 = vld [vmem:[%s523 + $0x160] sm:$0xff]
        %v2101 = vld [vmem:[%s523 + $0x168] sm:$0xff]
        %v2102 = vld [vmem:[%s523 + $0x170] sm:$0xff]
        %v2103 = vld [vmem:[%s523 + $0x178] sm:$0xff]
        %v2104 = vld [vmem:[%s523 + $0x180] sm:$0xff]
        %v2105 = vld [vmem:[%s523 + $0x188] sm:$0xff]
        %v2106 = vld [vmem:[%s523 + $0x190] sm:$0xff]
        %v2107 = vld [vmem:[%s523 + $0x198] sm:$0xff]
        %v2108 = vld [vmem:[%s523 + $0x1a0] sm:$0xff]
        %v2109 = vld [vmem:[%s523 + $0x1a8] sm:$0xff]
        %v2110 = vld [vmem:[%s523 + $0x1b0] sm:$0xff]
        %v2111 = vld [vmem:[%s523 + $0x1b8] sm:$0xff]
        %v2112 = vld [vmem:[%s523 + $0x1c0] sm:$0xff]
        %v2113 = vld [vmem:[%s523 + $0x1c8] sm:$0xff]
        %v2114 = vld [vmem:[%s523 + $0x1d0] sm:$0xff]
        %v2115 = vld [vmem:[%s523 + $0x1d8] sm:$0xff]
        %v2116 = vld [vmem:[%s523 + $0x1e0] sm:$0xff]
        %v2117 = vld [vmem:[%s523 + $0x1e8] sm:$0xff]
        %v2118 = vld [vmem:[%s523 + $0x1f0] sm:$0xff]
        %v2119 = vld [vmem:[%s523 + $0x1f8] sm:$0xff]
        %v2120 = vlaneseq
        %v2121 = vand.u32 %v2120, 127
        %2122 = vset.pattern.permute.xlu0 0
        %2123 = vperm.xlu0 %2122, %v2056
        %v2124 = vpop.permute.xlu0 %2123
        %2125 = vset.pattern.permute.xlu0 0
        %2126 = vperm.xlu0 %2125, %v2057
        %v2127 = vpop.permute.xlu0 %2126
        %2128 = vset.pattern.permute.xlu0 0
        %2129 = vperm.xlu0 %2128, %v2058
        %v2130 = vpop.permute.xlu0 %2129
        %2131 = vset.pattern.permute.xlu0 0
        %2132 = vperm.xlu0 %2131, %v2059
        %v2133 = vpop.permute.xlu0 %2132
        %2134 = vset.pattern.permute.xlu0 0
        %2135 = vperm.xlu0 %2134, %v2060
        %v2136 = vpop.permute.xlu0 %2135
        %2137 = vset.pattern.permute.xlu0 0
        %2138 = vperm.xlu0 %2137, %v2061
        %v2139 = vpop.permute.xlu0 %2138
        %2140 = vset.pattern.permute.xlu0 0
        %2141 = vperm.xlu0 %2140, %v2062
        %v2142 = vpop.permute.xlu0 %2141
        %2143 = vset.pattern.permute.xlu0 0
        %2144 = vperm.xlu0 %2143, %v2063
        %v2145 = vpop.permute.xlu0 %2144
        %2146 = vset.pattern.permute.xlu0 0
        %2147 = vperm.xlu0 %2146, %v2064
        %v2148 = vpop.permute.xlu0 %2147
        %2149 = vset.pattern.permute.xlu0 0
        %2150 = vperm.xlu0 %2149, %v2065
        %v2151 = vpop.permute.xlu0 %2150
        %2152 = vset.pattern.permute.xlu0 0
        %2153 = vperm.xlu0 %2152, %v2066
        %v2154 = vpop.permute.xlu0 %2153
        %2155 = vset.pattern.permute.xlu0 0
        %2156 = vperm.xlu0 %2155, %v2067
        %v2157 = vpop.permute.xlu0 %2156
        %2158 = vset.pattern.permute.xlu0 0
        %2159 = vperm.xlu0 %2158, %v2068
        %v2160 = vpop.permute.xlu0 %2159
        %2161 = vset.pattern.permute.xlu0 0
        %2162 = vperm.xlu0 %2161, %v2069
        %v2163 = vpop.permute.xlu0 %2162
        %2164 = vset.pattern.permute.xlu0 0
        %2165 = vperm.xlu0 %2164, %v2070
        %v2166 = vpop.permute.xlu0 %2165
        %2167 = vset.pattern.permute.xlu0 0
        %2168 = vperm.xlu0 %2167, %v2071
        %v2169 = vpop.permute.xlu0 %2168
        %2170 = vset.pattern.permute.xlu0 0
        %2171 = vperm.xlu0 %2170, %v2072
        %v2172 = vpop.permute.xlu0 %2171
        %2173 = vset.pattern.permute.xlu0 0
        %2174 = vperm.xlu0 %2173, %v2073
        %v2175 = vpop.permute.xlu0 %2174
        %2176 = vset.pattern.permute.xlu0 0
        %2177 = vperm.xlu0 %2176, %v2074
        %v2178 = vpop.permute.xlu0 %2177
        %2179 = vset.pattern.permute.xlu0 0
        %2180 = vperm.xlu0 %2179, %v2075
        %v2181 = vpop.permute.xlu0 %2180
        %2182 = vset.pattern.permute.xlu0 0
        %2183 = vperm.xlu0 %2182, %v2076
        %v2184 = vpop.permute.xlu0 %2183
        %2185 = vset.pattern.permute.xlu0 0
        %2186 = vperm.xlu0 %2185, %v2077
        %v2187 = vpop.permute.xlu0 %2186
        %2188 = vset.pattern.permute.xlu0 0
        %2189 = vperm.xlu0 %2188, %v2078
        %v2190 = vpop.permute.xlu0 %2189
        %2191 = vset.pattern.permute.xlu0 0
        %2192 = vperm.xlu0 %2191, %v2079
        %v2193 = vpop.permute.xlu0 %2192
        %2194 = vset.pattern.permute.xlu0 0
        %2195 = vperm.xlu0 %2194, %v2080
        %v2196 = vpop.permute.xlu0 %2195
        %2197 = vset.pattern.permute.xlu0 0
        %2198 = vperm.xlu0 %2197, %v2081
        %v2199 = vpop.permute.xlu0 %2198
        %2200 = vset.pattern.permute.xlu0 0
        %2201 = vperm.xlu0 %2200, %v2082
        %v2202 = vpop.permute.xlu0 %2201
        %2203 = vset.pattern.permute.xlu0 0
        %2204 = vperm.xlu0 %2203, %v2083
        %v2205 = vpop.permute.xlu0 %2204
        %2206 = vset.pattern.permute.xlu0 0
        %2207 = vperm.xlu0 %2206, %v2084
        %v2208 = vpop.permute.xlu0 %2207
        %2209 = vset.pattern.permute.xlu0 0
        %2210 = vperm.xlu0 %2209, %v2085
        %v2211 = vpop.permute.xlu0 %2210
        %2212 = vset.pattern.permute.xlu0 0
        %2213 = vperm.xlu0 %2212, %v2086
        %v2214 = vpop.permute.xlu0 %2213
        %2215 = vset.pattern.permute.xlu0 0
        %2216 = vperm.xlu0 %2215, %v2087
        %v2217 = vpop.permute.xlu0 %2216
        %2218 = vset.pattern.permute.xlu0 0
        %2219 = vperm.xlu0 %2218, %v2088
        %v2220 = vpop.permute.xlu0 %2219
        %2221 = vset.pattern.permute.xlu0 0
        %2222 = vperm.xlu0 %2221, %v2089
        %v2223 = vpop.permute.xlu0 %2222
        %2224 = vset.pattern.permute.xlu0 0
        %2225 = vperm.xlu0 %2224, %v2090
        %v2226 = vpop.permute.xlu0 %2225
        %2227 = vset.pattern.permute.xlu0 0
        %2228 = vperm.xlu0 %2227, %v2091
        %v2229 = vpop.permute.xlu0 %2228
        %2230 = vset.pattern.permute.xlu0 0
        %2231 = vperm.xlu0 %2230, %v2092
        %v2232 = vpop.permute.xlu0 %2231
        %2233 = vset.pattern.permute.xlu0 0
        %2234 = vperm.xlu0 %2233, %v2093
        %v2235 = vpop.permute.xlu0 %2234
        %2236 = vset.pattern.permute.xlu0 0
        %2237 = vperm.xlu0 %2236, %v2094
        %v2238 = vpop.permute.xlu0 %2237
        %2239 = vset.pattern.permute.xlu0 0
        %2240 = vperm.xlu0 %2239, %v2095
        %v2241 = vpop.permute.xlu0 %2240
        %2242 = vset.pattern.permute.xlu0 0
        %2243 = vperm.xlu0 %2242, %v2096
        %v2244 = vpop.permute.xlu0 %2243
        %2245 = vset.pattern.permute.xlu0 0
        %2246 = vperm.xlu0 %2245, %v2097
        %v2247 = vpop.permute.xlu0 %2246
        %2248 = vset.pattern.permute.xlu0 0
        %2249 = vperm.xlu0 %2248, %v2098
        %v2250 = vpop.permute.xlu0 %2249
        %2251 = vset.pattern.permute.xlu0 0
        %2252 = vperm.xlu0 %2251, %v2099
        %v2253 = vpop.permute.xlu0 %2252
        %2254 = vset.pattern.permute.xlu0 0
        %2255 = vperm.xlu0 %2254, %v2100
        %v2256 = vpop.permute.xlu0 %2255
        %2257 = vset.pattern.permute.xlu0 0
        %2258 = vperm.xlu0 %2257, %v2101
        %v2259 = vpop.permute.xlu0 %2258
        %2260 = vset.pattern.permute.xlu0 0
        %2261 = vperm.xlu0 %2260, %v2102
        %v2262 = vpop.permute.xlu0 %2261
        %2263 = vset.pattern.permute.xlu0 0
        %2264 = vperm.xlu0 %2263, %v2103
        %v2265 = vpop.permute.xlu0 %2264
        %2266 = vset.pattern.permute.xlu0 0
        %2267 = vperm.xlu0 %2266, %v2104
        %v2268 = vpop.permute.xlu0 %2267
        %2269 = vset.pattern.permute.xlu0 0
        %2270 = vperm.xlu0 %2269, %v2105
        %v2271 = vpop.permute.xlu0 %2270
        %2272 = vset.pattern.permute.xlu0 0
        %2273 = vperm.xlu0 %2272, %v2106
        %v2274 = vpop.permute.xlu0 %2273
        %2275 = vset.pattern.permute.xlu0 0
        %2276 = vperm.xlu0 %2275, %v2107
        %v2277 = vpop.permute.xlu0 %2276
        %2278 = vset.pattern.permute.xlu0 0
        %2279 = vperm.xlu0 %2278, %v2108
        %v2280 = vpop.permute.xlu0 %2279
        %2281 = vset.pattern.permute.xlu0 0
        %2282 = vperm.xlu0 %2281, %v2109
        %v2283 = vpop.permute.xlu0 %2282
        %2284 = vset.pattern.permute.xlu0 0
        %2285 = vperm.xlu0 %2284, %v2110
        %v2286 = vpop.permute.xlu0 %2285
        %2287 = vset.pattern.permute.xlu0 0
        %2288 = vperm.xlu0 %2287, %v2111
        %v2289 = vpop.permute.xlu0 %2288
        %2290 = vset.pattern.permute.xlu0 0
        %2291 = vperm.xlu0 %2290, %v2112
        %v2292 = vpop.permute.xlu0 %2291
        %2293 = vset.pattern.permute.xlu0 0
        %2294 = vperm.xlu0 %2293, %v2113
        %v2295 = vpop.permute.xlu0 %2294
        %2296 = vset.pattern.permute.xlu0 0
        %2297 = vperm.xlu0 %2296, %v2114
        %v2298 = vpop.permute.xlu0 %2297
        %2299 = vset.pattern.permute.xlu0 0
        %2300 = vperm.xlu0 %2299, %v2115
        %v2301 = vpop.permute.xlu0 %2300
        %2302 = vset.pattern.permute.xlu0 0
        %2303 = vperm.xlu0 %2302, %v2116
        %v2304 = vpop.permute.xlu0 %2303
        %2305 = vset.pattern.permute.xlu0 0
        %2306 = vperm.xlu0 %2305, %v2117
        %v2307 = vpop.permute.xlu0 %2306
        %2308 = vset.pattern.permute.xlu0 0
        %2309 = vperm.xlu0 %2308, %v2118
        %v2310 = vpop.permute.xlu0 %2309
        %2311 = vset.pattern.permute.xlu0 0
        %2312 = vperm.xlu0 %2311, %v2119
        %v2313 = vpop.permute.xlu0 %2312
        %vm2314 = vcmp.eq.s32.totalorder %v2124, %v2121
        %vm2315 = vcmp.eq.s32.totalorder %v2127, %v2121
        %vm2316 = vcmp.eq.s32.totalorder %v2130, %v2121
        %vm2317 = vcmp.eq.s32.totalorder %v2133, %v2121
        %vm2318 = vcmp.eq.s32.totalorder %v2136, %v2121
        %vm2319 = vcmp.eq.s32.totalorder %v2139, %v2121
        %vm2320 = vcmp.eq.s32.totalorder %v2142, %v2121
        %vm2321 = vcmp.eq.s32.totalorder %v2145, %v2121
        %vm2322 = vcmp.eq.s32.totalorder %v2148, %v2121
        %vm2323 = vcmp.eq.s32.totalorder %v2151, %v2121
        %vm2324 = vcmp.eq.s32.totalorder %v2154, %v2121
        %vm2325 = vcmp.eq.s32.totalorder %v2157, %v2121
        %vm2326 = vcmp.eq.s32.totalorder %v2160, %v2121
        %vm2327 = vcmp.eq.s32.totalorder %v2163, %v2121
        %vm2328 = vcmp.eq.s32.totalorder %v2166, %v2121
        %vm2329 = vcmp.eq.s32.totalorder %v2169, %v2121
        %vm2330 = vcmp.eq.s32.totalorder %v2172, %v2121
        %vm2331 = vcmp.eq.s32.totalorder %v2175, %v2121
        %vm2332 = vcmp.eq.s32.totalorder %v2178, %v2121
        %vm2333 = vcmp.eq.s32.totalorder %v2181, %v2121
        %vm2334 = vcmp.eq.s32.totalorder %v2184, %v2121
        %vm2335 = vcmp.eq.s32.totalorder %v2187, %v2121
        %vm2336 = vcmp.eq.s32.totalorder %v2190, %v2121
        %vm2337 = vcmp.eq.s32.totalorder %v2193, %v2121
        %vm2338 = vcmp.eq.s32.totalorder %v2196, %v2121
        %vm2339 = vcmp.eq.s32.totalorder %v2199, %v2121
        %vm2340 = vcmp.eq.s32.totalorder %v2202, %v2121
        %vm2341 = vcmp.eq.s32.totalorder %v2205, %v2121
        %vm2342 = vcmp.eq.s32.totalorder %v2208, %v2121
        %vm2343 = vcmp.eq.s32.totalorder %v2211, %v2121
        %vm2344 = vcmp.eq.s32.totalorder %v2214, %v2121
        %vm2345 = vcmp.eq.s32.totalorder %v2217, %v2121
        %vm2346 = vcmp.eq.s32.totalorder %v2220, %v2121
        %vm2347 = vcmp.eq.s32.totalorder %v2223, %v2121
        %vm2348 = vcmp.eq.s32.totalorder %v2226, %v2121
        %vm2349 = vcmp.eq.s32.totalorder %v2229, %v2121
        %vm2350 = vcmp.eq.s32.totalorder %v2232, %v2121
        %vm2351 = vcmp.eq.s32.totalorder %v2235, %v2121
        %vm2352 = vcmp.eq.s32.totalorder %v2238, %v2121
        %vm2353 = vcmp.eq.s32.totalorder %v2241, %v2121
        %vm2354 = vcmp.eq.s32.totalorder %v2244, %v2121
        %vm2355 = vcmp.eq.s32.totalorder %v2247, %v2121
        %vm2356 = vcmp.eq.s32.totalorder %v2250, %v2121
        %vm2357 = vcmp.eq.s32.totalorder %v2253, %v2121
        %vm2358 = vcmp.eq.s32.totalorder %v2256, %v2121
        %vm2359 = vcmp.eq.s32.totalorder %v2259, %v2121
        %vm2360 = vcmp.eq.s32.totalorder %v2262, %v2121
        %vm2361 = vcmp.eq.s32.totalorder %v2265, %v2121
        %vm2362 = vcmp.eq.s32.totalorder %v2268, %v2121
        %vm2363 = vcmp.eq.s32.totalorder %v2271, %v2121
        %vm2364 = vcmp.eq.s32.totalorder %v2274, %v2121
        %vm2365 = vcmp.eq.s32.totalorder %v2277, %v2121
        %vm2366 = vcmp.eq.s32.totalorder %v2280, %v2121
        %vm2367 = vcmp.eq.s32.totalorder %v2283, %v2121
        %vm2368 = vcmp.eq.s32.totalorder %v2286, %v2121
        %vm2369 = vcmp.eq.s32.totalorder %v2289, %v2121
        %vm2370 = vcmp.eq.s32.totalorder %v2292, %v2121
        %vm2371 = vcmp.eq.s32.totalorder %v2295, %v2121
        %vm2372 = vcmp.eq.s32.totalorder %v2298, %v2121
        %vm2373 = vcmp.eq.s32.totalorder %v2301, %v2121
        %vm2374 = vcmp.eq.s32.totalorder %v2304, %v2121
        %vm2375 = vcmp.eq.s32.totalorder %v2307, %v2121
        %vm2376 = vcmp.eq.s32.totalorder %v2310, %v2121
        %vm2377 = vcmp.eq.s32.totalorder %v2313, %v2121
        %v2378 = vsel %vm2314, 1, 0
        %v2379 = vsel %vm2315, 1, 0
        %v2380 = vsel %vm2316, 1, 0
        %v2381 = vsel %vm2317, 1, 0
        %v2382 = vsel %vm2318, 1, 0
        %v2383 = vsel %vm2319, 1, 0
        %v2384 = vsel %vm2320, 1, 0
        %v2385 = vsel %vm2321, 1, 0
        %v2386 = vsel %vm2322, 1, 0
        %v2387 = vsel %vm2323, 1, 0
        %v2388 = vsel %vm2324, 1, 0
        %v2389 = vsel %vm2325, 1, 0
        %v2390 = vsel %vm2326, 1, 0
        %v2391 = vsel %vm2327, 1, 0
        %v2392 = vsel %vm2328, 1, 0
        %v2393 = vsel %vm2329, 1, 0
        %v2394 = vsel %vm2330, 1, 0
        %v2395 = vsel %vm2331, 1, 0
        %v2396 = vsel %vm2332, 1, 0
        %v2397 = vsel %vm2333, 1, 0
        %v2398 = vsel %vm2334, 1, 0
        %v2399 = vsel %vm2335, 1, 0
        %v2400 = vsel %vm2336, 1, 0
        %v2401 = vsel %vm2337, 1, 0
        %v2402 = vsel %vm2338, 1, 0
        %v2403 = vsel %vm2339, 1, 0
        %v2404 = vsel %vm2340, 1, 0
        %v2405 = vsel %vm2341, 1, 0
        %v2406 = vsel %vm2342, 1, 0
        %v2407 = vsel %vm2343, 1, 0
        %v2408 = vsel %vm2344, 1, 0
        %v2409 = vsel %vm2345, 1, 0
        %v2410 = vsel %vm2346, 1, 0
        %v2411 = vsel %vm2347, 1, 0
        %v2412 = vsel %vm2348, 1, 0
        %v2413 = vsel %vm2349, 1, 0
        %v2414 = vsel %vm2350, 1, 0
        %v2415 = vsel %vm2351, 1, 0
        %v2416 = vsel %vm2352, 1, 0
        %v2417 = vsel %vm2353, 1, 0
        %v2418 = vsel %vm2354, 1, 0
        %v2419 = vsel %vm2355, 1, 0
        %v2420 = vsel %vm2356, 1, 0
        %v2421 = vsel %vm2357, 1, 0
        %v2422 = vsel %vm2358, 1, 0
        %v2423 = vsel %vm2359, 1, 0
        %v2424 = vsel %vm2360, 1, 0
        %v2425 = vsel %vm2361, 1, 0
        %v2426 = vsel %vm2362, 1, 0
        %v2427 = vsel %vm2363, 1, 0
        %v2428 = vsel %vm2364, 1, 0
        %v2429 = vsel %vm2365, 1, 0
        %v2430 = vsel %vm2366, 1, 0
        %v2431 = vsel %vm2367, 1, 0
        %v2432 = vsel %vm2368, 1, 0
        %v2433 = vsel %vm2369, 1, 0
        %v2434 = vsel %vm2370, 1, 0
        %v2435 = vsel %vm2371, 1, 0
        %v2436 = vsel %vm2372, 1, 0
        %v2437 = vsel %vm2373, 1, 0
        %v2438 = vsel %vm2374, 1, 0
        %v2439 = vsel %vm2375, 1, 0
        %v2440 = vsel %vm2376, 1, 0
        %v2441 = vsel %vm2377, 1, 0
        %v2442 = vcvt.s32.f32 %v2378
        %v2443 = vcvt.s32.f32 %v2379
        %v2444 = vcvt.s32.f32 %v2380
        %v2445 = vcvt.s32.f32 %v2381
        %v2446 = vcvt.s32.f32 %v2382
        %v2447 = vcvt.s32.f32 %v2383
        %v2448 = vcvt.s32.f32 %v2384
        %v2449 = vcvt.s32.f32 %v2385
        %v2450 = vcvt.s32.f32 %v2386
        %v2451 = vcvt.s32.f32 %v2387
        %v2452 = vcvt.s32.f32 %v2388
        %v2453 = vcvt.s32.f32 %v2389
        %v2454 = vcvt.s32.f32 %v2390
        %v2455 = vcvt.s32.f32 %v2391
        %v2456 = vcvt.s32.f32 %v2392
        %v2457 = vcvt.s32.f32 %v2393
        %v2458 = vcvt.s32.f32 %v2394
        %v2459 = vcvt.s32.f32 %v2395
        %v2460 = vcvt.s32.f32 %v2396
        %v2461 = vcvt.s32.f32 %v2397
        %v2462 = vcvt.s32.f32 %v2398
        %v2463 = vcvt.s32.f32 %v2399
        %v2464 = vcvt.s32.f32 %v2400
        %v2465 = vcvt.s32.f32 %v2401
        %v2466 = vcvt.s32.f32 %v2402
        %v2467 = vcvt.s32.f32 %v2403
        %v2468 = vcvt.s32.f32 %v2404
        %v2469 = vcvt.s32.f32 %v2405
        %v2470 = vcvt.s32.f32 %v2406
        %v2471 = vcvt.s32.f32 %v2407
        %v2472 = vcvt.s32.f32 %v2408
        %v2473 = vcvt.s32.f32 %v2409
        %v2474 = vcvt.s32.f32 %v2410
        %v2475 = vcvt.s32.f32 %v2411
        %v2476 = vcvt.s32.f32 %v2412
        %v2477 = vcvt.s32.f32 %v2413
        %v2478 = vcvt.s32.f32 %v2414
        %v2479 = vcvt.s32.f32 %v2415
        %v2480 = vcvt.s32.f32 %v2416
        %v2481 = vcvt.s32.f32 %v2417
        %v2482 = vcvt.s32.f32 %v2418
        %v2483 = vcvt.s32.f32 %v2419
        %v2484 = vcvt.s32.f32 %v2420
        %v2485 = vcvt.s32.f32 %v2421
        %v2486 = vcvt.s32.f32 %v2422
        %v2487 = vcvt.s32.f32 %v2423
        %v2488 = vcvt.s32.f32 %v2424
        %v2489 = vcvt.s32.f32 %v2425
        %v2490 = vcvt.s32.f32 %v2426
        %v2491 = vcvt.s32.f32 %v2427
        %v2492 = vcvt.s32.f32 %v2428
        %v2493 = vcvt.s32.f32 %v2429
        %v2494 = vcvt.s32.f32 %v2430
        %v2495 = vcvt.s32.f32 %v2431
        %v2496 = vcvt.s32.f32 %v2432
        %v2497 = vcvt.s32.f32 %v2433
        %v2498 = vcvt.s32.f32 %v2434
        %v2499 = vcvt.s32.f32 %v2435
        %v2500 = vcvt.s32.f32 %v2436
        %v2501 = vcvt.s32.f32 %v2437
        %v2502 = vcvt.s32.f32 %v2438
        %v2503 = vcvt.s32.f32 %v2439
        %v2504 = vcvt.s32.f32 %v2440
        %v2505 = vcvt.s32.f32 %v2441
        %v2506 = vld [vmem:[%s7] sm:$0xff]
        %v2508 = vsel %vm825, %v2442, 0
        %v2511 = vsel %vm825, %v2443, 0
        %v2514 = vsel %vm825, %v2444, 0
        %v2517 = vsel %vm825, %v2445, 0
        %v2520 = vsel %vm825, %v2446, 0
        %v2523 = vsel %vm825, %v2447, 0
        %v2526 = vsel %vm825, %v2448, 0
        %v2529 = vsel %vm825, %v2449, 0
        %v2532 = vsel %vm825, %v2450, 0
        %v2535 = vsel %vm825, %v2451, 0
        %v2538 = vsel %vm825, %v2452, 0
        %v2541 = vsel %vm825, %v2453, 0
        %v2544 = vsel %vm825, %v2454, 0
        %v2547 = vsel %vm825, %v2455, 0
        %v2550 = vsel %vm825, %v2456, 0
        %v2553 = vsel %vm825, %v2457, 0
        %v2556 = vsel %vm825, %v2458, 0
        %v2559 = vsel %vm825, %v2459, 0
        %v2562 = vsel %vm825, %v2460, 0
        %v2565 = vsel %vm825, %v2461, 0
        %v2568 = vsel %vm825, %v2462, 0
        %v2571 = vsel %vm825, %v2463, 0
        %v2574 = vsel %vm825, %v2464, 0
        %v2577 = vsel %vm825, %v2465, 0
        %v2580 = vsel %vm825, %v2466, 0
        %v2583 = vsel %vm825, %v2467, 0
        %v2586 = vsel %vm825, %v2468, 0
        %v2589 = vsel %vm825, %v2469, 0
        %v2592 = vsel %vm825, %v2470, 0
        %v2595 = vsel %vm825, %v2471, 0
        %v2598 = vsel %vm825, %v2472, 0
        %v2601 = vsel %vm825, %v2473, 0
        %v2604 = vsel %vm825, %v2474, 0
        %v2607 = vsel %vm825, %v2475, 0
        %v2610 = vsel %vm825, %v2476, 0
        %v2613 = vsel %vm825, %v2477, 0
        %v2616 = vsel %vm825, %v2478, 0
        %v2619 = vsel %vm825, %v2479, 0
        %v2622 = vsel %vm825, %v2480, 0
        %v2625 = vsel %vm825, %v2481, 0
        %v2628 = vsel %vm825, %v2482, 0
        %v2631 = vsel %vm825, %v2483, 0
        %v2634 = vsel %vm825, %v2484, 0
        %v2637 = vsel %vm825, %v2485, 0
        %v2640 = vsel %vm825, %v2486, 0
        %v2643 = vsel %vm825, %v2487, 0
        %v2646 = vsel %vm825, %v2488, 0
        %v2649 = vsel %vm825, %v2489, 0
        %v2652 = vsel %vm825, %v2490, 0
        %v2655 = vsel %vm825, %v2491, 0
        %v2658 = vsel %vm825, %v2492, 0
        %v2661 = vsel %vm825, %v2493, 0
        %v2664 = vsel %vm825, %v2494, 0
        %v2667 = vsel %vm825, %v2495, 0
        %v2670 = vsel %vm825, %v2496, 0
        %v2673 = vsel %vm825, %v2497, 0
        %v2676 = vsel %vm825, %v2498, 0
        %v2679 = vsel %vm825, %v2499, 0
        %v2682 = vsel %vm825, %v2500, 0
        %v2685 = vsel %vm825, %v2501, 0
        %v2688 = vsel %vm825, %v2502, 0
        %v2691 = vsel %vm825, %v2503, 0
        %v2694 = vsel %vm825, %v2504, 0
        %v2697 = vsel %vm825, %v2505, 0
        %2699 = vmatprep.subr.mxu0 0.0
        %2700 = vmatpush1.msra.mxu0 %v2506
        %2701 = vmatprep.subr.mxu0 0.0
        %2702 = vmatpush1.msra.mxu0 0.0
        %2703 = vmatprep.subr.mxu0 0.0
        %2704 = vmatpush1.msra.mxu0 0.0
        %2705 = vmatprep.subr.mxu0 0.0
        %2706 = vmatpush1.msra.mxu0 0.0
        %2707 = vmatprep.subr.mxu0 0.0
        %2708 = vmatpush1.msra.mxu0 0.0
        %2709 = vmatprep.subr.mxu0 0.0
        %2710 = vmatpush1.msra.mxu0 0.0
        %2711 = vmatprep.subr.mxu0 0.0
        %2712 = vmatpush1.msra.mxu0 0.0
        %2713 = vmatprep.subr.mxu0 0.0
        %2714 = vmatpush1.msra.mxu0 0.0
        %2715 = vmatprep.subr.mxu0 0.0
        %2716 = vmatpush1.msra.mxu0 0.0
        %2717 = vmatprep.subr.mxu0 0.0
        %2718 = vmatpush1.msra.mxu0 0.0
        %2719 = vmatprep.subr.mxu0 0.0
        %2720 = vmatpush1.msra.mxu0 0.0
        %2721 = vmatprep.subr.mxu0 0.0
        %2722 = vmatpush1.msra.mxu0 0.0
        %2723 = vmatprep.subr.mxu0 0.0
        %2724 = vmatpush1.msra.mxu0 0.0
        %2725 = vmatprep.subr.mxu0 0.0
        %2726 = vmatpush1.msra.mxu0 0.0
        %2727 = vmatprep.subr.mxu0 0.0
        %2728 = vmatpush1.msra.mxu0 0.0
        %2729 = vmatprep.subr.mxu0 0.0
        %2730 = vmatpush1.msra.mxu0 0.0
        %2731 = vmatprep.subr.mxu0 0.0
        %2732 = vmatpush1.msra.mxu0 0.0
        %2733 = vmatprep.subr.mxu0 0.0
        %2734 = vmatpush1.msra.mxu0 0.0
        %2735 = vmatprep.subr.mxu0 0.0
        %2736 = vmatpush1.msra.mxu0 0.0
        %2737 = vmatprep.subr.mxu0 0.0
        %2738 = vmatpush1.msra.mxu0 0.0
        %2739 = vmatprep.subr.mxu0 0.0
        %2740 = vmatpush1.msra.mxu0 0.0
        %2741 = vmatprep.subr.mxu0 0.0
        %2742 = vmatpush1.msra.mxu0 0.0
        %2743 = vmatprep.subr.mxu0 0.0
        %2744 = vmatpush1.msra.mxu0 0.0
        %2745 = vmatprep.subr.mxu0 0.0
        %2746 = vmatpush1.msra.mxu0 0.0
        %2747 = vmatprep.subr.mxu0 0.0
        %2748 = vmatpush1.msra.mxu0 0.0
        %2749 = vmatprep.subr.mxu0 0.0
        %2750 = vmatpush1.msra.mxu0 0.0
        %2751 = vmatprep.subr.mxu0 0.0
        %2752 = vmatpush1.msra.mxu0 0.0
        %2753 = vmatprep.subr.mxu0 0.0
        %2754 = vmatpush1.msra.mxu0 0.0
        %2755 = vmatprep.subr.mxu0 0.0
        %2756 = vmatpush1.msra.mxu0 0.0
        %2757 = vmatprep.subr.mxu0 0.0
        %2758 = vmatpush1.msra.mxu0 0.0
        %2759 = vmatprep.subr.mxu0 0.0
        %2760 = vmatpush1.msra.mxu0 0.0
        %2761 = vmatprep.subr.mxu0 0.0
        %2762 = vmatpush1.msra.mxu0 0.0
        %2763 = vmatprep.mubr.f32.mxu0 0.0
        %2764 = vmatmul.mubr.f32.gmra.mrb[0].mxu0 %v2508
        %v2765 = vpop.f32.mrb[0].mxu0
        %v2766 = vadd.f32 0.0, %v2765
        %v2767 = vpop.f32.mrb[0].mxu0
        %2768 = vmatprep.mubr.f32.mxu0 0.0
        %2769 = vmatmul.mubr.f32.gmra.mrb[0].mxu0 %v2511
        %v2770 = vpop.f32.mrb[0].mxu0
        %v2771 = vadd.f32 0.0, %v2770
        %v2772 = vpop.f32.mrb[0].mxu0
        %2773 = vmatprep.mubr.f32.mxu0 0.0
        %2774 = vmatmul.mubr.f32.gmra.mrb[0].mxu0 %v2514
        %v2775 = vpop.f32.mrb[0].mxu0
        %v2776 = vadd.f32 0.0, %v2775
        %v2777 = vpop.f32.mrb[0].mxu0
        %2778 = vmatprep.mubr.f32.mxu0 0.0
        %2779 = vmatmul.mubr.f32.gmra.mrb[0].mxu0 %v2517
        %v2780 = vpop.f32.mrb[0].mxu0
        %v2781 = vadd.f32 0.0, %v2780
        %v2782 = vpop.f32.mrb[0].mxu0
        %2783 = vmatprep.mubr.f32.mxu0 0.0
        %2784 = vmatmul.mubr.f32.gmra.mrb[0].mxu0 %v2520
        %v2785 = vpop.f32.mrb[0].mxu0
        %v2786 = vadd.f32 0.0, %v2785
        %v2787 = vpop.f32.mrb[0].mxu0
        %2788 = vmatprep.mubr.f32.mxu0 0.0
        %2789 = vmatmul.mubr.f32.gmra.mrb[0].mxu0 %v2523
        %v2790 = vpop.f32.mrb[0].mxu0
        %v2791 = vadd.f32 0.0, %v2790
        %v2792 = vpop.f32.mrb[0].mxu0
        %2793 = vmatprep.mubr.f32.mxu0 0.0
        %2794 = vmatmul.mubr.f32.gmra.mrb[0].mxu0 %v2526
        %v2795 = vpop.f32.mrb[0].mxu0
        %v2796 = vadd.f32 0.0, %v2795
        %v2797 = vpop.f32.mrb[0].mxu0
        %2798 = vmatprep.mubr.f32.mxu0 0.0
        %2799 = vmatmul.mubr.f32.gmra.mrb[0].mxu0 %v2529
        %v2800 = vpop.f32.mrb[0].mxu0
        %v2801 = vadd.f32 0.0, %v2800
        %v2802 = vpop.f32.mrb[0].mxu0
        %2803 = vmatprep.mubr.f32.mxu0 0.0
        %2804 = vmatmul.mubr.f32.gmra.mrb[0].mxu0 %v2532
        %v2805 = vpop.f32.mrb[0].mxu0
        %v2806 = vadd.f32 0.0, %v2805
        %v2807 = vpop.f32.mrb[0].mxu0
        %2808 = vmatprep.mubr.f32.mxu0 0.0
        %2809 = vmatmul.mubr.f32.gmra.mrb[0].mxu0 %v2535
        %v2810 = vpop.f32.mrb[0].mxu0
        %v2811 = vadd.f32 0.0, %v2810
        %v2812 = vpop.f32.mrb[0].mxu0
        %2813 = vmatprep.mubr.f32.mxu0 0.0
        %2814 = vmatmul.mubr.f32.gmra.mrb[0].mxu0 %v2538
        %v2815 = vpop.f32.mrb[0].mxu0
        %v2816 = vadd.f32 0.0, %v2815
        %v2817 = vpop.f32.mrb[0].mxu0
        %2818 = vmatprep.mubr.f32.mxu0 0.0
        %2819 = vmatmul.mubr.f32.gmra.mrb[0].mxu0 %v2541
        %v2820 = vpop.f32.mrb[0].mxu0
        %v2821 = vadd.f32 0.0, %v2820
        %v2822 = vpop.f32.mrb[0].mxu0
        %2823 = vmatprep.mubr.f32.mxu0 0.0
        %2824 = vmatmul.mubr.f32.gmra.mrb[0].mxu0 %v2544
        %v2825 = vpop.f32.mrb[0].mxu0
        %v2826 = vadd.f32 0.0, %v2825
        %v2827 = vpop.f32.mrb[0].mxu0
        %2828 = vmatprep.mubr.f32.mxu0 0.0
        %2829 = vmatmul.mubr.f32.gmra.mrb[0].mxu0 %v2547
        %v2830 = vpop.f32.mrb[0].mxu0
        %v2831 = vadd.f32 0.0, %v2830
        %v2832 = vpop.f32.mrb[0].mxu0
        %2833 = vmatprep.mubr.f32.mxu0 0.0
        %2834 = vmatmul.mubr.f32.gmra.mrb[0].mxu0 %v2550
        %v2835 = vpop.f32.mrb[0].mxu0
        %v2836 = vadd.f32 0.0, %v2835
        %v2837 = vpop.f32.mrb[0].mxu0
        %2838 = vmatprep.mubr.f32.mxu0 0.0
        %2839 = vmatmul.mubr.f32.gmra.mrb[0].mxu0 %v2553
        %v2840 = vpop.f32.mrb[0].mxu0
        %v2841 = vadd.f32 0.0, %v2840
        %v2842 = vpop.f32.mrb[0].mxu0
        %2843 = vmatprep.mubr.f32.mxu0 0.0
        %2844 = vmatmul.mubr.f32.gmra.mrb[0].mxu0 %v2556
        %v2845 = vpop.f32.mrb[0].mxu0
        %v2846 = vadd.f32 0.0, %v2845
        %v2847 = vpop.f32.mrb[0].mxu0
        %2848 = vmatprep.mubr.f32.mxu0 0.0
        %2849 = vmatmul.mubr.f32.gmra.mrb[0].mxu0 %v2559
        %v2850 = vpop.f32.mrb[0].mxu0
        %v2851 = vadd.f32 0.0, %v2850
        %v2852 = vpop.f32.mrb[0].mxu0
        %2853 = vmatprep.mubr.f32.mxu0 0.0
        %2854 = vmatmul.mubr.f32.gmra.mrb[0].mxu0 %v2562
        %v2855 = vpop.f32.mrb[0].mxu0
        %v2856 = vadd.f32 0.0, %v2855
        %v2857 = vpop.f32.mrb[0].mxu0
        %2858 = vmatprep.mubr.f32.mxu0 0.0
        %2859 = vmatmul.mubr.f32.gmra.mrb[0].mxu0 %v2565
        %v2860 = vpop.f32.mrb[0].mxu0
        %v2861 = vadd.f32 0.0, %v2860
        %v2862 = vpop.f32.mrb[0].mxu0
        %2863 = vmatprep.mubr.f32.mxu0 0.0
        %2864 = vmatmul.mubr.f32.gmra.mrb[0].mxu0 %v2568
        %v2865 = vpop.f32.mrb[0].mxu0
        %v2866 = vadd.f32 0.0, %v2865
        %v2867 = vpop.f32.mrb[0].mxu0
        %2868 = vmatprep.mubr.f32.mxu0 0.0
        %2869 = vmatmul.mubr.f32.gmra.mrb[0].mxu0 %v2571
        %v2870 = vpop.f32.mrb[0].mxu0
        %v2871 = vadd.f32 0.0, %v2870
        %v2872 = vpop.f32.mrb[0].mxu0
        %2873 = vmatprep.mubr.f32.mxu0 0.0
        %2874 = vmatmul.mubr.f32.gmra.mrb[0].mxu0 %v2574
        %v2875 = vpop.f32.mrb[0].mxu0
        %v2876 = vadd.f32 0.0, %v2875
        %v2877 = vpop.f32.mrb[0].mxu0
        %2878 = vmatprep.mubr.f32.mxu0 0.0
        %2879 = vmatmul.mubr.f32.gmra.mrb[0].mxu0 %v2577
        %v2880 = vpop.f32.mrb[0].mxu0
        %v2881 = vadd.f32 0.0, %v2880
        %v2882 = vpop.f32.mrb[0].mxu0
        %2883 = vmatprep.mubr.f32.mxu0 0.0
        %2884 = vmatmul.mubr.f32.gmra.mrb[0].mxu0 %v2580
        %v2885 = vpop.f32.mrb[0].mxu0
        %v2886 = vadd.f32 0.0, %v2885
        %v2887 = vpop.f32.mrb[0].mxu0
        %2888 = vmatprep.mubr.f32.mxu0 0.0
        %2889 = vmatmul.mubr.f32.gmra.mrb[0].mxu0 %v2583
        %v2890 = vpop.f32.mrb[0].mxu0
        %v2891 = vadd.f32 0.0, %v2890
        %v2892 = vpop.f32.mrb[0].mxu0
        %2893 = vmatprep.mubr.f32.mxu0 0.0
        %2894 = vmatmul.mubr.f32.gmra.mrb[0].mxu0 %v2586
        %v2895 = vpop.f32.mrb[0].mxu0
        %v2896 = vadd.f32 0.0, %v2895
        %v2897 = vpop.f32.mrb[0].mxu0
        %2898 = vmatprep.mubr.f32.mxu0 0.0
        %2899 = vmatmul.mubr.f32.gmra.mrb[0].mxu0 %v2589
        %v2900 = vpop.f32.mrb[0].mxu0
        %v2901 = vadd.f32 0.0, %v2900
        %v2902 = vpop.f32.mrb[0].mxu0
        %2903 = vmatprep.mubr.f32.mxu0 0.0
        %2904 = vmatmul.mubr.f32.gmra.mrb[0].mxu0 %v2592
        %v2905 = vpop.f32.mrb[0].mxu0
        %v2906 = vadd.f32 0.0, %v2905
        %v2907 = vpop.f32.mrb[0].mxu0
        %2908 = vmatprep.mubr.f32.mxu0 0.0
        %2909 = vmatmul.mubr.f32.gmra.mrb[0].mxu0 %v2595
        %v2910 = vpop.f32.mrb[0].mxu0
        %v2911 = vadd.f32 0.0, %v2910
        %v2912 = vpop.f32.mrb[0].mxu0
        %2913 = vmatprep.mubr.f32.mxu0 0.0
        %2914 = vmatmul.mubr.f32.gmra.mrb[0].mxu0 %v2598
        %v2915 = vpop.f32.mrb[0].mxu0
        %v2916 = vadd.f32 0.0, %v2915
        %v2917 = vpop.f32.mrb[0].mxu0
        %2918 = vmatprep.mubr.f32.mxu0 0.0
        %2919 = vmatmul.mubr.f32.gmra.mrb[0].mxu0 %v2601
        %v2920 = vpop.f32.mrb[0].mxu0
        %v2921 = vadd.f32 0.0, %v2920
        %v2922 = vpop.f32.mrb[0].mxu0
        %2923 = vmatprep.mubr.f32.mxu0 0.0
        %2924 = vmatmul.mubr.f32.gmra.mrb[0].mxu0 %v2604
        %v2925 = vpop.f32.mrb[0].mxu0
        %v2926 = vadd.f32 0.0, %v2925
        %v2927 = vpop.f32.mrb[0].mxu0
        %2928 = vmatprep.mubr.f32.mxu0 0.0
        %2929 = vmatmul.mubr.f32.gmra.mrb[0].mxu0 %v2607
        %v2930 = vpop.f32.mrb[0].mxu0
        %v2931 = vadd.f32 0.0, %v2930
        %v2932 = vpop.f32.mrb[0].mxu0
        %2933 = vmatprep.mubr.f32.mxu0 0.0
        %2934 = vmatmul.mubr.f32.gmra.mrb[0].mxu0 %v2610
        %v2935 = vpop.f32.mrb[0].mxu0
        %v2936 = vadd.f32 0.0, %v2935
        %v2937 = vpop.f32.mrb[0].mxu0
        %2938 = vmatprep.mubr.f32.mxu0 0.0
        %2939 = vmatmul.mubr.f32.gmra.mrb[0].mxu0 %v2613
        %v2940 = vpop.f32.mrb[0].mxu0
        %v2941 = vadd.f32 0.0, %v2940
        %v2942 = vpop.f32.mrb[0].mxu0
        %2943 = vmatprep.mubr.f32.mxu0 0.0
        %2944 = vmatmul.mubr.f32.gmra.mrb[0].mxu0 %v2616
        %v2945 = vpop.f32.mrb[0].mxu0
        %v2946 = vadd.f32 0.0, %v2945
        %v2947 = vpop.f32.mrb[0].mxu0
        %2948 = vmatprep.mubr.f32.mxu0 0.0
        %2949 = vmatmul.mubr.f32.gmra.mrb[0].mxu0 %v2619
        %v2950 = vpop.f32.mrb[0].mxu0
        %v2951 = vadd.f32 0.0, %v2950
        %v2952 = vpop.f32.mrb[0].mxu0
        %2953 = vmatprep.mubr.f32.mxu0 0.0
        %2954 = vmatmul.mubr.f32.gmra.mrb[0].mxu0 %v2622
        %v2955 = vpop.f32.mrb[0].mxu0
        %v2956 = vadd.f32 0.0, %v2955
        %v2957 = vpop.f32.mrb[0].mxu0
        %2958 = vmatprep.mubr.f32.mxu0 0.0
        %2959 = vmatmul.mubr.f32.gmra.mrb[0].mxu0 %v2625
        %v2960 = vpop.f32.mrb[0].mxu0
        %v2961 = vadd.f32 0.0, %v2960
        %v2962 = vpop.f32.mrb[0].mxu0
        %2963 = vmatprep.mubr.f32.mxu0 0.0
        %2964 = vmatmul.mubr.f32.gmra.mrb[0].mxu0 %v2628
        %v2965 = vpop.f32.mrb[0].mxu0
        %v2966 = vadd.f32 0.0, %v2965
        %v2967 = vpop.f32.mrb[0].mxu0
        %2968 = vmatprep.mubr.f32.mxu0 0.0
        %2969 = vmatmul.mubr.f32.gmra.mrb[0].mxu0 %v2631
        %v2970 = vpop.f32.mrb[0].mxu0
        %v2971 = vadd.f32 0.0, %v2970
        %v2972 = vpop.f32.mrb[0].mxu0
        %2973 = vmatprep.mubr.f32.mxu0 0.0
        %2974 = vmatmul.mubr.f32.gmra.mrb[0].mxu0 %v2634
        %v2975 = vpop.f32.mrb[0].mxu0
        %v2976 = vadd.f32 0.0, %v2975
        %v2977 = vpop.f32.mrb[0].mxu0
        %2978 = vmatprep.mubr.f32.mxu0 0.0
        %2979 = vmatmul.mubr.f32.gmra.mrb[0].mxu0 %v2637
        %v2980 = vpop.f32.mrb[0].mxu0
        %v2981 = vadd.f32 0.0, %v2980
        %v2982 = vpop.f32.mrb[0].mxu0
        %2983 = vmatprep.mubr.f32.mxu0 0.0
        %2984 = vmatmul.mubr.f32.gmra.mrb[0].mxu0 %v2640
        %v2985 = vpop.f32.mrb[0].mxu0
        %v2986 = vadd.f32 0.0, %v2985
        %v2987 = vpop.f32.mrb[0].mxu0
        %2988 = vmatprep.mubr.f32.mxu0 0.0
        %2989 = vmatmul.mubr.f32.gmra.mrb[0].mxu0 %v2643
        %v2990 = vpop.f32.mrb[0].mxu0
        %v2991 = vadd.f32 0.0, %v2990
        %v2992 = vpop.f32.mrb[0].mxu0
        %2993 = vmatprep.mubr.f32.mxu0 0.0
        %2994 = vmatmul.mubr.f32.gmra.mrb[0].mxu0 %v2646
        %v2995 = vpop.f32.mrb[0].mxu0
        %v2996 = vadd.f32 0.0, %v2995
        %v2997 = vpop.f32.mrb[0].mxu0
        %2998 = vmatprep.mubr.f32.mxu0 0.0
        %2999 = vmatmul.mubr.f32.gmra.mrb[0].mxu0 %v2649
        %v3000 = vpop.f32.mrb[0].mxu0
        %v3001 = vadd.f32 0.0, %v3000
        %v3002 = vpop.f32.mrb[0].mxu0
        %3003 = vmatprep.mubr.f32.mxu0 0.0
        %3004 = vmatmul.mubr.f32.gmra.mrb[0].mxu0 %v2652
        %v3005 = vpop.f32.mrb[0].mxu0
        %v3006 = vadd.f32 0.0, %v3005
        %v3007 = vpop.f32.mrb[0].mxu0
        %3008 = vmatprep.mubr.f32.mxu0 0.0
        %3009 = vmatmul.mubr.f32.gmra.mrb[0].mxu0 %v2655
        %v3010 = vpop.f32.mrb[0].mxu0
        %v3011 = vadd.f32 0.0, %v3010
        %v3012 = vpop.f32.mrb[0].mxu0
        %3013 = vmatprep.mubr.f32.mxu0 0.0
        %3014 = vmatmul.mubr.f32.gmra.mrb[0].mxu0 %v2658
        %v3015 = vpop.f32.mrb[0].mxu0
        %v3016 = vadd.f32 0.0, %v3015
        %v3017 = vpop.f32.mrb[0].mxu0
        %3018 = vmatprep.mubr.f32.mxu0 0.0
        %3019 = vmatmul.mubr.f32.gmra.mrb[0].mxu0 %v2661
        %v3020 = vpop.f32.mrb[0].mxu0
        %v3021 = vadd.f32 0.0, %v3020
        %v3022 = vpop.f32.mrb[0].mxu0
        %3023 = vmatprep.mubr.f32.mxu0 0.0
        %3024 = vmatmul.mubr.f32.gmra.mrb[0].mxu0 %v2664
        %v3025 = vpop.f32.mrb[0].mxu0
        %v3026 = vadd.f32 0.0, %v3025
        %v3027 = vpop.f32.mrb[0].mxu0
        %3028 = vmatprep.mubr.f32.mxu0 0.0
        %3029 = vmatmul.mubr.f32.gmra.mrb[0].mxu0 %v2667
        %v3030 = vpop.f32.mrb[0].mxu0
        %v3031 = vadd.f32 0.0, %v3030
        %v3032 = vpop.f32.mrb[0].mxu0
        %3033 = vmatprep.mubr.f32.mxu0 0.0
        %3034 = vmatmul.mubr.f32.gmra.mrb[0].mxu0 %v2670
        %v3035 = vpop.f32.mrb[0].mxu0
        %v3036 = vadd.f32 0.0, %v3035
        %v3037 = vpop.f32.mrb[0].mxu0
        %3038 = vmatprep.mubr.f32.mxu0 0.0
        %3039 = vmatmul.mubr.f32.gmra.mrb[0].mxu0 %v2673
        %v3040 = vpop.f32.mrb[0].mxu0
        %v3041 = vadd.f32 0.0, %v3040
        %v3042 = vpop.f32.mrb[0].mxu0
        %3043 = vmatprep.mubr.f32.mxu0 0.0
        %3044 = vmatmul.mubr.f32.gmra.mrb[0].mxu0 %v2676
        %v3045 = vpop.f32.mrb[0].mxu0
        %v3046 = vadd.f32 0.0, %v3045
        %v3047 = vpop.f32.mrb[0].mxu0
        %3048 = vmatprep.mubr.f32.mxu0 0.0
        %3049 = vmatmul.mubr.f32.gmra.mrb[0].mxu0 %v2679
        %v3050 = vpop.f32.mrb[0].mxu0
        %v3051 = vadd.f32 0.0, %v3050
        %v3052 = vpop.f32.mrb[0].mxu0
        %3053 = vmatprep.mubr.f32.mxu0 0.0
        %3054 = vmatmul.mubr.f32.gmra.mrb[0].mxu0 %v2682
        %v3055 = vpop.f32.mrb[0].mxu0
        %v3056 = vadd.f32 0.0, %v3055
        %v3057 = vpop.f32.mrb[0].mxu0
        %3058 = vmatprep.mubr.f32.mxu0 0.0
        %3059 = vmatmul.mubr.f32.gmra.mrb[0].mxu0 %v2685
        %v3060 = vpop.f32.mrb[0].mxu0
        %v3061 = vadd.f32 0.0, %v3060
        %v3062 = vpop.f32.mrb[0].mxu0
        %3063 = vmatprep.mubr.f32.mxu0 0.0
        %3064 = vmatmul.mubr.f32.gmra.mrb[0].mxu0 %v2688
        %v3065 = vpop.f32.mrb[0].mxu0
        %v3066 = vadd.f32 0.0, %v3065
        %v3067 = vpop.f32.mrb[0].mxu0
        %3068 = vmatprep.mubr.f32.mxu0 0.0
        %3069 = vmatmul.mubr.f32.gmra.mrb[0].mxu0 %v2691
        %v3070 = vpop.f32.mrb[0].mxu0
        %v3071 = vadd.f32 0.0, %v3070
        %v3072 = vpop.f32.mrb[0].mxu0
        %3073 = vmatprep.mubr.f32.mxu0 0.0
        %3074 = vmatmul.mubr.f32.gmra.mrb[0].mxu0 %v2694
        %v3075 = vpop.f32.mrb[0].mxu0
        %v3076 = vadd.f32 0.0, %v3075
        %v3077 = vpop.f32.mrb[0].mxu0
        %3078 = vmatprep.mubr.f32.mxu0 0.0
        %3079 = vmatmul.mubr.f32.gmra.mrb[0].mxu0 %v2697
        %v3080 = vpop.f32.mrb[0].mxu0
        %v3081 = vadd.f32 0.0, %v3080
        %v3082 = vpop.f32.mrb[0].mxu0
        %3083 = vdwg.mxu0
        %v3084 = vadd.f32 %v1992, %v2766
        %v3085 = vadd.f32 %v1993, %v2771
        %v3086 = vadd.f32 %v1994, %v2776
        %v3087 = vadd.f32 %v1995, %v2781
        %v3088 = vadd.f32 %v1996, %v2786
        %v3089 = vadd.f32 %v1997, %v2791
        %v3090 = vadd.f32 %v1998, %v2796
        %v3091 = vadd.f32 %v1999, %v2801
        %v3092 = vadd.f32 %v2000, %v2806
        %v3093 = vadd.f32 %v2001, %v2811
        %v3094 = vadd.f32 %v2002, %v2816
        %v3095 = vadd.f32 %v2003, %v2821
        %v3096 = vadd.f32 %v2004, %v2826
        %v3097 = vadd.f32 %v2005, %v2831
        %v3098 = vadd.f32 %v2006, %v2836
        %v3099 = vadd.f32 %v2007, %v2841
        %v3100 = vadd.f32 %v2008, %v2846
        %v3101 = vadd.f32 %v2009, %v2851
        %v3102 = vadd.f32 %v2010, %v2856
        %v3103 = vadd.f32 %v2011, %v2861
        %v3104 = vadd.f32 %v2012, %v2866
        %v3105 = vadd.f32 %v2013, %v2871
        %v3106 = vadd.f32 %v2014, %v2876
        %v3107 = vadd.f32 %v2015, %v2881
        %v3108 = vadd.f32 %v2016, %v2886
        %v3109 = vadd.f32 %v2017, %v2891
        %v3110 = vadd.f32 %v2018, %v2896
        %v3111 = vadd.f32 %v2019, %v2901
        %v3112 = vadd.f32 %v2020, %v2906
        %v3113 = vadd.f32 %v2021, %v2911
        %v3114 = vadd.f32 %v2022, %v2916
        %v3115 = vadd.f32 %v2023, %v2921
        %v3116 = vadd.f32 %v2024, %v2926
        %v3117 = vadd.f32 %v2025, %v2931
        %v3118 = vadd.f32 %v2026, %v2936
        %v3119 = vadd.f32 %v2027, %v2941
        %v3120 = vadd.f32 %v2028, %v2946
        %v3121 = vadd.f32 %v2029, %v2951
        %v3122 = vadd.f32 %v2030, %v2956
        %v3123 = vadd.f32 %v2031, %v2961
        %v3124 = vadd.f32 %v2032, %v2966
        %v3125 = vadd.f32 %v2033, %v2971
        %v3126 = vadd.f32 %v2034, %v2976
        %v3127 = vadd.f32 %v2035, %v2981
        %v3128 = vadd.f32 %v2036, %v2986
        %v3129 = vadd.f32 %v2037, %v2991
        %v3130 = vadd.f32 %v2038, %v2996
        %v3131 = vadd.f32 %v2039, %v3001
        %v3132 = vadd.f32 %v2040, %v3006
        %v3133 = vadd.f32 %v2041, %v3011
        %v3134 = vadd.f32 %v2042, %v3016
        %v3135 = vadd.f32 %v2043, %v3021
        %v3136 = vadd.f32 %v2044, %v3026
        %v3137 = vadd.f32 %v2045, %v3031
        %v3138 = vadd.f32 %v2046, %v3036
        %v3139 = vadd.f32 %v2047, %v3041
        %v3140 = vadd.f32 %v2048, %v3046
        %v3141 = vadd.f32 %v2049, %v3051
        %v3142 = vadd.f32 %v2050, %v3056
        %v3143 = vadd.f32 %v2051, %v3061
        %v3144 = vadd.f32 %v2052, %v3066
        %v3145 = vadd.f32 %v2053, %v3071
        %v3146 = vadd.f32 %v2054, %v3076
        %v3147 = vadd.f32 %v2055, %v3081
        %v3148 = vld [vmem:[%s8] sm:$0x1]
        %v3150 = vlaneseq
        %v3151 = vshrl.u32 %v3150, 7
        %v3152 = vsub.s32 0, %v3151
        %v3153 = vrot.slane %v3148, %v3152
        %v3155 = vadd.f32 %v3084, %v3153
        %v3156 = vadd.f32 %v3085, %v3153
        %v3157 = vadd.f32 %v3086, %v3153
        %v3158 = vadd.f32 %v3087, %v3153
        %v3159 = vadd.f32 %v3088, %v3153
        %v3160 = vadd.f32 %v3089, %v3153
        %v3161 = vadd.f32 %v3090, %v3153
        %v3162 = vadd.f32 %v3091, %v3153
        %v3163 = vadd.f32 %v3092, %v3153
        %v3164 = vadd.f32 %v3093, %v3153
        %v3165 = vadd.f32 %v3094, %v3153
        %v3166 = vadd.f32 %v3095, %v3153
        %v3167 = vadd.f32 %v3096, %v3153
        %v3168 = vadd.f32 %v3097, %v3153
        %v3169 = vadd.f32 %v3098, %v3153
        %v3170 = vadd.f32 %v3099, %v3153
        %v3171 = vadd.f32 %v3100, %v3153
        %v3172 = vadd.f32 %v3101, %v3153
        %v3173 = vadd.f32 %v3102, %v3153
        %v3174 = vadd.f32 %v3103, %v3153
        %v3175 = vadd.f32 %v3104, %v3153
        %v3176 = vadd.f32 %v3105, %v3153
        %v3177 = vadd.f32 %v3106, %v3153
        %v3178 = vadd.f32 %v3107, %v3153
        %v3179 = vadd.f32 %v3108, %v3153
        %v3180 = vadd.f32 %v3109, %v3153
        %v3181 = vadd.f32 %v3110, %v3153
        %v3182 = vadd.f32 %v3111, %v3153
        %v3183 = vadd.f32 %v3112, %v3153
        %v3184 = vadd.f32 %v3113, %v3153
        %v3185 = vadd.f32 %v3114, %v3153
        %v3186 = vadd.f32 %v3115, %v3153
        %v3187 = vadd.f32 %v3116, %v3153
        %v3188 = vadd.f32 %v3117, %v3153
        %v3189 = vadd.f32 %v3118, %v3153
        %v3190 = vadd.f32 %v3119, %v3153
        %v3191 = vadd.f32 %v3120, %v3153
        %v3192 = vadd.f32 %v3121, %v3153
        %v3193 = vadd.f32 %v3122, %v3153
        %v3194 = vadd.f32 %v3123, %v3153
        %v3195 = vadd.f32 %v3124, %v3153
        %v3196 = vadd.f32 %v3125, %v3153
        %v3197 = vadd.f32 %v3126, %v3153
        %v3198 = vadd.f32 %v3127, %v3153
        %v3199 = vadd.f32 %v3128, %v3153
        %v3200 = vadd.f32 %v3129, %v3153
        %v3201 = vadd.f32 %v3130, %v3153
        %v3202 = vadd.f32 %v3131, %v3153
        %v3203 = vadd.f32 %v3132, %v3153
        %v3204 = vadd.f32 %v3133, %v3153
        %v3205 = vadd.f32 %v3134, %v3153
        %v3206 = vadd.f32 %v3135, %v3153
        %v3207 = vadd.f32 %v3136, %v3153
        %v3208 = vadd.f32 %v3137, %v3153
        %v3209 = vadd.f32 %v3138, %v3153
        %v3210 = vadd.f32 %v3139, %v3153
        %v3211 = vadd.f32 %v3140, %v3153
        %v3212 = vadd.f32 %v3141, %v3153
        %v3213 = vadd.f32 %v3142, %v3153
        %v3214 = vadd.f32 %v3143, %v3153
        %v3215 = vadd.f32 %v3144, %v3153
        %v3216 = vadd.f32 %v3145, %v3153
        %v3217 = vadd.f32 %v3146, %v3153
        %v3218 = vadd.f32 %v3147, %v3153
        %v3219 = vmax.f32 %v3155, 0.0
        %v3220 = vmax.f32 %v3156, 0.0
        %v3221 = vmax.f32 %v3157, 0.0
        %v3222 = vmax.f32 %v3158, 0.0
        %v3223 = vmax.f32 %v3159, 0.0
        %v3224 = vmax.f32 %v3160, 0.0
        %v3225 = vmax.f32 %v3161, 0.0
        %v3226 = vmax.f32 %v3162, 0.0
        %v3227 = vmax.f32 %v3163, 0.0
        %v3228 = vmax.f32 %v3164, 0.0
        %v3229 = vmax.f32 %v3165, 0.0
        %v3230 = vmax.f32 %v3166, 0.0
        %v3231 = vmax.f32 %v3167, 0.0
        %v3232 = vmax.f32 %v3168, 0.0
        %v3233 = vmax.f32 %v3169, 0.0
        %v3234 = vmax.f32 %v3170, 0.0
        %v3235 = vmax.f32 %v3171, 0.0
        %v3236 = vmax.f32 %v3172, 0.0
        %v3237 = vmax.f32 %v3173, 0.0
        %v3238 = vmax.f32 %v3174, 0.0
        %v3239 = vmax.f32 %v3175, 0.0
        %v3240 = vmax.f32 %v3176, 0.0
        %v3241 = vmax.f32 %v3177, 0.0
        %v3242 = vmax.f32 %v3178, 0.0
        %v3243 = vmax.f32 %v3179, 0.0
        %v3244 = vmax.f32 %v3180, 0.0
        %v3245 = vmax.f32 %v3181, 0.0
        %v3246 = vmax.f32 %v3182, 0.0
        %v3247 = vmax.f32 %v3183, 0.0
        %v3248 = vmax.f32 %v3184, 0.0
        %v3249 = vmax.f32 %v3185, 0.0
        %v3250 = vmax.f32 %v3186, 0.0
        %v3251 = vmax.f32 %v3187, 0.0
        %v3252 = vmax.f32 %v3188, 0.0
        %v3253 = vmax.f32 %v3189, 0.0
        %v3254 = vmax.f32 %v3190, 0.0
        %v3255 = vmax.f32 %v3191, 0.0
        %v3256 = vmax.f32 %v3192, 0.0
        %v3257 = vmax.f32 %v3193, 0.0
        %v3258 = vmax.f32 %v3194, 0.0
        %v3259 = vmax.f32 %v3195, 0.0
        %v3260 = vmax.f32 %v3196, 0.0
        %v3261 = vmax.f32 %v3197, 0.0
        %v3262 = vmax.f32 %v3198, 0.0
        %v3263 = vmax.f32 %v3199, 0.0
        %v3264 = vmax.f32 %v3200, 0.0
        %v3265 = vmax.f32 %v3201, 0.0
        %v3266 = vmax.f32 %v3202, 0.0
        %v3267 = vmax.f32 %v3203, 0.0
        %v3268 = vmax.f32 %v3204, 0.0
        %v3269 = vmax.f32 %v3205, 0.0
        %v3270 = vmax.f32 %v3206, 0.0
        %v3271 = vmax.f32 %v3207, 0.0
        %v3272 = vmax.f32 %v3208, 0.0
        %v3273 = vmax.f32 %v3209, 0.0
        %v3274 = vmax.f32 %v3210, 0.0
        %v3275 = vmax.f32 %v3211, 0.0
        %v3276 = vmax.f32 %v3212, 0.0
        %v3277 = vmax.f32 %v3213, 0.0
        %v3278 = vmax.f32 %v3214, 0.0
        %v3279 = vmax.f32 %v3215, 0.0
        %v3280 = vmax.f32 %v3216, 0.0
        %v3281 = vmax.f32 %v3217, 0.0
        %v3282 = vmax.f32 %v3218, 0.0
        %v3283 = vpack.c.bf16 %v3220, %v3219
        %v3284 = vpack.c.bf16 %v3222, %v3221
        %v3285 = vpack.c.bf16 %v3224, %v3223
        %v3286 = vpack.c.bf16 %v3226, %v3225
        %v3287 = vpack.c.bf16 %v3228, %v3227
        %v3288 = vpack.c.bf16 %v3230, %v3229
        %v3289 = vpack.c.bf16 %v3232, %v3231
        %v3290 = vpack.c.bf16 %v3234, %v3233
        %v3291 = vpack.c.bf16 %v3236, %v3235
        %v3292 = vpack.c.bf16 %v3238, %v3237
        %v3293 = vpack.c.bf16 %v3240, %v3239
        %v3294 = vpack.c.bf16 %v3242, %v3241
        %v3295 = vpack.c.bf16 %v3244, %v3243
        %v3296 = vpack.c.bf16 %v3246, %v3245
        %v3297 = vpack.c.bf16 %v3248, %v3247
        %v3298 = vpack.c.bf16 %v3250, %v3249
        %v3299 = vpack.c.bf16 %v3252, %v3251
        %v3300 = vpack.c.bf16 %v3254, %v3253
        %v3301 = vpack.c.bf16 %v3256, %v3255
        %v3302 = vpack.c.bf16 %v3258, %v3257
        %v3303 = vpack.c.bf16 %v3260, %v3259
        %v3304 = vpack.c.bf16 %v3262, %v3261
        %v3305 = vpack.c.bf16 %v3264, %v3263
        %v3306 = vpack.c.bf16 %v3266, %v3265
        %v3307 = vpack.c.bf16 %v3268, %v3267
        %v3308 = vpack.c.bf16 %v3270, %v3269
        %v3309 = vpack.c.bf16 %v3272, %v3271
        %v3310 = vpack.c.bf16 %v3274, %v3273
        %v3311 = vpack.c.bf16 %v3276, %v3275
        %v3312 = vpack.c.bf16 %v3278, %v3277
        %v3313 = vpack.c.bf16 %v3280, %v3279
        %v3314 = vpack.c.bf16 %v3282, %v3281
        %v3315 = vld [vmem:[%s9] sm:$0xf]
        %v3316 = vld [vmem:[%s9 + $0x4] sm:$0xf]
        %v3317 = vld [vmem:[%s9 + $0x8] sm:$0xf]
        %v3318 = vld [vmem:[%s9 + $0xc] sm:$0xf]
        %v3319 = vld [vmem:[%s10] sm:$0x1]
        %v3321 = vlaneseq
        %v3322 = vshrl.u32 %v3321, 7
        %v3323 = vsub.s32 0, %v3322
        %v3324 = vrot.slane %v3319, %v3323
        %v3330 = vunpack.c.l.b16 %v3315
        %v3331 = vunpack.c.l.b16 %v3316
        %v3332 = vunpack.c.l.b16 %v3317
        %v3333 = vunpack.c.l.b16 %v3318
        %v3334 = vpack.c.b16 %v3331, %v3330
        %v3335 = vpack.c.b16 %v3333, %v3332
        %vm3338 = vcmask 261120
        %v3340 = vsel %vm3338, %v3283, 0
        %v3343 = vsel %vm3338, %v3284, 0
        %v3346 = vsel %vm3338, %v3285, 0
        %v3349 = vsel %vm3338, %v3286, 0
        %v3352 = vsel %vm3338, %v3287, 0
        %v3355 = vsel %vm3338, %v3288, 0
        %v3358 = vsel %vm3338, %v3289, 0
        %v3361 = vsel %vm3338, %v3290, 0
        %v3364 = vsel %vm3338, %v3291, 0
        %v3367 = vsel %vm3338, %v3292, 0
        %v3370 = vsel %vm3338, %v3293, 0
        %v3373 = vsel %vm3338, %v3294, 0
        %v3376 = vsel %vm3338, %v3295, 0
        %v3379 = vsel %vm3338, %v3296, 0
        %v3382 = vsel %vm3338, %v3297, 0
        %v3385 = vsel %vm3338, %v3298, 0
        %v3388 = vsel %vm3338, %v3299, 0
        %v3391 = vsel %vm3338, %v3300, 0
        %v3394 = vsel %vm3338, %v3301, 0
        %v3397 = vsel %vm3338, %v3302, 0
        %v3400 = vsel %vm3338, %v3303, 0
        %v3403 = vsel %vm3338, %v3304, 0
        %v3406 = vsel %vm3338, %v3305, 0
        %v3409 = vsel %vm3338, %v3306, 0
        %v3412 = vsel %vm3338, %v3307, 0
        %v3415 = vsel %vm3338, %v3308, 0
        %v3418 = vsel %vm3338, %v3309, 0
        %v3421 = vsel %vm3338, %v3310, 0
        %v3424 = vsel %vm3338, %v3311, 0
        %v3427 = vsel %vm3338, %v3312, 0
        %v3430 = vsel %vm3338, %v3313, 0
        %v3433 = vsel %vm3338, %v3314, 0
        %3435 = vmatprep.subr.bf16.mxu0 0
        %3436 = vmatpush1.bf16.msra.mxu0 %v3334
        %3437 = vmatprep.subr.bf16.mxu0 0
        %3438 = vmatpush1.bf16.msra.mxu0 %v3335
        %3439 = vmatprep.subr.bf16.mxu0 0
        %3440 = vmatpush1.bf16.msra.mxu0 0
        %3441 = vmatprep.subr.bf16.mxu0 0
        %3442 = vmatpush1.bf16.msra.mxu0 0
        %3443 = vmatprep.subr.bf16.mxu0 0
        %3444 = vmatpush1.bf16.msra.mxu0 0
        %3445 = vmatprep.subr.bf16.mxu0 0
        %3446 = vmatpush1.bf16.msra.mxu0 0
        %3447 = vmatprep.subr.bf16.mxu0 0
        %3448 = vmatpush1.bf16.msra.mxu0 0
        %3449 = vmatprep.subr.bf16.mxu0 0
        %3450 = vmatpush1.bf16.msra.mxu0 0
        %3451 = vmatprep.subr.bf16.mxu0 0
        %3452 = vmatpush1.bf16.msra.mxu0 0
        %3453 = vmatprep.subr.bf16.mxu0 0
        %3454 = vmatpush1.bf16.msra.mxu0 0
        %3455 = vmatprep.subr.bf16.mxu0 0
        %3456 = vmatpush1.bf16.msra.mxu0 0
        %3457 = vmatprep.subr.bf16.mxu0 0
        %3458 = vmatpush1.bf16.msra.mxu0 0
        %3459 = vmatprep.subr.bf16.mxu0 0
        %3460 = vmatpush1.bf16.msra.mxu0 0
        %3461 = vmatprep.subr.bf16.mxu0 0
        %3462 = vmatpush1.bf16.msra.mxu0 0
        %3463 = vmatprep.subr.bf16.mxu0 0
        %3464 = vmatpush1.bf16.msra.mxu0 0
        %3465 = vmatprep.subr.bf16.mxu0 0
        %3466 = vmatpush1.bf16.msra.mxu0 0
        %3467 = vmatprep.mubr.bf16.mxu0 0
        %3468 = vmatmul.mubr.bf16.gmra.mrb[0].mxu0 %v3340
        %v3469 = vpop.f32.mrb[0].mxu0
        %v3470 = vadd.f32 %v3324, %v3469
        %v3471 = vpop.f32.mrb[0].mxu0
        %v3472 = vpop.f32.mrb[0].mxu0
        %v3473 = vadd.f32 %v3324, %v3472
        %v3474 = vpop.f32.mrb[0].mxu0
        %3475 = vmatprep.mubr.bf16.mxu0 0
        %3476 = vmatmul.mubr.bf16.gmra.mrb[0].mxu0 %v3343
        %v3477 = vpop.f32.mrb[0].mxu0
        %v3478 = vadd.f32 %v3324, %v3477
        %v3479 = vpop.f32.mrb[0].mxu0
        %v3480 = vpop.f32.mrb[0].mxu0
        %v3481 = vadd.f32 %v3324, %v3480
        %v3482 = vpop.f32.mrb[0].mxu0
        %3483 = vmatprep.mubr.bf16.mxu0 0
        %3484 = vmatmul.mubr.bf16.gmra.mrb[0].mxu0 %v3346
        %v3485 = vpop.f32.mrb[0].mxu0
        %v3486 = vadd.f32 %v3324, %v3485
        %v3487 = vpop.f32.mrb[0].mxu0
        %v3488 = vpop.f32.mrb[0].mxu0
        %v3489 = vadd.f32 %v3324, %v3488
        %v3490 = vpop.f32.mrb[0].mxu0
        %3491 = vmatprep.mubr.bf16.mxu0 0
        %3492 = vmatmul.mubr.bf16.gmra.mrb[0].mxu0 %v3349
        %v3493 = vpop.f32.mrb[0].mxu0
        %v3494 = vadd.f32 %v3324, %v3493
        %v3495 = vpop.f32.mrb[0].mxu0
        %v3496 = vpop.f32.mrb[0].mxu0
        %v3497 = vadd.f32 %v3324, %v3496
        %v3498 = vpop.f32.mrb[0].mxu0
        %3499 = vmatprep.mubr.bf16.mxu0 0
        %3500 = vmatmul.mubr.bf16.gmra.mrb[0].mxu0 %v3352
        %v3501 = vpop.f32.mrb[0].mxu0
        %v3502 = vadd.f32 %v3324, %v3501
        %v3503 = vpop.f32.mrb[0].mxu0
        %v3504 = vpop.f32.mrb[0].mxu0
        %v3505 = vadd.f32 %v3324, %v3504
        %v3506 = vpop.f32.mrb[0].mxu0
        %3507 = vmatprep.mubr.bf16.mxu0 0
        %3508 = vmatmul.mubr.bf16.gmra.mrb[0].mxu0 %v3355
        %v3509 = vpop.f32.mrb[0].mxu0
        %v3510 = vadd.f32 %v3324, %v3509
        %v3511 = vpop.f32.mrb[0].mxu0
        %v3512 = vpop.f32.mrb[0].mxu0
        %v3513 = vadd.f32 %v3324, %v3512
        %v3514 = vpop.f32.mrb[0].mxu0
        %3515 = vmatprep.mubr.bf16.mxu0 0
        %3516 = vmatmul.mubr.bf16.gmra.mrb[0].mxu0 %v3358
        %v3517 = vpop.f32.mrb[0].mxu0
        %v3518 = vadd.f32 %v3324, %v3517
        %v3519 = vpop.f32.mrb[0].mxu0
        %v3520 = vpop.f32.mrb[0].mxu0
        %v3521 = vadd.f32 %v3324, %v3520
        %v3522 = vpop.f32.mrb[0].mxu0
        %3523 = vmatprep.mubr.bf16.mxu0 0
        %3524 = vmatmul.mubr.bf16.gmra.mrb[0].mxu0 %v3361
        %v3525 = vpop.f32.mrb[0].mxu0
        %v3526 = vadd.f32 %v3324, %v3525
        %v3527 = vpop.f32.mrb[0].mxu0
        %v3528 = vpop.f32.mrb[0].mxu0
        %v3529 = vadd.f32 %v3324, %v3528
        %v3530 = vpop.f32.mrb[0].mxu0
        %3531 = vmatprep.mubr.bf16.mxu0 0
        %3532 = vmatmul.mubr.bf16.gmra.mrb[0].mxu0 %v3364
        %v3533 = vpop.f32.mrb[0].mxu0
        %v3534 = vadd.f32 %v3324, %v3533
        %v3535 = vpop.f32.mrb[0].mxu0
        %v3536 = vpop.f32.mrb[0].mxu0
        %v3537 = vadd.f32 %v3324, %v3536
        %v3538 = vpop.f32.mrb[0].mxu0
        %3539 = vmatprep.mubr.bf16.mxu0 0
        %3540 = vmatmul.mubr.bf16.gmra.mrb[0].mxu0 %v3367
        %v3541 = vpop.f32.mrb[0].mxu0
        %v3542 = vadd.f32 %v3324, %v3541
        %v3543 = vpop.f32.mrb[0].mxu0
        %v3544 = vpop.f32.mrb[0].mxu0
        %v3545 = vadd.f32 %v3324, %v3544
        %v3546 = vpop.f32.mrb[0].mxu0
        %3547 = vmatprep.mubr.bf16.mxu0 0
        %3548 = vmatmul.mubr.bf16.gmra.mrb[0].mxu0 %v3370
        %v3549 = vpop.f32.mrb[0].mxu0
        %v3550 = vadd.f32 %v3324, %v3549
        %v3551 = vpop.f32.mrb[0].mxu0
        %v3552 = vpop.f32.mrb[0].mxu0
        %v3553 = vadd.f32 %v3324, %v3552
        %v3554 = vpop.f32.mrb[0].mxu0
        %3555 = vmatprep.mubr.bf16.mxu0 0
        %3556 = vmatmul.mubr.bf16.gmra.mrb[0].mxu0 %v3373
        %v3557 = vpop.f32.mrb[0].mxu0
        %v3558 = vadd.f32 %v3324, %v3557
        %v3559 = vpop.f32.mrb[0].mxu0
        %v3560 = vpop.f32.mrb[0].mxu0
        %v3561 = vadd.f32 %v3324, %v3560
        %v3562 = vpop.f32.mrb[0].mxu0
        %3563 = vmatprep.mubr.bf16.mxu0 0
        %3564 = vmatmul.mubr.bf16.gmra.mrb[0].mxu0 %v3376
        %v3565 = vpop.f32.mrb[0].mxu0
        %v3566 = vadd.f32 %v3324, %v3565
        %v3567 = vpop.f32.mrb[0].mxu0
        %v3568 = vpop.f32.mrb[0].mxu0
        %v3569 = vadd.f32 %v3324, %v3568
        %v3570 = vpop.f32.mrb[0].mxu0
        %3571 = vmatprep.mubr.bf16.mxu0 0
        %3572 = vmatmul.mubr.bf16.gmra.mrb[0].mxu0 %v3379
        %v3573 = vpop.f32.mrb[0].mxu0
        %v3574 = vadd.f32 %v3324, %v3573
        %v3575 = vpop.f32.mrb[0].mxu0
        %v3576 = vpop.f32.mrb[0].mxu0
        %v3577 = vadd.f32 %v3324, %v3576
        %v3578 = vpop.f32.mrb[0].mxu0
        %3579 = vmatprep.mubr.bf16.mxu0 0
        %3580 = vmatmul.mubr.bf16.gmra.mrb[0].mxu0 %v3382
        %v3581 = vpop.f32.mrb[0].mxu0
        %v3582 = vadd.f32 %v3324, %v3581
        %v3583 = vpop.f32.mrb[0].mxu0
        %v3584 = vpop.f32.mrb[0].mxu0
        %v3585 = vadd.f32 %v3324, %v3584
        %v3586 = vpop.f32.mrb[0].mxu0
        %3587 = vmatprep.mubr.bf16.mxu0 0
        %3588 = vmatmul.mubr.bf16.gmra.mrb[0].mxu0 %v3385
        %v3589 = vpop.f32.mrb[0].mxu0
        %v3590 = vadd.f32 %v3324, %v3589
        %v3591 = vpop.f32.mrb[0].mxu0
        %v3592 = vpop.f32.mrb[0].mxu0
        %v3593 = vadd.f32 %v3324, %v3592
        %v3594 = vpop.f32.mrb[0].mxu0
        %3595 = vmatprep.mubr.bf16.mxu0 0
        %3596 = vmatmul.mubr.bf16.gmra.mrb[0].mxu0 %v3388
        %v3597 = vpop.f32.mrb[0].mxu0
        %v3598 = vadd.f32 %v3324, %v3597
        %v3599 = vpop.f32.mrb[0].mxu0
        %v3600 = vpop.f32.mrb[0].mxu0
        %v3601 = vadd.f32 %v3324, %v3600
        %v3602 = vpop.f32.mrb[0].mxu0
        %3603 = vmatprep.mubr.bf16.mxu0 0
        %3604 = vmatmul.mubr.bf16.gmra.mrb[0].mxu0 %v3391
        %v3605 = vpop.f32.mrb[0].mxu0
        %v3606 = vadd.f32 %v3324, %v3605
        %v3607 = vpop.f32.mrb[0].mxu0
        %v3608 = vpop.f32.mrb[0].mxu0
        %v3609 = vadd.f32 %v3324, %v3608
        %v3610 = vpop.f32.mrb[0].mxu0
        %3611 = vmatprep.mubr.bf16.mxu0 0
        %3612 = vmatmul.mubr.bf16.gmra.mrb[0].mxu0 %v3394
        %v3613 = vpop.f32.mrb[0].mxu0
        %v3614 = vadd.f32 %v3324, %v3613
        %v3615 = vpop.f32.mrb[0].mxu0
        %v3616 = vpop.f32.mrb[0].mxu0
        %v3617 = vadd.f32 %v3324, %v3616
        %v3618 = vpop.f32.mrb[0].mxu0
        %3619 = vmatprep.mubr.bf16.mxu0 0
        %3620 = vmatmul.mubr.bf16.gmra.mrb[0].mxu0 %v3397
        %v3621 = vpop.f32.mrb[0].mxu0
        %v3622 = vadd.f32 %v3324, %v3621
        %v3623 = vpop.f32.mrb[0].mxu0
        %v3624 = vpop.f32.mrb[0].mxu0
        %v3625 = vadd.f32 %v3324, %v3624
        %v3626 = vpop.f32.mrb[0].mxu0
        %3627 = vmatprep.mubr.bf16.mxu0 0
        %3628 = vmatmul.mubr.bf16.gmra.mrb[0].mxu0 %v3400
        %v3629 = vpop.f32.mrb[0].mxu0
        %v3630 = vadd.f32 %v3324, %v3629
        %v3631 = vpop.f32.mrb[0].mxu0
        %v3632 = vpop.f32.mrb[0].mxu0
        %v3633 = vadd.f32 %v3324, %v3632
        %v3634 = vpop.f32.mrb[0].mxu0
        %3635 = vmatprep.mubr.bf16.mxu0 0
        %3636 = vmatmul.mubr.bf16.gmra.mrb[0].mxu0 %v3403
        %v3637 = vpop.f32.mrb[0].mxu0
        %v3638 = vadd.f32 %v3324, %v3637
        %v3639 = vpop.f32.mrb[0].mxu0
        %v3640 = vpop.f32.mrb[0].mxu0
        %v3641 = vadd.f32 %v3324, %v3640
        %v3642 = vpop.f32.mrb[0].mxu0
        %3643 = vmatprep.mubr.bf16.mxu0 0
        %3644 = vmatmul.mubr.bf16.gmra.mrb[0].mxu0 %v3406
        %v3645 = vpop.f32.mrb[0].mxu0
        %v3646 = vadd.f32 %v3324, %v3645
        %v3647 = vpop.f32.mrb[0].mxu0
        %v3648 = vpop.f32.mrb[0].mxu0
        %v3649 = vadd.f32 %v3324, %v3648
        %v3650 = vpop.f32.mrb[0].mxu0
        %3651 = vmatprep.mubr.bf16.mxu0 0
        %3652 = vmatmul.mubr.bf16.gmra.mrb[0].mxu0 %v3409
        %v3653 = vpop.f32.mrb[0].mxu0
        %v3654 = vadd.f32 %v3324, %v3653
        %v3655 = vpop.f32.mrb[0].mxu0
        %v3656 = vpop.f32.mrb[0].mxu0
        %v3657 = vadd.f32 %v3324, %v3656
        %v3658 = vpop.f32.mrb[0].mxu0
        %3659 = vmatprep.mubr.bf16.mxu0 0
        %3660 = vmatmul.mubr.bf16.gmra.mrb[0].mxu0 %v3412
        %v3661 = vpop.f32.mrb[0].mxu0
        %v3662 = vadd.f32 %v3324, %v3661
        %v3663 = vpop.f32.mrb[0].mxu0
        %v3664 = vpop.f32.mrb[0].mxu0
        %v3665 = vadd.f32 %v3324, %v3664
        %v3666 = vpop.f32.mrb[0].mxu0
        %3667 = vmatprep.mubr.bf16.mxu0 0
        %3668 = vmatmul.mubr.bf16.gmra.mrb[0].mxu0 %v3415
        %v3669 = vpop.f32.mrb[0].mxu0
        %v3670 = vadd.f32 %v3324, %v3669
        %v3671 = vpop.f32.mrb[0].mxu0
        %v3672 = vpop.f32.mrb[0].mxu0
        %v3673 = vadd.f32 %v3324, %v3672
        %v3674 = vpop.f32.mrb[0].mxu0
        %3675 = vmatprep.mubr.bf16.mxu0 0
        %3676 = vmatmul.mubr.bf16.gmra.mrb[0].mxu0 %v3418
        %v3677 = vpop.f32.mrb[0].mxu0
        %v3678 = vadd.f32 %v3324, %v3677
        %v3679 = vpop.f32.mrb[0].mxu0
        %v3680 = vpop.f32.mrb[0].mxu0
        %v3681 = vadd.f32 %v3324, %v3680
        %v3682 = vpop.f32.mrb[0].mxu0
        %3683 = vmatprep.mubr.bf16.mxu0 0
        %3684 = vmatmul.mubr.bf16.gmra.mrb[0].mxu0 %v3421
        %v3685 = vpop.f32.mrb[0].mxu0
        %v3686 = vadd.f32 %v3324, %v3685
        %v3687 = vpop.f32.mrb[0].mxu0
        %v3688 = vpop.f32.mrb[0].mxu0
        %v3689 = vadd.f32 %v3324, %v3688
        %v3690 = vpop.f32.mrb[0].mxu0
        %3691 = vmatprep.mubr.bf16.mxu0 0
        %3692 = vmatmul.mubr.bf16.gmra.mrb[0].mxu0 %v3424
        %v3693 = vpop.f32.mrb[0].mxu0
        %v3694 = vadd.f32 %v3324, %v3693
        %v3695 = vpop.f32.mrb[0].mxu0
        %v3696 = vpop.f32.mrb[0].mxu0
        %v3697 = vadd.f32 %v3324, %v3696
        %v3698 = vpop.f32.mrb[0].mxu0
        %3699 = vmatprep.mubr.bf16.mxu0 0
        %3700 = vmatmul.mubr.bf16.gmra.mrb[0].mxu0 %v3427
        %v3701 = vpop.f32.mrb[0].mxu0
        %v3702 = vadd.f32 %v3324, %v3701
        %v3703 = vpop.f32.mrb[0].mxu0
        %v3704 = vpop.f32.mrb[0].mxu0
        %v3705 = vadd.f32 %v3324, %v3704
        %v3706 = vpop.f32.mrb[0].mxu0
        %3707 = vmatprep.mubr.bf16.mxu0 0
        %3708 = vmatmul.mubr.bf16.gmra.mrb[0].mxu0 %v3430
        %v3709 = vpop.f32.mrb[0].mxu0
        %v3710 = vadd.f32 %v3324, %v3709
        %v3711 = vpop.f32.mrb[0].mxu0
        %v3712 = vpop.f32.mrb[0].mxu0
        %v3713 = vadd.f32 %v3324, %v3712
        %v3714 = vpop.f32.mrb[0].mxu0
        %3715 = vmatprep.mubr.bf16.mxu0 0
        %3716 = vmatmul.mubr.bf16.gmra.mrb[0].mxu0 %v3433
        %v3717 = vpop.f32.mrb[0].mxu0
        %v3718 = vadd.f32 %v3324, %v3717
        %v3719 = vpop.f32.mrb[0].mxu0
        %v3720 = vpop.f32.mrb[0].mxu0
        %v3721 = vadd.f32 %v3324, %v3720
        %v3722 = vpop.f32.mrb[0].mxu0
        %3723 = vdwg.mxu0
        %v3724 = vpack.c.bf16 %v3473, %v3470
        %v3725 = vpack.c.bf16 %v3481, %v3478
        %v3726 = vpack.c.bf16 %v3489, %v3486
        %v3727 = vpack.c.bf16 %v3497, %v3494
        %v3728 = vpack.c.bf16 %v3505, %v3502
        %v3729 = vpack.c.bf16 %v3513, %v3510
        %v3730 = vpack.c.bf16 %v3521, %v3518
        %v3731 = vpack.c.bf16 %v3529, %v3526
        %v3732 = vpack.c.bf16 %v3537, %v3534
        %v3733 = vpack.c.bf16 %v3545, %v3542
        %v3734 = vpack.c.bf16 %v3553, %v3550
        %v3735 = vpack.c.bf16 %v3561, %v3558
        %v3736 = vpack.c.bf16 %v3569, %v3566
        %v3737 = vpack.c.bf16 %v3577, %v3574
        %v3738 = vpack.c.bf16 %v3585, %v3582
        %v3739 = vpack.c.bf16 %v3593, %v3590
        %v3740 = vpack.c.bf16 %v3601, %v3598
        %v3741 = vpack.c.bf16 %v3609, %v3606
        %v3742 = vpack.c.bf16 %v3617, %v3614
        %v3743 = vpack.c.bf16 %v3625, %v3622
        %v3744 = vpack.c.bf16 %v3633, %v3630
        %v3745 = vpack.c.bf16 %v3641, %v3638
        %v3746 = vpack.c.bf16 %v3649, %v3646
        %v3747 = vpack.c.bf16 %v3657, %v3654
        %v3748 = vpack.c.bf16 %v3665, %v3662
        %v3749 = vpack.c.bf16 %v3673, %v3670
        %v3750 = vpack.c.bf16 %v3681, %v3678
        %v3751 = vpack.c.bf16 %v3689, %v3686
        %v3752 = vpack.c.bf16 %v3697, %v3694
        %v3753 = vpack.c.bf16 %v3705, %v3702
        %v3754 = vpack.c.bf16 %v3713, %v3710
        %v3755 = vpack.c.bf16 %v3721, %v3718
        %v3788 = vunpack.c.l.b16 %v3724
        %v3789 = vunpack.c.h.b16 %v3724
        %v3790 = vunpack.c.l.b16 %v3725
        %v3791 = vunpack.c.h.b16 %v3725
        %v3792 = vunpack.c.l.b16 %v3726
        %v3793 = vunpack.c.h.b16 %v3726
        %v3794 = vunpack.c.l.b16 %v3727
        %v3795 = vunpack.c.h.b16 %v3727
        %v3796 = vunpack.c.l.b16 %v3728
        %v3797 = vunpack.c.h.b16 %v3728
        %v3798 = vunpack.c.l.b16 %v3729
        %v3799 = vunpack.c.h.b16 %v3729
        %v3800 = vunpack.c.l.b16 %v3730
        %v3801 = vunpack.c.h.b16 %v3730
        %v3802 = vunpack.c.l.b16 %v3731
        %v3803 = vunpack.c.h.b16 %v3731
        %v3804 = vunpack.c.l.b16 %v3732
        %v3805 = vunpack.c.h.b16 %v3732
        %v3806 = vunpack.c.l.b16 %v3733
        %v3807 = vunpack.c.h.b16 %v3733
        %v3808 = vunpack.c.l.b16 %v3734
        %v3809 = vunpack.c.h.b16 %v3734
        %v3810 = vunpack.c.l.b16 %v3735
        %v3811 = vunpack.c.h.b16 %v3735
        %v3812 = vunpack.c.l.b16 %v3736
        %v3813 = vunpack.c.h.b16 %v3736
        %v3814 = vunpack.c.l.b16 %v3737
        %v3815 = vunpack.c.h.b16 %v3737
        %v3816 = vunpack.c.l.b16 %v3738
        %v3817 = vunpack.c.h.b16 %v3738
        %v3818 = vunpack.c.l.b16 %v3739
        %v3819 = vunpack.c.h.b16 %v3739
        %v3820 = vunpack.c.l.b16 %v3740
        %v3821 = vunpack.c.h.b16 %v3740
        %v3822 = vunpack.c.l.b16 %v3741
        %v3823 = vunpack.c.h.b16 %v3741
        %v3824 = vunpack.c.l.b16 %v3742
        %v3825 = vunpack.c.h.b16 %v3742
        %v3826 = vunpack.c.l.b16 %v3743
        %v3827 = vunpack.c.h.b16 %v3743
        %v3828 = vunpack.c.l.b16 %v3744
        %v3829 = vunpack.c.h.b16 %v3744
        %v3830 = vunpack.c.l.b16 %v3745
        %v3831 = vunpack.c.h.b16 %v3745
        %v3832 = vunpack.c.l.b16 %v3746
        %v3833 = vunpack.c.h.b16 %v3746
        %v3834 = vunpack.c.l.b16 %v3747
        %v3835 = vunpack.c.h.b16 %v3747
        %v3836 = vunpack.c.l.b16 %v3748
        %v3837 = vunpack.c.h.b16 %v3748
        %v3838 = vunpack.c.l.b16 %v3749
        %v3839 = vunpack.c.h.b16 %v3749
        %v3840 = vunpack.c.l.b16 %v3750
        %v3841 = vunpack.c.h.b16 %v3750
        %v3842 = vunpack.c.l.b16 %v3751
        %v3843 = vunpack.c.h.b16 %v3751
        %v3844 = vunpack.c.l.b16 %v3752
        %v3845 = vunpack.c.h.b16 %v3752
        %v3846 = vunpack.c.l.b16 %v3753
        %v3847 = vunpack.c.h.b16 %v3753
        %v3848 = vunpack.c.l.b16 %v3754
        %v3849 = vunpack.c.h.b16 %v3754
        %v3850 = vunpack.c.l.b16 %v3755
        %v3851 = vunpack.c.h.b16 %v3755
        %v3852 = vpack.c.b16 %v3788, %v3788
        %v3853 = vpack.c.b16 %v3789, %v3789
        %v3854 = vpack.c.b16 %v3790, %v3790
        %v3855 = vpack.c.b16 %v3791, %v3791
        %v3856 = vpack.c.b16 %v3792, %v3792
        %v3857 = vpack.c.b16 %v3793, %v3793
        %v3858 = vpack.c.b16 %v3794, %v3794
        %v3859 = vpack.c.b16 %v3795, %v3795
        %v3860 = vpack.c.b16 %v3796, %v3796
        %v3861 = vpack.c.b16 %v3797, %v3797
        %v3862 = vpack.c.b16 %v3798, %v3798
        %v3863 = vpack.c.b16 %v3799, %v3799
        %v3864 = vpack.c.b16 %v3800, %v3800
        %v3865 = vpack.c.b16 %v3801, %v3801
        %v3866 = vpack.c.b16 %v3802, %v3802
        %v3867 = vpack.c.b16 %v3803, %v3803
        %v3868 = vpack.c.b16 %v3804, %v3804
        %v3869 = vpack.c.b16 %v3805, %v3805
        %v3870 = vpack.c.b16 %v3806, %v3806
        %v3871 = vpack.c.b16 %v3807, %v3807
        %v3872 = vpack.c.b16 %v3808, %v3808
        %v3873 = vpack.c.b16 %v3809, %v3809
        %v3874 = vpack.c.b16 %v3810, %v3810
        %v3875 = vpack.c.b16 %v3811, %v3811
        %v3876 = vpack.c.b16 %v3812, %v3812
        %v3877 = vpack.c.b16 %v3813, %v3813
        %v3878 = vpack.c.b16 %v3814, %v3814
        %v3879 = vpack.c.b16 %v3815, %v3815
        %v3880 = vpack.c.b16 %v3816, %v3816
        %v3881 = vpack.c.b16 %v3817, %v3817
        %v3882 = vpack.c.b16 %v3818, %v3818
        %v3883 = vpack.c.b16 %v3819, %v3819
        %v3884 = vpack.c.b16 %v3820, %v3820
        %v3885 = vpack.c.b16 %v3821, %v3821
        %v3886 = vpack.c.b16 %v3822, %v3822
        %v3887 = vpack.c.b16 %v3823, %v3823
        %v3888 = vpack.c.b16 %v3824, %v3824
        %v3889 = vpack.c.b16 %v3825, %v3825
        %v3890 = vpack.c.b16 %v3826, %v3826
        %v3891 = vpack.c.b16 %v3827, %v3827
        %v3892 = vpack.c.b16 %v3828, %v3828
        %v3893 = vpack.c.b16 %v3829, %v3829
        %v3894 = vpack.c.b16 %v3830, %v3830
        %v3895 = vpack.c.b16 %v3831, %v3831
        %v3896 = vpack.c.b16 %v3832, %v3832
        %v3897 = vpack.c.b16 %v3833, %v3833
        %v3898 = vpack.c.b16 %v3834, %v3834
        %v3899 = vpack.c.b16 %v3835, %v3835
        %v3900 = vpack.c.b16 %v3836, %v3836
        %v3901 = vpack.c.b16 %v3837, %v3837
        %v3902 = vpack.c.b16 %v3838, %v3838
        %v3903 = vpack.c.b16 %v3839, %v3839
        %v3904 = vpack.c.b16 %v3840, %v3840
        %v3905 = vpack.c.b16 %v3841, %v3841
        %v3906 = vpack.c.b16 %v3842, %v3842
        %v3907 = vpack.c.b16 %v3843, %v3843
        %v3908 = vpack.c.b16 %v3844, %v3844
        %v3909 = vpack.c.b16 %v3845, %v3845
        %v3910 = vpack.c.b16 %v3846, %v3846
        %v3911 = vpack.c.b16 %v3847, %v3847
        %v3912 = vpack.c.b16 %v3848, %v3848
        %v3913 = vpack.c.b16 %v3849, %v3849
        %v3914 = vpack.c.b16 %v3850, %v3850
        %v3915 = vpack.c.b16 %v3851, %v3851
        %vm3980 = vcmask 60416
        %3981 = vst.msk [vmem:[%s472] sm:$0xf] %vm3980, %v3852
        %3982 = vst.msk [vmem:[%s472 + $0x4] sm:$0xf] %vm3980, %v3853
        %3983 = vst.msk [vmem:[%s472 + $0x8] sm:$0xf] %vm3980, %v3854
        %3984 = vst.msk [vmem:[%s472 + $0xc] sm:$0xf] %vm3980, %v3855
        %3985 = vst.msk [vmem:[%s472 + $0x10] sm:$0xf] %vm3980, %v3856
        %3986 = vst.msk [vmem:[%s472 + $0x14] sm:$0xf] %vm3980, %v3857
        %3987 = vst.msk [vmem:[%s472 + $0x18] sm:$0xf] %vm3980, %v3858
        %3988 = vst.msk [vmem:[%s472 + $0x1c] sm:$0xf] %vm3980, %v3859
        %3989 = vst.msk [vmem:[%s472 + $0x20] sm:$0xf] %vm3980, %v3860
        %3990 = vst.msk [vmem:[%s472 + $0x24] sm:$0xf] %vm3980, %v3861
        %3991 = vst.msk [vmem:[%s472 + $0x28] sm:$0xf] %vm3980, %v3862
        %3992 = vst.msk [vmem:[%s472 + $0x2c] sm:$0xf] %vm3980, %v3863
        %3993 = vst.msk [vmem:[%s472 + $0x30] sm:$0xf] %vm3980, %v3864
        %3994 = vst.msk [vmem:[%s472 + $0x34] sm:$0xf] %vm3980, %v3865
        %3995 = vst.msk [vmem:[%s472 + $0x38] sm:$0xf] %vm3980, %v3866
        %3996 = vst.msk [vmem:[%s472 + $0x3c] sm:$0xf] %vm3980, %v3867
        %3997 = vst.msk [vmem:[%s472 + $0x40] sm:$0xf] %vm3980, %v3868
        %3998 = vst.msk [vmem:[%s472 + $0x44] sm:$0xf] %vm3980, %v3869
        %3999 = vst.msk [vmem:[%s472 + $0x48] sm:$0xf] %vm3980, %v3870
        %4000 = vst.msk [vmem:[%s472 + $0x4c] sm:$0xf] %vm3980, %v3871
        %4001 = vst.msk [vmem:[%s472 + $0x50] sm:$0xf] %vm3980, %v3872
        %4002 = vst.msk [vmem:[%s472 + $0x54] sm:$0xf] %vm3980, %v3873
        %4003 = vst.msk [vmem:[%s472 + $0x58] sm:$0xf] %vm3980, %v3874
        %4004 = vst.msk [vmem:[%s472 + $0x5c] sm:$0xf] %vm3980, %v3875
        %4005 = vst.msk [vmem:[%s472 + $0x60] sm:$0xf] %vm3980, %v3876
        %4006 = vst.msk [vmem:[%s472 + $0x64] sm:$0xf] %vm3980, %v3877
        %4007 = vst.msk [vmem:[%s472 + $0x68] sm:$0xf] %vm3980, %v3878
        %4008 = vst.msk [vmem:[%s472 + $0x6c] sm:$0xf] %vm3980, %v3879
        %4009 = vst.msk [vmem:[%s472 + $0x70] sm:$0xf] %vm3980, %v3880
        %4010 = vst.msk [vmem:[%s472 + $0x74] sm:$0xf] %vm3980, %v3881
        %4011 = vst.msk [vmem:[%s472 + $0x78] sm:$0xf] %vm3980, %v3882
        %4012 = vst.msk [vmem:[%s472 + $0x7c] sm:$0xf] %vm3980, %v3883
        %4013 = vst.msk [vmem:[%s472 + $0x80] sm:$0xf] %vm3980, %v3884
        %4014 = vst.msk [vmem:[%s472 + $0x84] sm:$0xf] %vm3980, %v3885
        %4015 = vst.msk [vmem:[%s472 + $0x88] sm:$0xf] %vm3980, %v3886
        %4016 = vst.msk [vmem:[%s472 + $0x8c] sm:$0xf] %vm3980, %v3887
        %4017 = vst.msk [vmem:[%s472 + $0x90] sm:$0xf] %vm3980, %v3888
        %4018 = vst.msk [vmem:[%s472 + $0x94] sm:$0xf] %vm3980, %v3889
        %4019 = vst.msk [vmem:[%s472 + $0x98] sm:$0xf] %vm3980, %v3890
        %4020 = vst.msk [vmem:[%s472 + $0x9c] sm:$0xf] %vm3980, %v3891
        %4021 = vst.msk [vmem:[%s472 + $0xa0] sm:$0xf] %vm3980, %v3892
        %4022 = vst.msk [vmem:[%s472 + $0xa4] sm:$0xf] %vm3980, %v3893
        %4023 = vst.msk [vmem:[%s472 + $0xa8] sm:$0xf] %vm3980, %v3894
        %4024 = vst.msk [vmem:[%s472 + $0xac] sm:$0xf] %vm3980, %v3895
        %4025 = vst.msk [vmem:[%s472 + $0xb0] sm:$0xf] %vm3980, %v3896
        %4026 = vst.msk [vmem:[%s472 + $0xb4] sm:$0xf] %vm3980, %v3897
        %4027 = vst.msk [vmem:[%s472 + $0xb8] sm:$0xf] %vm3980, %v3898
        %4028 = vst.msk [vmem:[%s472 + $0xbc] sm:$0xf] %vm3980, %v3899
        %4029 = vst.msk [vmem:[%s472 + $0xc0] sm:$0xf] %vm3980, %v3900
        %4030 = vst.msk [vmem:[%s472 + $0xc4] sm:$0xf] %vm3980, %v3901
        %4031 = vst.msk [vmem:[%s472 + $0xc8] sm:$0xf] %vm3980, %v3902
        %4032 = vst.msk [vmem:[%s472 + $0xcc] sm:$0xf] %vm3980, %v3903
        %4033 = vst.msk [vmem:[%s472 + $0xd0] sm:$0xf] %vm3980, %v3904
        %4034 = vst.msk [vmem:[%s472 + $0xd4] sm:$0xf] %vm3980, %v3905
        %4035 = vst.msk [vmem:[%s472 + $0xd8] sm:$0xf] %vm3980, %v3906
        %4036 = vst.msk [vmem:[%s472 + $0xdc] sm:$0xf] %vm3980, %v3907
        %4037 = vst.msk [vmem:[%s472 + $0xe0] sm:$0xf] %vm3980, %v3908
        %4038 = vst.msk [vmem:[%s472 + $0xe4] sm:$0xf] %vm3980, %v3909
        %4039 = vst.msk [vmem:[%s472 + $0xe8] sm:$0xf] %vm3980, %v3910
        %4040 = vst.msk [vmem:[%s472 + $0xec] sm:$0xf] %vm3980, %v3911
        %4041 = vst.msk [vmem:[%s472 + $0xf0] sm:$0xf] %vm3980, %v3912
        %4042 = vst.msk [vmem:[%s472 + $0xf4] sm:$0xf] %vm3980, %v3913
        %4043 = vst.msk [vmem:[%s472 + $0xf8] sm:$0xf] %vm3980, %v3914
        %4044 = vst.msk [vmem:[%s472 + $0xfc] sm:$0xf] %vm3980, %v3915
        %s4045 = sand.u32 %s281, 1
        %s4046 = sand.u32 %s281, 1
        %s4047 = smul.addr %s4046, 256
        %s4048 = scalar_lea.vmem [#allocation2], %s4047
        // Predicated region
        $region65: #{tpu_custom_call.1} parent=63 // pred_check
          %p4049 = pneg %p291
        $region66: #{tpu_custom_call.1} parent=63 // pred_check_branch
          %4051 = sbr.rel (%p4049) target = $region68
        $region67: #{tpu_custom_call.1} parent=63 // pred_region
          %s4052 = smul.u32 64, %s22
          %s4053 = ssub.s32 125, %s4052
          %p4054 = scmp.lt.s32.totalorder %s4053, 64
          %s4055 = scalar_select %p4054, %s4053, 64
          %s4056 = smul.u32 64, %s4055
          %p4057 = scmp.ne.s32.totalorder 0, %s4056
          %s4058 = smul.addr %s4052, 4
          %s4059 = scalar_lea.vmem %s11, %s4058
          // Predicated region
          $region69: #{tpu_custom_call.1} parent=67 // pred_check
            %p4060 = pneg %p4057
          $region70: #{tpu_custom_call.1} parent=67 // pred_check_branch
            %4062 = sbr.rel (%p4060) target = $region72
          $region71: #{tpu_custom_call.1} parent=67 // pred_region
            // Predicated region
            $region73: #{tpu_custom_call.1} parent=71 // pred_check
              _
            $region74: #{tpu_custom_call.1} parent=71 // pred_check_branch
              %4064 = sbr.rel target = $region76
            $region75: #{tpu_custom_call.1} parent=71 // pred_region
              // Predicated region
              $region95: #{tpu_custom_call.1} parent=75 // pred_check
                _
              $region96: #{tpu_custom_call.1} parent=75 // pred_check_branch
                %4239 = sbr.rel (0) target = $region98
              $region97: #{tpu_custom_call.1} parent=75 // pred_region
                %s4241 = sshrl.u32 %s4055, 6
                // While loop
                $region99: #{tpu_custom_call.1} parent=97 // loop_pre_header
                  _
                $region100: #{tpu_custom_call.1} parent=97 // loop_header
                  %s4243 = sphi 0, %s4245
                  %p4244 = scmp.ge.s32.totalorder %s4243, %s4241
                  %s4248 = sphi 0, %s4381
                  %s4249 = sphi %s4048, %s4384
                  %s4250 = sphi %s4059, %s4385
                $region101: #{tpu_custom_call.1} parent=97 // loop_header_branch
                  %4247 = sbr.rel (%p4244) target = $region105
                $region102: #{tpu_custom_call.1} parent=97 // loop_body
                  %v4251 = vld [vmem:[%s4249] sm:$0xf]
                  %4252 = vst [vmem:[%s4250] sm:$0xf] %v4251
                  %v4253 = vld [vmem:[%s4249 + $0x4] sm:$0xf]
                  %4254 = vst [vmem:[%s4250 + $0x4] sm:$0xf] %v4253
                  %v4255 = vld [vmem:[%s4249 + $0x8] sm:$0xf]
                  %4256 = vst [vmem:[%s4250 + $0x8] sm:$0xf] %v4255
                  %v4257 = vld [vmem:[%s4249 + $0xc] sm:$0xf]
                  %4258 = vst [vmem:[%s4250 + $0xc] sm:$0xf] %v4257
                  %v4259 = vld [vmem:[%s4249 + $0x10] sm:$0xf]
                  %4260 = vst [vmem:[%s4250 + $0x10] sm:$0xf] %v4259
                  %v4261 = vld [vmem:[%s4249 + $0x14] sm:$0xf]
                  %4262 = vst [vmem:[%s4250 + $0x14] sm:$0xf] %v4261
                  %v4263 = vld [vmem:[%s4249 + $0x18] sm:$0xf]
                  %4264 = vst [vmem:[%s4250 + $0x18] sm:$0xf] %v4263
                  %v4265 = vld [vmem:[%s4249 + $0x1c] sm:$0xf]
                  %4266 = vst [vmem:[%s4250 + $0x1c] sm:$0xf] %v4265
                  %v4267 = vld [vmem:[%s4249 + $0x20] sm:$0xf]
                  %4268 = vst [vmem:[%s4250 + $0x20] sm:$0xf] %v4267
                  %v4269 = vld [vmem:[%s4249 + $0x24] sm:$0xf]
                  %4270 = vst [vmem:[%s4250 + $0x24] sm:$0xf] %v4269
                  %v4271 = vld [vmem:[%s4249 + $0x28] sm:$0xf]
                  %4272 = vst [vmem:[%s4250 + $0x28] sm:$0xf] %v4271
                  %v4273 = vld [vmem:[%s4249 + $0x2c] sm:$0xf]
                  %4274 = vst [vmem:[%s4250 + $0x2c] sm:$0xf] %v4273
                  %v4275 = vld [vmem:[%s4249 + $0x30] sm:$0xf]
                  %4276 = vst [vmem:[%s4250 + $0x30] sm:$0xf] %v4275
                  %v4277 = vld [vmem:[%s4249 + $0x34] sm:$0xf]
                  %4278 = vst [vmem:[%s4250 + $0x34] sm:$0xf] %v4277
                  %v4279 = vld [vmem:[%s4249 + $0x38] sm:$0xf]
                  %4280 = vst [vmem:[%s4250 + $0x38] sm:$0xf] %v4279
                  %v4281 = vld [vmem:[%s4249 + $0x3c] sm:$0xf]
                  %4282 = vst [vmem:[%s4250 + $0x3c] sm:$0xf] %v4281
                  %v4283 = vld [vmem:[%s4249 + $0x40] sm:$0xf]
                  %4284 = vst [vmem:[%s4250 + $0x40] sm:$0xf] %v4283
                  %v4285 = vld [vmem:[%s4249 + $0x44] sm:$0xf]
                  %4286 = vst [vmem:[%s4250 + $0x44] sm:$0xf] %v4285
                  %v4287 = vld [vmem:[%s4249 + $0x48] sm:$0xf]
                  %4288 = vst [vmem:[%s4250 + $0x48] sm:$0xf] %v4287
                  %v4289 = vld [vmem:[%s4249 + $0x4c] sm:$0xf]
                  %4290 = vst [vmem:[%s4250 + $0x4c] sm:$0xf] %v4289
                  %v4291 = vld [vmem:[%s4249 + $0x50] sm:$0xf]
                  %4292 = vst [vmem:[%s4250 + $0x50] sm:$0xf] %v4291
                  %v4293 = vld [vmem:[%s4249 + $0x54] sm:$0xf]
                  %4294 = vst [vmem:[%s4250 + $0x54] sm:$0xf] %v4293
                  %v4295 = vld [vmem:[%s4249 + $0x58] sm:$0xf]
                  %4296 = vst [vmem:[%s4250 + $0x58] sm:$0xf] %v4295
                  %v4297 = vld [vmem:[%s4249 + $0x5c] sm:$0xf]
                  %4298 = vst [vmem:[%s4250 + $0x5c] sm:$0xf] %v4297
                  %v4299 = vld [vmem:[%s4249 + $0x60] sm:$0xf]
                  %4300 = vst [vmem:[%s4250 + $0x60] sm:$0xf] %v4299
                  %v4301 = vld [vmem:[%s4249 + $0x64] sm:$0xf]
                  %4302 = vst [vmem:[%s4250 + $0x64] sm:$0xf] %v4301
                  %v4303 = vld [vmem:[%s4249 + $0x68] sm:$0xf]
                  %4304 = vst [vmem:[%s4250 + $0x68] sm:$0xf] %v4303
                  %v4305 = vld [vmem:[%s4249 + $0x6c] sm:$0xf]
                  %4306 = vst [vmem:[%s4250 + $0x6c] sm:$0xf] %v4305
                  %v4307 = vld [vmem:[%s4249 + $0x70] sm:$0xf]
                  %4308 = vst [vmem:[%s4250 + $0x70] sm:$0xf] %v4307
                  %v4309 = vld [vmem:[%s4249 + $0x74] sm:$0xf]
                  %4310 = vst [vmem:[%s4250 + $0x74] sm:$0xf] %v4309
                  %v4311 = vld [vmem:[%s4249 + $0x78] sm:$0xf]
                  %4312 = vst [vmem:[%s4250 + $0x78] sm:$0xf] %v4311
                  %v4313 = vld [vmem:[%s4249 + $0x7c] sm:$0xf]
                  %4314 = vst [vmem:[%s4250 + $0x7c] sm:$0xf] %v4313
                  %v4315 = vld [vmem:[%s4249 + $0x80] sm:$0xf]
                  %4316 = vst [vmem:[%s4250 + $0x80] sm:$0xf] %v4315
                  %v4317 = vld [vmem:[%s4249 + $0x84] sm:$0xf]
                  %4318 = vst [vmem:[%s4250 + $0x84] sm:$0xf] %v4317
                  %v4319 = vld [vmem:[%s4249 + $0x88] sm:$0xf]
                  %4320 = vst [vmem:[%s4250 + $0x88] sm:$0xf] %v4319
                  %v4321 = vld [vmem:[%s4249 + $0x8c] sm:$0xf]
                  %4322 = vst [vmem:[%s4250 + $0x8c] sm:$0xf] %v4321
                  %v4323 = vld [vmem:[%s4249 + $0x90] sm:$0xf]
                  %4324 = vst [vmem:[%s4250 + $0x90] sm:$0xf] %v4323
                  %v4325 = vld [vmem:[%s4249 + $0x94] sm:$0xf]
                  %4326 = vst [vmem:[%s4250 + $0x94] sm:$0xf] %v4325
                  %v4327 = vld [vmem:[%s4249 + $0x98] sm:$0xf]
                  %4328 = vst [vmem:[%s4250 + $0x98] sm:$0xf] %v4327
                  %v4329 = vld [vmem:[%s4249 + $0x9c] sm:$0xf]
                  %4330 = vst [vmem:[%s4250 + $0x9c] sm:$0xf] %v4329
                  %v4331 = vld [vmem:[%s4249 + $0xa0] sm:$0xf]
                  %4332 = vst [vmem:[%s4250 + $0xa0] sm:$0xf] %v4331
                  %v4333 = vld [vmem:[%s4249 + $0xa4] sm:$0xf]
                  %4334 = vst [vmem:[%s4250 + $0xa4] sm:$0xf] %v4333
                  %v4335 = vld [vmem:[%s4249 + $0xa8] sm:$0xf]
                  %4336 = vst [vmem:[%s4250 + $0xa8] sm:$0xf] %v4335
                  %v4337 = vld [vmem:[%s4249 + $0xac] sm:$0xf]
                  %4338 = vst [vmem:[%s4250 + $0xac] sm:$0xf] %v4337
                  %v4339 = vld [vmem:[%s4249 + $0xb0] sm:$0xf]
                  %4340 = vst [vmem:[%s4250 + $0xb0] sm:$0xf] %v4339
                  %v4341 = vld [vmem:[%s4249 + $0xb4] sm:$0xf]
                  %4342 = vst [vmem:[%s4250 + $0xb4] sm:$0xf] %v4341
                  %v4343 = vld [vmem:[%s4249 + $0xb8] sm:$0xf]
                  %4344 = vst [vmem:[%s4250 + $0xb8] sm:$0xf] %v4343
                  %v4345 = vld [vmem:[%s4249 + $0xbc] sm:$0xf]
                  %4346 = vst [vmem:[%s4250 + $0xbc] sm:$0xf] %v4345
                  %v4347 = vld [vmem:[%s4249 + $0xc0] sm:$0xf]
                  %4348 = vst [vmem:[%s4250 + $0xc0] sm:$0xf] %v4347
                  %v4349 = vld [vmem:[%s4249 + $0xc4] sm:$0xf]
                  %4350 = vst [vmem:[%s4250 + $0xc4] sm:$0xf] %v4349
                  %v4351 = vld [vmem:[%s4249 + $0xc8] sm:$0xf]
                  %4352 = vst [vmem:[%s4250 + $0xc8] sm:$0xf] %v4351
                  %v4353 = vld [vmem:[%s4249 + $0xcc] sm:$0xf]
                  %4354 = vst [vmem:[%s4250 + $0xcc] sm:$0xf] %v4353
                  %v4355 = vld [vmem:[%s4249 + $0xd0] sm:$0xf]
                  %4356 = vst [vmem:[%s4250 + $0xd0] sm:$0xf] %v4355
                  %v4357 = vld [vmem:[%s4249 + $0xd4] sm:$0xf]
                  %4358 = vst [vmem:[%s4250 + $0xd4] sm:$0xf] %v4357
                  %v4359 = vld [vmem:[%s4249 + $0xd8] sm:$0xf]
                  %4360 = vst [vmem:[%s4250 + $0xd8] sm:$0xf] %v4359
                  %v4361 = vld [vmem:[%s4249 + $0xdc] sm:$0xf]
                  %4362 = vst [vmem:[%s4250 + $0xdc] sm:$0xf] %v4361
                  %v4363 = vld [vmem:[%s4249 + $0xe0] sm:$0xf]
                  %4364 = vst [vmem:[%s4250 + $0xe0] sm:$0xf] %v4363
                  %v4365 = vld [vmem:[%s4249 + $0xe4] sm:$0xf]
                  %4366 = vst [vmem:[%s4250 + $0xe4] sm:$0xf] %v4365
                  %v4367 = vld [vmem:[%s4249 + $0xe8] sm:$0xf]
                  %4368 = vst [vmem:[%s4250 + $0xe8] sm:$0xf] %v4367
                  %v4369 = vld [vmem:[%s4249 + $0xec] sm:$0xf]
                  %4370 = vst [vmem:[%s4250 + $0xec] sm:$0xf] %v4369
                  %v4371 = vld [vmem:[%s4249 + $0xf0] sm:$0xf]
                  %4372 = vst [vmem:[%s4250 + $0xf0] sm:$0xf] %v4371
                  %v4373 = vld [vmem:[%s4249 + $0xf4] sm:$0xf]
                  %4374 = vst [vmem:[%s4250 + $0xf4] sm:$0xf] %v4373
                  %v4375 = vld [vmem:[%s4249 + $0xf8] sm:$0xf]
                  %4376 = vst [vmem:[%s4250 + $0xf8] sm:$0xf] %v4375
                  %v4377 = vld [vmem:[%s4249 + $0xfc] sm:$0xf]
                  %4378 = vst [vmem:[%s4250 + $0xfc] sm:$0xf] %v4377
                  %s4379 = sadd.s32 1, %s4248
                  %p4380 = scmp.ge.s32.totalorder %s4379, %s4241
                  %s4381 = scalar_select %p4380, 0, %s4379
                  %s4382 = smul.u32 %s4381, 256
                  %s4383 = smul.u32 %s4381, 256
                  %s4384 = scalar_lea.vmem %s4048, %s4382 [#allocation2]
                  %s4385 = scalar_lea.vmem %s4059, %s4383
                $region103: #{tpu_custom_call.1} parent=97 // loop_footer
                  %s4245 = sadd.s32 %s4243, 1
                $region104: #{tpu_custom_call.1} parent=97 // loop_footer_branch
                  %4242 = sbr.rel target = $region100
                $region105: #{tpu_custom_call.1} parent=97 // loop_exit
                  _
                %s4386 = sshrl.u32 %s4055, 6
                %s4387 = sand.u32 %s4055, 63
                %s4388 = smul.u32 %s4386, 64
                %s4389 = smul.u32 4, %s4388
                %s4390 = scalar_lea.vmem %s4048, %s4389 [#allocation2]
                %s4391 = smul.u32 4, %s4388
                %s4392 = scalar_lea.vmem %s4059, %s4391
                // While loop
                $region106: #{tpu_custom_call.1} parent=97 // loop_pre_header
                  _
                $region107: #{tpu_custom_call.1} parent=97 // loop_header
                  %s4394 = sphi 0, %s4396
                  %p4395 = scmp.ge.s32.totalorder %s4394, %s4387
                  %s4399 = sphi 0, %s4406
                  %s4400 = sphi %s4390, %s4409
                  %s4401 = sphi %s4392, %s4410
                $region108: #{tpu_custom_call.1} parent=97 // loop_header_branch
                  %4398 = sbr.rel (%p4395) target = $region112
                $region109: #{tpu_custom_call.1} parent=97 // loop_body
                  %v4402 = vld [vmem:[%s4400] sm:$0xf]
                  %4403 = vst [vmem:[%s4401] sm:$0xf] %v4402
                  %s4404 = sadd.s32 1, %s4399
                  %p4405 = scmp.ge.s32.totalorder %s4404, %s4387
                  %s4406 = scalar_select %p4405, 0, %s4404
                  %s4407 = smul.u32 %s4406, 4
                  %s4408 = smul.u32 %s4406, 4
                  %s4409 = scalar_lea.vmem %s4390, %s4407 [#allocation2]
                  %s4410 = scalar_lea.vmem %s4392, %s4408
                $region110: #{tpu_custom_call.1} parent=97 // loop_footer
                  %s4396 = sadd.s32 %s4394, 1
                $region111: #{tpu_custom_call.1} parent=97 // loop_footer_branch
                  %4393 = sbr.rel target = $region107
                $region112: #{tpu_custom_call.1} parent=97 // loop_exit
                  _
              $region98: #{tpu_custom_call.1} parent=75 // pred_fallthru
                _
            $region76: #{tpu_custom_call.1} parent=71 // pred_fallthru
              _
            // Predicated region
            $region77: #{tpu_custom_call.1} parent=71 // pred_check
              _
            $region78: #{tpu_custom_call.1} parent=71 // pred_check_branch
              %4066 = sbr.rel (0) target = $region80
            $region79: #{tpu_custom_call.1} parent=71 // pred_region
              %s4068 = sshrl.u32 %s4055, 6
              // While loop
              $region81: #{tpu_custom_call.1} parent=79 // loop_pre_header
                _
              $region82: #{tpu_custom_call.1} parent=79 // loop_header
                %s4070 = sphi 0, %s4072
                %p4071 = scmp.ge.s32.totalorder %s4070, %s4068
                %s4075 = sphi 0, %s4208
                %s4076 = sphi %s4048, %s4211
                %s4077 = sphi %s4059, %s4212
              $region83: #{tpu_custom_call.1} parent=79 // loop_header_branch
                %4074 = sbr.rel (%p4071) target = $region87
              $region84: #{tpu_custom_call.1} parent=79 // loop_body
                %v4078 = vld [vmem:[%s4076] sm:$0xf]
                %4079 = vst [vmem:[%s4077] sm:$0xf] %v4078
                %v4080 = vld [vmem:[%s4076 + $0x4] sm:$0xf]
                %4081 = vst [vmem:[%s4077 + $0x4] sm:$0xf] %v4080
                %v4082 = vld [vmem:[%s4076 + $0x8] sm:$0xf]
                %4083 = vst [vmem:[%s4077 + $0x8] sm:$0xf] %v4082
                %v4084 = vld [vmem:[%s4076 + $0xc] sm:$0xf]
                %4085 = vst [vmem:[%s4077 + $0xc] sm:$0xf] %v4084
                %v4086 = vld [vmem:[%s4076 + $0x10] sm:$0xf]
                %4087 = vst [vmem:[%s4077 + $0x10] sm:$0xf] %v4086
                %v4088 = vld [vmem:[%s4076 + $0x14] sm:$0xf]
                %4089 = vst [vmem:[%s4077 + $0x14] sm:$0xf] %v4088
                %v4090 = vld [vmem:[%s4076 + $0x18] sm:$0xf]
                %4091 = vst [vmem:[%s4077 + $0x18] sm:$0xf] %v4090
                %v4092 = vld [vmem:[%s4076 + $0x1c] sm:$0xf]
                %4093 = vst [vmem:[%s4077 + $0x1c] sm:$0xf] %v4092
                %v4094 = vld [vmem:[%s4076 + $0x20] sm:$0xf]
                %4095 = vst [vmem:[%s4077 + $0x20] sm:$0xf] %v4094
                %v4096 = vld [vmem:[%s4076 + $0x24] sm:$0xf]
                %4097 = vst [vmem:[%s4077 + $0x24] sm:$0xf] %v4096
                %v4098 = vld [vmem:[%s4076 + $0x28] sm:$0xf]
                %4099 = vst [vmem:[%s4077 + $0x28] sm:$0xf] %v4098
                %v4100 = vld [vmem:[%s4076 + $0x2c] sm:$0xf]
                %4101 = vst [vmem:[%s4077 + $0x2c] sm:$0xf] %v4100
                %v4102 = vld [vmem:[%s4076 + $0x30] sm:$0xf]
                %4103 = vst [vmem:[%s4077 + $0x30] sm:$0xf] %v4102
                %v4104 = vld [vmem:[%s4076 + $0x34] sm:$0xf]
                %4105 = vst [vmem:[%s4077 + $0x34] sm:$0xf] %v4104
                %v4106 = vld [vmem:[%s4076 + $0x38] sm:$0xf]
                %4107 = vst [vmem:[%s4077 + $0x38] sm:$0xf] %v4106
                %v4108 = vld [vmem:[%s4076 + $0x3c] sm:$0xf]
                %4109 = vst [vmem:[%s4077 + $0x3c] sm:$0xf] %v4108
                %v4110 = vld [vmem:[%s4076 + $0x40] sm:$0xf]
                %4111 = vst [vmem:[%s4077 + $0x40] sm:$0xf] %v4110
                %v4112 = vld [vmem:[%s4076 + $0x44] sm:$0xf]
                %4113 = vst [vmem:[%s4077 + $0x44] sm:$0xf] %v4112
                %v4114 = vld [vmem:[%s4076 + $0x48] sm:$0xf]
                %4115 = vst [vmem:[%s4077 + $0x48] sm:$0xf] %v4114
                %v4116 = vld [vmem:[%s4076 + $0x4c] sm:$0xf]
                %4117 = vst [vmem:[%s4077 + $0x4c] sm:$0xf] %v4116
                %v4118 = vld [vmem:[%s4076 + $0x50] sm:$0xf]
                %4119 = vst [vmem:[%s4077 + $0x50] sm:$0xf] %v4118
                %v4120 = vld [vmem:[%s4076 + $0x54] sm:$0xf]
                %4121 = vst [vmem:[%s4077 + $0x54] sm:$0xf] %v4120
                %v4122 = vld [vmem:[%s4076 + $0x58] sm:$0xf]
                %4123 = vst [vmem:[%s4077 + $0x58] sm:$0xf] %v4122
                %v4124 = vld [vmem:[%s4076 + $0x5c] sm:$0xf]
                %4125 = vst [vmem:[%s4077 + $0x5c] sm:$0xf] %v4124
                %v4126 = vld [vmem:[%s4076 + $0x60] sm:$0xf]
                %4127 = vst [vmem:[%s4077 + $0x60] sm:$0xf] %v4126
                %v4128 = vld [vmem:[%s4076 + $0x64] sm:$0xf]
                %4129 = vst [vmem:[%s4077 + $0x64] sm:$0xf] %v4128
                %v4130 = vld [vmem:[%s4076 + $0x68] sm:$0xf]
                %4131 = vst [vmem:[%s4077 + $0x68] sm:$0xf] %v4130
                %v4132 = vld [vmem:[%s4076 + $0x6c] sm:$0xf]
                %4133 = vst [vmem:[%s4077 + $0x6c] sm:$0xf] %v4132
                %v4134 = vld [vmem:[%s4076 + $0x70] sm:$0xf]
                %4135 = vst [vmem:[%s4077 + $0x70] sm:$0xf] %v4134
                %v4136 = vld [vmem:[%s4076 + $0x74] sm:$0xf]
                %4137 = vst [vmem:[%s4077 + $0x74] sm:$0xf] %v4136
                %v4138 = vld [vmem:[%s4076 + $0x78] sm:$0xf]
                %4139 = vst [vmem:[%s4077 + $0x78] sm:$0xf] %v4138
                %v4140 = vld [vmem:[%s4076 + $0x7c] sm:$0xf]
                %4141 = vst [vmem:[%s4077 + $0x7c] sm:$0xf] %v4140
                %v4142 = vld [vmem:[%s4076 + $0x80] sm:$0xf]
                %4143 = vst [vmem:[%s4077 + $0x80] sm:$0xf] %v4142
                %v4144 = vld [vmem:[%s4076 + $0x84] sm:$0xf]
                %4145 = vst [vmem:[%s4077 + $0x84] sm:$0xf] %v4144
                %v4146 = vld [vmem:[%s4076 + $0x88] sm:$0xf]
                %4147 = vst [vmem:[%s4077 + $0x88] sm:$0xf] %v4146
                %v4148 = vld [vmem:[%s4076 + $0x8c] sm:$0xf]
                %4149 = vst [vmem:[%s4077 + $0x8c] sm:$0xf] %v4148
                %v4150 = vld [vmem:[%s4076 + $0x90] sm:$0xf]
                %4151 = vst [vmem:[%s4077 + $0x90] sm:$0xf] %v4150
                %v4152 = vld [vmem:[%s4076 + $0x94] sm:$0xf]
                %4153 = vst [vmem:[%s4077 + $0x94] sm:$0xf] %v4152
                %v4154 = vld [vmem:[%s4076 + $0x98] sm:$0xf]
                %4155 = vst [vmem:[%s4077 + $0x98] sm:$0xf] %v4154
                %v4156 = vld [vmem:[%s4076 + $0x9c] sm:$0xf]
                %4157 = vst [vmem:[%s4077 + $0x9c] sm:$0xf] %v4156
                %v4158 = vld [vmem:[%s4076 + $0xa0] sm:$0xf]
                %4159 = vst [vmem:[%s4077 + $0xa0] sm:$0xf] %v4158
                %v4160 = vld [vmem:[%s4076 + $0xa4] sm:$0xf]
                %4161 = vst [vmem:[%s4077 + $0xa4] sm:$0xf] %v4160
                %v4162 = vld [vmem:[%s4076 + $0xa8] sm:$0xf]
                %4163 = vst [vmem:[%s4077 + $0xa8] sm:$0xf] %v4162
                %v4164 = vld [vmem:[%s4076 + $0xac] sm:$0xf]
                %4165 = vst [vmem:[%s4077 + $0xac] sm:$0xf] %v4164
                %v4166 = vld [vmem:[%s4076 + $0xb0] sm:$0xf]
                %4167 = vst [vmem:[%s4077 + $0xb0] sm:$0xf] %v4166
                %v4168 = vld [vmem:[%s4076 + $0xb4] sm:$0xf]
                %4169 = vst [vmem:[%s4077 + $0xb4] sm:$0xf] %v4168
                %v4170 = vld [vmem:[%s4076 + $0xb8] sm:$0xf]
                %4171 = vst [vmem:[%s4077 + $0xb8] sm:$0xf] %v4170
                %v4172 = vld [vmem:[%s4076 + $0xbc] sm:$0xf]
                %4173 = vst [vmem:[%s4077 + $0xbc] sm:$0xf] %v4172
                %v4174 = vld [vmem:[%s4076 + $0xc0] sm:$0xf]
                %4175 = vst [vmem:[%s4077 + $0xc0] sm:$0xf] %v4174
                %v4176 = vld [vmem:[%s4076 + $0xc4] sm:$0xf]
                %4177 = vst [vmem:[%s4077 + $0xc4] sm:$0xf] %v4176
                %v4178 = vld [vmem:[%s4076 + $0xc8] sm:$0xf]
                %4179 = vst [vmem:[%s4077 + $0xc8] sm:$0xf] %v4178
                %v4180 = vld [vmem:[%s4076 + $0xcc] sm:$0xf]
                %4181 = vst [vmem:[%s4077 + $0xcc] sm:$0xf] %v4180
                %v4182 = vld [vmem:[%s4076 + $0xd0] sm:$0xf]
                %4183 = vst [vmem:[%s4077 + $0xd0] sm:$0xf] %v4182
                %v4184 = vld [vmem:[%s4076 + $0xd4] sm:$0xf]
                %4185 = vst [vmem:[%s4077 + $0xd4] sm:$0xf] %v4184
                %v4186 = vld [vmem:[%s4076 + $0xd8] sm:$0xf]
                %4187 = vst [vmem:[%s4077 + $0xd8] sm:$0xf] %v4186
                %v4188 = vld [vmem:[%s4076 + $0xdc] sm:$0xf]
                %4189 = vst [vmem:[%s4077 + $0xdc] sm:$0xf] %v4188
                %v4190 = vld [vmem:[%s4076 + $0xe0] sm:$0xf]
                %4191 = vst [vmem:[%s4077 + $0xe0] sm:$0xf] %v4190
                %v4192 = vld [vmem:[%s4076 + $0xe4] sm:$0xf]
                %4193 = vst [vmem:[%s4077 + $0xe4] sm:$0xf] %v4192
                %v4194 = vld [vmem:[%s4076 + $0xe8] sm:$0xf]
                %4195 = vst [vmem:[%s4077 + $0xe8] sm:$0xf] %v4194
                %v4196 = vld [vmem:[%s4076 + $0xec] sm:$0xf]
                %4197 = vst [vmem:[%s4077 + $0xec] sm:$0xf] %v4196
                %v4198 = vld [vmem:[%s4076 + $0xf0] sm:$0xf]
                %4199 = vst [vmem:[%s4077 + $0xf0] sm:$0xf] %v4198
                %v4200 = vld [vmem:[%s4076 + $0xf4] sm:$0xf]
                %4201 = vst [vmem:[%s4077 + $0xf4] sm:$0xf] %v4200
                %v4202 = vld [vmem:[%s4076 + $0xf8] sm:$0xf]
                %4203 = vst [vmem:[%s4077 + $0xf8] sm:$0xf] %v4202
                %v4204 = vld [vmem:[%s4076 + $0xfc] sm:$0xf]
                %4205 = vst [vmem:[%s4077 + $0xfc] sm:$0xf] %v4204
                %s4206 = sadd.s32 1, %s4075
                %p4207 = scmp.ge.s32.totalorder %s4206, %s4068
                %s4208 = scalar_select %p4207, 0, %s4206
                %s4209 = smul.u32 %s4208, 256
                %s4210 = smul.u32 %s4208, 256
                %s4211 = scalar_lea.vmem %s4048, %s4209 [#allocation2]
                %s4212 = scalar_lea.vmem %s4059, %s4210
              $region85: #{tpu_custom_call.1} parent=79 // loop_footer
                %s4072 = sadd.s32 %s4070, 1
              $region86: #{tpu_custom_call.1} parent=79 // loop_footer_branch
                %4069 = sbr.rel target = $region82
              $region87: #{tpu_custom_call.1} parent=79 // loop_exit
                _
              %s4213 = sshrl.u32 %s4055, 6
              %s4214 = sand.u32 %s4055, 63
              %s4215 = smul.u32 %s4213, 64
              %s4216 = smul.u32 4, %s4215
              %s4217 = scalar_lea.vmem %s4048, %s4216 [#allocation2]
              %s4218 = smul.u32 4, %s4215
              %s4219 = scalar_lea.vmem %s4059, %s4218
              // While loop
              $region88: #{tpu_custom_call.1} parent=79 // loop_pre_header
                _
              $region89: #{tpu_custom_call.1} parent=79 // loop_header
                %s4221 = sphi 0, %s4223
                %p4222 = scmp.ge.s32.totalorder %s4221, %s4214
                %s4226 = sphi 0, %s4233
                %s4227 = sphi %s4217, %s4236
                %s4228 = sphi %s4219, %s4237
              $region90: #{tpu_custom_call.1} parent=79 // loop_header_branch
                %4225 = sbr.rel (%p4222) target = $region94
              $region91: #{tpu_custom_call.1} parent=79 // loop_body
                %v4229 = vld [vmem:[%s4227] sm:$0xf]
                %4230 = vst [vmem:[%s4228] sm:$0xf] %v4229
                %s4231 = sadd.s32 1, %s4226
                %p4232 = scmp.ge.s32.totalorder %s4231, %s4214
                %s4233 = scalar_select %p4232, 0, %s4231
                %s4234 = smul.u32 %s4233, 4
                %s4235 = smul.u32 %s4233, 4
                %s4236 = scalar_lea.vmem %s4217, %s4234 [#allocation2]
                %s4237 = scalar_lea.vmem %s4219, %s4235
              $region92: #{tpu_custom_call.1} parent=79 // loop_footer
                %s4223 = sadd.s32 %s4221, 1
              $region93: #{tpu_custom_call.1} parent=79 // loop_footer_branch
                %4220 = sbr.rel target = $region89
              $region94: #{tpu_custom_call.1} parent=79 // loop_exit
                _
            $region80: #{tpu_custom_call.1} parent=71 // pred_fallthru
              _
          $region72: #{tpu_custom_call.1} parent=67 // pred_fallthru
            _
          %4411 = vnop
        $region68: #{tpu_custom_call.1} parent=63 // pred_fallthru
          _
      $region64: #{tpu_custom_call.1} parent=5 // pred_fallthru
        _
      %p4412 = scmp.le.s32.totalorder 2, %s17
      // Predicated region
      $region113: #{tpu_custom_call.1} parent=5 // pred_check
        %p4413 = pneg %p4412
      $region114: #{tpu_custom_call.1} parent=5 // pred_check_branch
        %4415 = sbr.rel (%p4413) target = $region116
      $region115: #{tpu_custom_call.1} parent=5 // pred_region
        %s4416 = ssub.s32 %s17, 2
        // Predicated region
        $region117: #{tpu_custom_call.1} parent=115 // pred_check
          %p4417 = pneg %p297
        $region118: #{tpu_custom_call.1} parent=115 // pred_check_branch
          %4419 = sbr.rel (%p4417) target = $region120
        $region119: #{tpu_custom_call.1} parent=115 // pred_region
          %s4420 = sand.u32 %s282, 1
          %s4421 = sand.u32 %s282, 1
          %s4422 = smul.addr %s4421, 256
          %s4423 = scalar_lea.vmem [#allocation2], %s4422
        $region120: #{tpu_custom_call.1} parent=115 // pred_fallthru
          _
      $region116: #{tpu_custom_call.1} parent=5 // pred_fallthru
        _
    $region6: #{tpu_custom_call.1} parent=1 // loop_footer
      %s21 = sadd.s32 1, %s17
    $region7: #{tpu_custom_call.1} parent=1 // loop_footer_branch
      %16 = sbr.rel target = $region3
    $region8: #{tpu_custom_call.1} parent=1 // loop_exit
      _

</llo_original>
